<compile_context>
chip_gen: v7x
topology: tpu7x:2x2x1
jax: 0.10.0
libtpu: 0.0.40
codegen_flags: <defaults>
</compile_context>

<pallas_src>
import functools

import jax
import jax.numpy as jnp
from jax import lax
from jax.experimental import pallas as pl
from jax.experimental.pallas import tpu as pltpu

EPS = 1e-5  # nn.InstanceNorm2d default eps (affine=False, biased variance)


# --------------------------------------------------------------------------- #
# Helpers                                                                      #
# --------------------------------------------------------------------------- #
def _pick_strip_rows(H, W, target_rows=512):
    """Largest divisor TH of H with TH*W <= ~target_rows (>= 1): keeps each
    im2col strip (TM = TH*W matmul rows) near the MXU-friendly 256-512 row
    range while avoiding ragged-strip masking."""
    cap = min(H, max(1, target_rows // max(W, 1)))
    best = 1
    for th in range(1, cap + 1):
        if H % th == 0:
            best = th
    return best


def _loop_strips(n, body, init):
    """Sequential strip loop; short trip-counts are unrolled at trace time."""
    if n <= 4:
        carry = init
        for s in range(n):
            carry = body(s, carry)
        return carry
    return lax.fori_loop(0, n, body, init)


def _start(s, stride):
    """Strip start index s*stride, with a multiple_of hint on traced starts."""
    if isinstance(s, int):
        return s * stride
    v = s * stride
    return pl.multiple_of(v, stride) if stride % 8 == 0 else v


# --------------------------------------------------------------------------- #
# Kernel                                                                       #
# --------------------------------------------------------------------------- #
def residual_block_kernel(x_ref, w1_ref, w2_ref, out_ref, h_ref, acc_ref, *, th):
    """One image per grid step.

    x_ref   : (1, H, W, C) f32 input block (VMEM)
    w*_ref  : (9C, C) packed conv weights in the MXU dtype, rows (ky, kx, cin)
    out_ref : (1, H, W, C) f32 output block
    h_ref   : (H+2, W, C) MXU-dtype scratch: current activation with a 1-row
              reflection halo along H (reused by both conv stages)
    acc_ref : (H*W, C) f32 scratch: un-normalized conv output (per stage)
    """
    _, H, W, C = x_ref.shape
    n_strips = H // th
    tm = th * W
    inv_hw = 1.0 / float(H * W)

    def x_strip(s):
        return x_ref[:, pl.ds(_start(s, th), th)].reshape(th, W, C)

    # ---- Load + cast the input ONCE to the MXU dtype, build the H halo. ----
    def load_body(s, carry):
        h_ref[pl.ds(1 + _start(s, th), th)] = x_strip(s).astype(h_ref.dtype)
        return carry

    _loop_strips(n_strips, load_body, 0)
    h_ref[0] = h_ref[2]            # reflect: row -1 -> row 1
    h_ref[H + 1] = h_ref[H - 1]    # reflect: row  H -> row H-2

    def conv3x3_instnorm(w_ref, finalize_strip):
        """ReflectionPad(1) -> 3x3 conv -> InstanceNorm over h_ref.

        Per strip: one (TM, 9C) x (9C, C) MXU matmul (deep K = 9C kept) with
        fused per-channel sum / sum-of-squares; the un-normalized strip is
        parked in acc_ref.  A second strip pass normalizes and hands each
        (TM, C) f32 strip to `finalize_strip(s, normalized)`.
        The conv bias is omitted: InstanceNorm's mean subtraction cancels it.
        """

        def conv_body(s, carry):
            sum_c, sumsq_c = carry
            slab = h_ref[pl.ds(_start(s, th), th + 2)]            # (th+2, W, C)
            # 1-px reflection halo along W, built in the MXU dtype.
            # TODO(synk): replace the +-1 column concatenate/slices with
            # pltpu.roll(axis=1) + edge selects (XLU slot) once packed-bf16
            # sublane rotation is confirmed to lower; the shifted taps below
            # are sublane-misaligned relayout copies on the VPU/load path.
            slab_w = jnp.concatenate(
                [slab[:, 1:2], slab, slab[:, W - 2:W - 1]], axis=1)  # (th+2,W+2,C)
            # Strip-local im2col: 9 shifted taps stacked on the lane axis.
            taps = [slab_w[dy:dy + th, dx:dx + W]
                    for dy in range(3) for dx in range(3)]
            patches = jnp.concatenate(taps, axis=-1).reshape(tm, 9 * C)
            acc = jnp.dot(patches, w_ref[...],
                          preferred_element_type=jnp.float32)       # (tm, C) f32
            acc_ref[pl.ds(_start(s, tm), tm), :] = acc
            return (sum_c + jnp.sum(acc, axis=0, keepdims=True),
                    sumsq_c + jnp.sum(acc * acc, axis=0, keepdims=True))

        zero = jnp.zeros((1, C), jnp.float32)
        sum_c, sumsq_c = _loop_strips(n_strips, conv_body, (zero, zero))

        # Single-pass InstanceNorm stats (f32), clamped against cancellation.
        mean = sum_c * inv_hw
        var = jnp.maximum(sumsq_c * inv_hw - mean * mean, 0.0)
        inv_std = lax.rsqrt(var + EPS)

        def norm_body(s, carry):
            a = acc_ref[pl.ds(_start(s, tm), tm), :]
            finalize_strip(s, (a - mean) * inv_std)
            return carry

        _loop_strips(n_strips, norm_body, 0)

    # ---- Stage 1: conv + IN + ReLU -> back into h_ref (MXU dtype). ----
    def write_h1(s, normed):
        h1 = jnp.maximum(normed, 0.0).reshape(th, W, C)
        h_ref[pl.ds(1 + _start(s, th), th)] = h1.astype(h_ref.dtype)

    conv3x3_instnorm(w1_ref, write_h1)
    h_ref[0] = h_ref[2]
    h_ref[H + 1] = h_ref[H - 1]

    # ---- Stage 2: conv + IN, residual add with x, store (f32). ----
    # TODO(synk): optionally emit bf16 output for mem-bound small-C configs.
    def write_out(s, normed):
        out3 = x_strip(s) + normed.reshape(th, W, C)
        out_ref[:, pl.ds(_start(s, th), th)] = (
            out3.reshape(1, th, W, C).astype(out_ref.dtype))

    conv3x3_instnorm(w2_ref, write_out)


# --------------------------------------------------------------------------- #
# Wrappers                                                                     #
# --------------------------------------------------------------------------- #
def _pack_weight(w_oihw, dtype):
    """OIHW (Cout, Cin, 3, 3) -> (9*Cin, Cout), rows ordered (ky, kx, cin)."""
    cout, cin, kh, kw = w_oihw.shape
    return jnp.transpose(w_oihw, (2, 3, 1, 0)).reshape(kh * kw * cin, cout).astype(dtype)


def _vmem_limit_bytes(H, W, C, tm):
    """Generous estimate of the per-core VMEM footprint (with headroom)."""
    blk = H * W * C
    est = (
        2 * 2 * blk * 4            # x + out blocks, double-buffered, f32
        + 2 * 2 * 9 * C * C * 2    # two weight blocks, double-buffered
        + (H + 2) * W * C * 2      # h_ref halo scratch (MXU dtype)
        + blk * 4                  # acc_ref (f32)
        + 4 * tm * 9 * C * 2       # per-strip im2col temporaries
        + 6 * tm * C * 4           # per-strip acc / normalize temporaries
    )
    est = 2 * est + (4 << 20)      # 2x headroom + 4 MiB slack
    return int(max(32 << 20, min(est, 100 << 20)))


def residual_block_nhwc(x, w1_oihw, b1, w2_oihw, b2, *, mxu_dtype=jnp.bfloat16):
    """x: (N, H, W, C) f32; weights OIHW.  b1/b2 are accepted for interface
    parity but unused: a conv bias immediately followed by
    InstanceNorm2d(affine=False) is exactly cancelled by the mean subtraction."""
    del b1, b2
    N, H, W, C = x.shape
    assert H >= 2 and W >= 2, "ReflectionPad2d(1) requires H >= 2 and W >= 2"

    th = _pick_strip_rows(H, W)
    tm = th * W
    w1 = _pack_weight(w1_oihw, mxu_dtype)
    w2 = _pack_weight(w2_oihw, mxu_dtype)

    spec_img = pl.BlockSpec((1, H, W, C), lambda n: (n, 0, 0, 0))
    spec_w = pl.BlockSpec((9 * C, C), lambda n: (0, 0))

    # TODO(synk): for very large images (>~128-192 px at C=128) on v7x's 64 MiB
    # VMEM, add an H-strip grid axis with a stats-then-normalize two-pass
    # InstanceNorm (also covers megacore use for N == 1); whole-image blocks
    # plus the in-kernel strip loop fit v5e/v6e and typical residual sizes.
    # TODO(synk): for C < 128 the (..., C) HBM stores are lane-masked and the
    # MXU N-fill is only C/256 (C/128 on v5e); a lane-dense (1, H, W*C)
    # out_spec or a padded-Cout path would help there.  Production C >= 128 is
    # already lane-dense in NHWC.
    kernel = functools.partial(residual_block_kernel, th=th)
    return pl.pallas_call(
        kernel,
        out_shape=jax.ShapeDtypeStruct((N, H, W, C), jnp.float32),
        grid=(N,),
        in_specs=[spec_img, spec_w, spec_w],
        out_specs=spec_img,
        scratch_shapes=[
            pltpu.VMEM((H + 2, W, C), mxu_dtype),   # halo'd activation (both stages)
            pltpu.VMEM((H * W, C), jnp.float32),    # un-normalized conv accumulator
        ],
        compiler_params=pltpu.CompilerParams(
            dimension_semantics=("parallel",),
            vmem_limit_bytes=_vmem_limit_bytes(H, W, C, tm),
        ),
    )(x, w1, w2)


def residual_block_nchw(x_nchw, w1, b1, w2, b2, *, mxu_dtype=jnp.bfloat16):
    """PyTorch-facing wrapper (NCHW in/out, OIHW weights).  In a real network
    keep activations NHWC end-to-end; these transposes only present the
    standalone PyTorch interface."""
    x = jnp.transpose(x_nchw, (0, 2, 3, 1))            # NCHW -> NHWC
    y = residual_block_nhwc(x, w1, b1, w2, b2, mxu_dtype=mxu_dtype)
    return jnp.transpose(y, (0, 3, 1, 2))              # NHWC -> NCHW


# --------------------------------------------------------------------------- #
# Pure-JAX reference + self-test                                               #
# --------------------------------------------------------------------------- #
def _reference_nchw(x, w1, b1, w2, b2):
    """Pure-JAX reference mirroring the PyTorch module (bias included)."""
    def conv(h, w, b):
        hp = jnp.pad(h, ((0, 0), (0, 0), (1, 1), (1, 1)), mode="reflect")
        y = jax.lax.conv_general_dilated(
            hp, w, (1, 1), "VALID",
            dimension_numbers=("NCHW", "OIHW", "NCHW"))
        return y + b[None, :, None, None]

    def inorm(h):
        m = h.mean(axis=(2, 3), keepdims=True)
        v = ((h - m) ** 2).mean(axis=(2, 3), keepdims=True)
        return (h - m) / jnp.sqrt(v + EPS)

    h = jax.nn.relu(inorm(conv(x, w1, b1)))
    return x + inorm(conv(h, w2, b2))


def _make_params(key, C):
    k1, kb1, k2, kb2 = jax.random.split(key, 4)
    fan_in = C * 3 * 3
    scale = 1.0 / jnp.sqrt(jnp.float32(fan_in))
    w1 = jax.random.uniform(k1, (C, C, 3, 3), jnp.float32, -scale, scale)
    b1 = jax.random.uniform(kb1, (C,), jnp.float32, -scale, scale)
    w2 = jax.random.uniform(k2, (C, C, 3, 3), jnp.float32, -scale, scale)
    b2 = jax.random.uniform(kb2, (C,), jnp.float32, -scale, scale)
    return w1, b1, w2, b2


if __name__ == "__main__":
    key = jax.random.PRNGKey(0)
    kx, kp, kx2 = jax.random.split(key, 3)

    # --- Config A: small spec-sized test (N=2, C=8, 16x16), single strip. ---
    N, C, H, W = 2, 8, 16, 16
    x = jax.random.normal(kx, (N, C, H, W), dtype=jnp.float32)
    w1, b1, w2, b2 = _make_params(kp, C)
    ref = _reference_nchw(x, w1, b1, w2, b2)

    # Exactness check: f32 MXU operands must closely match the f32 reference
    # (also validates bias elision and the single-pass E[x^2]-mean^2 variance).
    out_f32 = jax.block_until_ready(
        residual_block_nchw(x, w1, b1, w2, b2, mxu_dtype=jnp.float32))
    assert out_f32.shape == (N, C, H, W)
    assert jnp.all(jnp.isfinite(out_f32))
    assert jnp.allclose(out_f32, ref, atol=1e-3, rtol=1e-3), (
        f"f32 path max abs err {jnp.max(jnp.abs(out_f32 - ref))}")

    # Production path: bf16 MXU operands, f32 accumulation and norm math.
    out = jax.block_until_ready(residual_block_nchw(x, w1, b1, w2, b2))
    assert out.shape == (N, C, H, W)
    assert jnp.all(jnp.isfinite(out))
    rel_l2 = jnp.linalg.norm(out - ref) / jnp.linalg.norm(ref)
    max_abs = jnp.max(jnp.abs(out - ref))
    assert rel_l2 < 5e-2, f"bf16 path rel-L2 err {rel_l2}"
    assert max_abs < 3e-1, f"bf16 path max abs err {max_abs}"

    # --- Config B: 64x64 image to exercise the multi-strip fori_loop path. ---
    H2 = W2 = 64
    x2 = jax.random.normal(kx2, (N, C, H2, W2), dtype=jnp.float32)
    ref2 = _reference_nchw(x2, w1, b1, w2, b2)
    out2 = jax.block_until_ready(residual_block_nchw(x2, w1, b1, w2, b2))
    assert out2.shape == (N, C, H2, W2)
    assert jnp.all(jnp.isfinite(out2))
    rel_l2_2 = jnp.linalg.norm(out2 - ref2) / jnp.linalg.norm(ref2)
    assert rel_l2_2 < 5e-2, f"bf16 multi-strip rel-L2 err {rel_l2_2}"

    print("KERNEL_OK")
</pallas_src>

<mosaic_0001>
module attributes {stable_mosaic.version = 11 : i64} {
  func.func @residual_block_kernel(%arg0: i32, %arg1: memref<1x16x16x8xf32, #tpu.memory_space<vmem>>, %arg2: memref<72x8xf32, #tpu.memory_space<vmem>>, %arg3: memref<72x8xf32, #tpu.memory_space<vmem>>, %arg4: memref<1x16x16x8xf32, #tpu.memory_space<vmem>>, %arg5: memref<18x16x8xf32, #tpu.memory_space<vmem>>, %arg6: memref<256x8xf32, #tpu.memory_space<vmem>>) attributes {dimension_semantics = [#tpu.dimension_semantics<parallel>], iteration_bounds = array<i64: 2>, scalar_prefetch = 0 : i64, scratch_operands = 2 : i64, tpu.core_type = #tpu.core_type<tc>, window_params = [{transform_indices = @transform_0, window_bounds = array<i64: 1, 16, 16, 8>}, {pipeline_mode = #tpu.pipeline_mode<synchronous>, transform_indices = @transform_1, window_bounds = array<i64: 72, 8>}, {pipeline_mode = #tpu.pipeline_mode<synchronous>, transform_indices = @transform_2, window_bounds = array<i64: 72, 8>}, {transform_indices = @transform_3, window_bounds = array<i64: 1, 16, 16, 8>}]} {
    %c0 = arith.constant 0 : index
    %c0_0 = arith.constant 0 : index
    %c0_1 = arith.constant 0 : index
    %c0_2 = arith.constant 0 : index
    %0 = vector.load %arg1[%c0, %c0_0, %c0_1, %c0_2] : memref<1x16x16x8xf32, #tpu.memory_space<vmem>>, vector<1x16x16x8xf32>
    %1 = vector.shape_cast %0 : vector<1x16x16x8xf32> to vector<16x16x8xf32>
    %c1 = arith.constant 1 : index
    %c0_3 = arith.constant 0 : index
    %c0_4 = arith.constant 0 : index
    %2 = vector.load %arg5[%c1, %c0_3, %c0_4] : memref<18x16x8xf32, #tpu.memory_space<vmem>>, vector<16x16x8xf32>
    tpu.vector_store %arg5[%c1, %c0_3, %c0_4], %1 {strides = array<i32>} : memref<18x16x8xf32, #tpu.memory_space<vmem>>, vector<16x16x8xf32>,
    %c2 = arith.constant 2 : index
    %c0_5 = arith.constant 0 : index
    %c0_6 = arith.constant 0 : index
    %3 = vector.load %arg5[%c2, %c0_5, %c0_6] : memref<18x16x8xf32, #tpu.memory_space<vmem>>, vector<1x16x8xf32>
    %4 = vector.shape_cast %3 : vector<1x16x8xf32> to vector<16x8xf32>
    %c0_7 = arith.constant 0 : index
    %c0_8 = arith.constant 0 : index
    %c0_9 = arith.constant 0 : index
    %5 = vector.load %arg5[%c0_7, %c0_8, %c0_9] : memref<18x16x8xf32, #tpu.memory_space<vmem>>, vector<1x16x8xf32>
    %6 = vector.shape_cast %5 : vector<1x16x8xf32> to vector<16x8xf32>
    %7 = vector.shape_cast %4 : vector<16x8xf32> to vector<1x16x8xf32>
    tpu.vector_store %arg5[%c0_7, %c0_8, %c0_9], %7 {strides = array<i32>} : memref<18x16x8xf32, #tpu.memory_space<vmem>>, vector<1x16x8xf32>,
    %c15 = arith.constant 15 : index
    %c0_10 = arith.constant 0 : index
    %c0_11 = arith.constant 0 : index
    %8 = vector.load %arg5[%c15, %c0_10, %c0_11] : memref<18x16x8xf32, #tpu.memory_space<vmem>>, vector<1x16x8xf32>
    %9 = vector.shape_cast %8 : vector<1x16x8xf32> to vector<16x8xf32>
    %c17 = arith.constant 17 : index
    %c0_12 = arith.constant 0 : index
    %c0_13 = arith.constant 0 : index
    %10 = vector.load %arg5[%c17, %c0_12, %c0_13] : memref<18x16x8xf32, #tpu.memory_space<vmem>>, vector<1x16x8xf32>
    %11 = vector.shape_cast %10 : vector<1x16x8xf32> to vector<16x8xf32>
    %12 = vector.shape_cast %9 : vector<16x8xf32> to vector<1x16x8xf32>
    tpu.vector_store %arg5[%c17, %c0_12, %c0_13], %12 {strides = array<i32>} : memref<18x16x8xf32, #tpu.memory_space<vmem>>, vector<1x16x8xf32>,
    %cst = arith.constant 0.000000e+00 : f32
    %13 = vector.broadcast %cst : f32 to vector<1x8xf32>
    %c0_14 = arith.constant 0 : index
    %c0_15 = arith.constant 0 : index
    %c0_16 = arith.constant 0 : index
    %14 = vector.load %arg5[%c0_14, %c0_15, %c0_16] : memref<18x16x8xf32, #tpu.memory_space<vmem>>, vector<18x16x8xf32>
    %15 = vector.extract_strided_slice %14 {offsets = [0, 1, 0], sizes = [18, 1, 8], strides = [1, 1, 1]} : vector<18x16x8xf32> to vector<18x1x8xf32>
    %16 = vector.extract_strided_slice %14 {offsets = [0, 14, 0], sizes = [18, 1, 8], strides = [1, 1, 1]} : vector<18x16x8xf32> to vector<18x1x8xf32>
    %17 = tpu.concatenate %15, %14, %16 in 1 : vector<18x1x8xf32>, vector<18x16x8xf32>, vector<18x1x8xf32> -> vector<18x18x8xf32>
    %18 = vector.extract_strided_slice %17 {offsets = [0, 0, 0], sizes = [16, 16, 8], strides = [1, 1, 1]} : vector<18x18x8xf32> to vector<16x16x8xf32>
    %19 = vector.extract_strided_slice %17 {offsets = [0, 1, 0], sizes = [16, 16, 8], strides = [1, 1, 1]} : vector<18x18x8xf32> to vector<16x16x8xf32>
    %20 = vector.extract_strided_slice %17 {offsets = [0, 2, 0], sizes = [16, 16, 8], strides = [1, 1, 1]} : vector<18x18x8xf32> to vector<16x16x8xf32>
    %21 = vector.extract_strided_slice %17 {offsets = [1, 0, 0], sizes = [16, 16, 8], strides = [1, 1, 1]} : vector<18x18x8xf32> to vector<16x16x8xf32>
    %22 = vector.extract_strided_slice %17 {offsets = [1, 1, 0], sizes = [16, 16, 8], strides = [1, 1, 1]} : vector<18x18x8xf32> to vector<16x16x8xf32>
    %23 = vector.extract_strided_slice %17 {offsets = [1, 2, 0], sizes = [16, 16, 8], strides = [1, 1, 1]} : vector<18x18x8xf32> to vector<16x16x8xf32>
    %24 = vector.extract_strided_slice %17 {offsets = [2, 0, 0], sizes = [16, 16, 8], strides = [1, 1, 1]} : vector<18x18x8xf32> to vector<16x16x8xf32>
    %25 = vector.extract_strided_slice %17 {offsets = [2, 1, 0], sizes = [16, 16, 8], strides = [1, 1, 1]} : vector<18x18x8xf32> to vector<16x16x8xf32>
    %26 = vector.extract_strided_slice %17 {offsets = [2, 2, 0], sizes = [16, 16, 8], strides = [1, 1, 1]} : vector<18x18x8xf32> to vector<16x16x8xf32>
    %27 = tpu.concatenate %18, %19, %20, %21, %22, %23, %24, %25, %26 in 2 : vector<16x16x8xf32>, vector<16x16x8xf32>, vector<16x16x8xf32>, vector<16x16x8xf32>, vector<16x16x8xf32>, vector<16x16x8xf32>, vector<16x16x8xf32>, vector<16x16x8xf32>, vector<16x16x8xf32> -> vector<16x16x72xf32>
    %28 = vector.shape_cast %27 : vector<16x16x72xf32> to vector<256x72xf32>
    %c0_17 = arith.constant 0 : index
    %c0_18 = arith.constant 0 : index
    %29 = vector.load %arg2[%c0_17, %c0_18] : memref<72x8xf32, #tpu.memory_space<vmem>>, vector<72x8xf32>
    %cst_19 = arith.constant dense<0.000000e+00> : vector<256x8xf32>
    %30 = tpu.matmul %28, %29, %cst_19 {dimension_numbers = #tpu.dot_dimension_numbers<[1], [0], [0], [1], [0, 0, 1, 1], [], []>} : vector<256x72xf32>, vector<72x8xf32>, vector<256x8xf32> -> vector<256x8xf32>
    %c0_20 = arith.constant 0 : index
    %c0_21 = arith.constant 0 : index
    %31 = vector.load %arg6[%c0_20, %c0_21] : memref<256x8xf32, #tpu.memory_space<vmem>>, vector<256x8xf32>
    tpu.vector_store %arg6[%c0_20, %c0_21], %30 {strides = array<i32>} : memref<256x8xf32, #tpu.memory_space<vmem>>, vector<256x8xf32>,
    %cst_22 = arith.constant dense<0.000000e+00> : vector<8xf32>
    %32 = vector.multi_reduction <add>, %30, %cst_22 [0] : vector<256x8xf32> to vector<8xf32>
    %33 = vector.shape_cast %32 : vector<8xf32> to vector<1x8xf32>
    %34 = arith.addf %13, %33 : vector<1x8xf32>
    %35 = arith.mulf %30, %30 : vector<256x8xf32>
    %cst_23 = arith.constant dense<0.000000e+00> : vector<8xf32>
    %36 = vector.multi_reduction <add>, %35, %cst_23 [0] : vector<256x8xf32> to vector<8xf32>
    %37 = vector.shape_cast %36 : vector<8xf32> to vector<1x8xf32>
    %38 = arith.addf %13, %37 : vector<1x8xf32>
    %cst_24 = arith.constant 3.906250e-03 : f32
    %39 = vector.broadcast %cst_24 : f32 to vector<1x8xf32>
    %40 = arith.mulf %34, %39 : vector<1x8xf32>
    %cst_25 = arith.constant 3.906250e-03 : f32
    %41 = vector.broadcast %cst_25 : f32 to vector<1x8xf32>
    %42 = arith.mulf %38, %41 : vector<1x8xf32>
    %43 = arith.mulf %40, %40 : vector<1x8xf32>
    %44 = arith.subf %42, %43 : vector<1x8xf32>
    %cst_26 = arith.constant 0.000000e+00 : f32
    %45 = vector.broadcast %cst_26 : f32 to vector<1x8xf32>
    %46 = arith.maximumf %44, %45 : vector<1x8xf32>
    %cst_27 = arith.constant 9.99999974E-6 : f32
    %47 = vector.broadcast %cst_27 : f32 to vector<1x8xf32>
    %48 = arith.addf %46, %47 : vector<1x8xf32>
    %49 = math.rsqrt %48 : vector<1x8xf32>
    %c0_28 = arith.constant 0 : index
    %c0_29 = arith.constant 0 : index
    %50 = vector.load %arg6[%c0_28, %c0_29] : memref<256x8xf32, #tpu.memory_space<vmem>>, vector<256x8xf32>
    %51 = vector.broadcast %40 : vector<1x8xf32> to vector<256x8xf32>
    %52 = arith.subf %50, %51 : vector<256x8xf32>
    %53 = vector.broadcast %49 : vector<1x8xf32> to vector<256x8xf32>
    %54 = arith.mulf %52, %53 : vector<256x8xf32>
    %cst_30 = arith.constant 0.000000e+00 : f32
    %55 = vector.broadcast %cst_30 : f32 to vector<256x8xf32>
    %56 = arith.maximumf %54, %55 : vector<256x8xf32>
    %57 = vector.shape_cast %56 : vector<256x8xf32> to vector<16x16x8xf32>
    %c1_31 = arith.constant 1 : index
    %c0_32 = arith.constant 0 : index
    %c0_33 = arith.constant 0 : index
    %58 = vector.load %arg5[%c1_31, %c0_32, %c0_33] : memref<18x16x8xf32, #tpu.memory_space<vmem>>, vector<16x16x8xf32>
    tpu.vector_store %arg5[%c1_31, %c0_32, %c0_33], %57 {strides = array<i32>} : memref<18x16x8xf32, #tpu.memory_space<vmem>>, vector<16x16x8xf32>,
    %c2_34 = arith.constant 2 : index
    %c0_35 = arith.constant 0 : index
    %c0_36 = arith.constant 0 : index
    %59 = vector.load %arg5[%c2_34, %c0_35, %c0_36] : memref<18x16x8xf32, #tpu.memory_space<vmem>>, vector<1x16x8xf32>
    %60 = vector.shape_cast %59 : vector<1x16x8xf32> to vector<16x8xf32>
    %c0_37 = arith.constant 0 : index
    %c0_38 = arith.constant 0 : index
    %c0_39 = arith.constant 0 : index
    %61 = vector.load %arg5[%c0_37, %c0_38, %c0_39] : memref<18x16x8xf32, #tpu.memory_space<vmem>>, vector<1x16x8xf32>
    %62 = vector.shape_cast %61 : vector<1x16x8xf32> to vector<16x8xf32>
    %63 = vector.shape_cast %60 : vector<16x8xf32> to vector<1x16x8xf32>
    tpu.vector_store %arg5[%c0_37, %c0_38, %c0_39], %63 {strides = array<i32>} : memref<18x16x8xf32, #tpu.memory_space<vmem>>, vector<1x16x8xf32>,
    %c15_40 = arith.constant 15 : index
    %c0_41 = arith.constant 0 : index
    %c0_42 = arith.constant 0 : index
    %64 = vector.load %arg5[%c15_40, %c0_41, %c0_42] : memref<18x16x8xf32, #tpu.memory_space<vmem>>, vector<1x16x8xf32>
    %65 = vector.shape_cast %64 : vector<1x16x8xf32> to vector<16x8xf32>
    %c17_43 = arith.constant 17 : index
    %c0_44 = arith.constant 0 : index
    %c0_45 = arith.constant 0 : index
    %66 = vector.load %arg5[%c17_43, %c0_44, %c0_45] : memref<18x16x8xf32, #tpu.memory_space<vmem>>, vector<1x16x8xf32>
    %67 = vector.shape_cast %66 : vector<1x16x8xf32> to vector<16x8xf32>
    %68 = vector.shape_cast %65 : vector<16x8xf32> to vector<1x16x8xf32>
    tpu.vector_store %arg5[%c17_43, %c0_44, %c0_45], %68 {strides = array<i32>} : memref<18x16x8xf32, #tpu.memory_space<vmem>>, vector<1x16x8xf32>,
    %cst_46 = arith.constant 0.000000e+00 : f32
    %69 = vector.broadcast %cst_46 : f32 to vector<1x8xf32>
    %c0_47 = arith.constant 0 : index
    %c0_48 = arith.constant 0 : index
    %c0_49 = arith.constant 0 : index
    %70 = vector.load %arg5[%c0_47, %c0_48, %c0_49] : memref<18x16x8xf32, #tpu.memory_space<vmem>>, vector<18x16x8xf32>
    %71 = vector.extract_strided_slice %70 {offsets = [0, 1, 0], sizes = [18, 1, 8], strides = [1, 1, 1]} : vector<18x16x8xf32> to vector<18x1x8xf32>
    %72 = vector.extract_strided_slice %70 {offsets = [0, 14, 0], sizes = [18, 1, 8], strides = [1, 1, 1]} : vector<18x16x8xf32> to vector<18x1x8xf32>
    %73 = tpu.concatenate %71, %70, %72 in 1 : vector<18x1x8xf32>, vector<18x16x8xf32>, vector<18x1x8xf32> -> vector<18x18x8xf32>
    %74 = vector.extract_strided_slice %73 {offsets = [0, 0, 0], sizes = [16, 16, 8], strides = [1, 1, 1]} : vector<18x18x8xf32> to vector<16x16x8xf32>
    %75 = vector.extract_strided_slice %73 {offsets = [0, 1, 0], sizes = [16, 16, 8], strides = [1, 1, 1]} : vector<18x18x8xf32> to vector<16x16x8xf32>
    %76 = vector.extract_strided_slice %73 {offsets = [0, 2, 0], sizes = [16, 16, 8], strides = [1, 1, 1]} : vector<18x18x8xf32> to vector<16x16x8xf32>
    %77 = vector.extract_strided_slice %73 {offsets = [1, 0, 0], sizes = [16, 16, 8], strides = [1, 1, 1]} : vector<18x18x8xf32> to vector<16x16x8xf32>
    %78 = vector.extract_strided_slice %73 {offsets = [1, 1, 0], sizes = [16, 16, 8], strides = [1, 1, 1]} : vector<18x18x8xf32> to vector<16x16x8xf32>
    %79 = vector.extract_strided_slice %73 {offsets = [1, 2, 0], sizes = [16, 16, 8], strides = [1, 1, 1]} : vector<18x18x8xf32> to vector<16x16x8xf32>
    %80 = vector.extract_strided_slice %73 {offsets = [2, 0, 0], sizes = [16, 16, 8], strides = [1, 1, 1]} : vector<18x18x8xf32> to vector<16x16x8xf32>
    %81 = vector.extract_strided_slice %73 {offsets = [2, 1, 0], sizes = [16, 16, 8], strides = [1, 1, 1]} : vector<18x18x8xf32> to vector<16x16x8xf32>
    %82 = vector.extract_strided_slice %73 {offsets = [2, 2, 0], sizes = [16, 16, 8], strides = [1, 1, 1]} : vector<18x18x8xf32> to vector<16x16x8xf32>
    %83 = tpu.concatenate %74, %75, %76, %77, %78, %79, %80, %81, %82 in 2 : vector<16x16x8xf32>, vector<16x16x8xf32>, vector<16x16x8xf32>, vector<16x16x8xf32>, vector<16x16x8xf32>, vector<16x16x8xf32>, vector<16x16x8xf32>, vector<16x16x8xf32>, vector<16x16x8xf32> -> vector<16x16x72xf32>
    %84 = vector.shape_cast %83 : vector<16x16x72xf32> to vector<256x72xf32>
    %c0_50 = arith.constant 0 : index
    %c0_51 = arith.constant 0 : index
    %85 = vector.load %arg3[%c0_50, %c0_51] : memref<72x8xf32, #tpu.memory_space<vmem>>, vector<72x8xf32>
    %cst_52 = arith.constant dense<0.000000e+00> : vector<256x8xf32>
    %86 = tpu.matmul %84, %85, %cst_52 {dimension_numbers = #tpu.dot_dimension_numbers<[1], [0], [0], [1], [0, 0, 1, 1], [], []>} : vector<256x72xf32>, vector<72x8xf32>, vector<256x8xf32> -> vector<256x8xf32>
    %c0_53 = arith.constant 0 : index
    %c0_54 = arith.constant 0 : index
    %87 = vector.load %arg6[%c0_53, %c0_54] : memref<256x8xf32, #tpu.memory_space<vmem>>, vector<256x8xf32>
    tpu.vector_store %arg6[%c0_53, %c0_54], %86 {strides = array<i32>} : memref<256x8xf32, #tpu.memory_space<vmem>>, vector<256x8xf32>,
    %cst_55 = arith.constant dense<0.000000e+00> : vector<8xf32>
    %88 = vector.multi_reduction <add>, %86, %cst_55 [0] : vector<256x8xf32> to vector<8xf32>
    %89 = vector.shape_cast %88 : vector<8xf32> to vector<1x8xf32>
    %90 = arith.addf %69, %89 : vector<1x8xf32>
    %91 = arith.mulf %86, %86 : vector<256x8xf32>
    %cst_56 = arith.constant dense<0.000000e+00> : vector<8xf32>
    %92 = vector.multi_reduction <add>, %91, %cst_56 [0] : vector<256x8xf32> to vector<8xf32>
    %93 = vector.shape_cast %92 : vector<8xf32> to vector<1x8xf32>
    %94 = arith.addf %69, %93 : vector<1x8xf32>
    %cst_57 = arith.constant 3.906250e-03 : f32
    %95 = vector.broadcast %cst_57 : f32 to vector<1x8xf32>
    %96 = arith.mulf %90, %95 : vector<1x8xf32>
    %cst_58 = arith.constant 3.906250e-03 : f32
    %97 = vector.broadcast %cst_58 : f32 to vector<1x8xf32>
    %98 = arith.mulf %94, %97 : vector<1x8xf32>
    %99 = arith.mulf %96, %96 : vector<1x8xf32>
    %100 = arith.subf %98, %99 : vector<1x8xf32>
    %cst_59 = arith.constant 0.000000e+00 : f32
    %101 = vector.broadcast %cst_59 : f32 to vector<1x8xf32>
    %102 = arith.maximumf %100, %101 : vector<1x8xf32>
    %cst_60 = arith.constant 9.99999974E-6 : f32
    %103 = vector.broadcast %cst_60 : f32 to vector<1x8xf32>
    %104 = arith.addf %102, %103 : vector<1x8xf32>
    %105 = math.rsqrt %104 : vector<1x8xf32>
    %c0_61 = arith.constant 0 : index
    %c0_62 = arith.constant 0 : index
    %106 = vector.load %arg6[%c0_61, %c0_62] : memref<256x8xf32, #tpu.memory_space<vmem>>, vector<256x8xf32>
    %107 = vector.broadcast %96 : vector<1x8xf32> to vector<256x8xf32>
    %108 = arith.subf %106, %107 : vector<256x8xf32>
    %109 = vector.broadcast %105 : vector<1x8xf32> to vector<256x8xf32>
    %110 = arith.mulf %108, %109 : vector<256x8xf32>
    %c0_63 = arith.constant 0 : index
    %c0_64 = arith.constant 0 : index
    %c0_65 = arith.constant 0 : index
    %c0_66 = arith.constant 0 : index
    %111 = vector.load %arg1[%c0_63, %c0_64, %c0_65, %c0_66] : memref<1x16x16x8xf32, #tpu.memory_space<vmem>>, vector<1x16x16x8xf32>
    %112 = vector.shape_cast %111 : vector<1x16x16x8xf32> to vector<16x16x8xf32>
    %113 = vector.shape_cast %110 : vector<256x8xf32> to vector<16x16x8xf32>
    %114 = arith.addf %112, %113 : vector<16x16x8xf32>
    %115 = vector.shape_cast %114 : vector<16x16x8xf32> to vector<1x16x16x8xf32>
    %c0_67 = arith.constant 0 : index
    %c0_68 = arith.constant 0 : index
    %c0_69 = arith.constant 0 : index
    %c0_70 = arith.constant 0 : index
    %116 = vector.load %arg4[%c0_67, %c0_68, %c0_69, %c0_70] : memref<1x16x16x8xf32, #tpu.memory_space<vmem>>, vector<1x16x16x8xf32>
    tpu.vector_store %arg4[%c0_67, %c0_68, %c0_69, %c0_70], %115 {strides = array<i32>} : memref<1x16x16x8xf32, #tpu.memory_space<vmem>>, vector<1x16x16x8xf32>,
    return
  }
  func.func @transform_0(%arg0: i32) -> (i32, i32, i32, i32) {
    %c0_i32 = arith.constant 0 : i32
    %c0_i32_0 = arith.constant 0 : i32
    %c0_i32_1 = arith.constant 0 : i32
    %c0_i32_2 = arith.constant 0 : i32
    return %arg0, %c0_i32, %c0_i32_0, %c0_i32_1 : i32, i32, i32, i32
  }
  func.func @transform_1(%arg0: i32) -> (i32, i32) {
    %c0_i32 = arith.constant 0 : i32
    %c0_i32_0 = arith.constant 0 : i32
    %c0_i32_1 = arith.constant 0 : i32
    return %c0_i32, %c0_i32_0 : i32, i32
  }
  func.func @transform_2(%arg0: i32) -> (i32, i32) {
    %c0_i32 = arith.constant 0 : i32
    %c0_i32_0 = arith.constant 0 : i32
    %c0_i32_1 = arith.constant 0 : i32
    return %c0_i32, %c0_i32_0 : i32, i32
  }
  func.func @transform_3(%arg0: i32) -> (i32, i32, i32, i32) {
    %c0_i32 = arith.constant 0 : i32
    %c0_i32_0 = arith.constant 0 : i32
    %c0_i32_1 = arith.constant 0 : i32
    %c0_i32_2 = arith.constant 0 : i32
    return %arg0, %c0_i32, %c0_i32_0, %c0_i32_1 : i32, i32, i32, i32
  }
}

</mosaic_0001>

<llo_original>
// kernel: tpu_custom_call.1
$region0: #{tpu_custom_call.1}
  #allocation0 [shape = 'u32[]', space=smem, size = 0x4, offset = 0x4, fixed_abs, tag = 'smem constant byte address 0x4 - core index']
  #allocation1 [shape = 'u32[144,128]{1,0:T(1,128)}', space=vmem, size = 0x12000, scoped, tag = 'internal scratch']
  #allocation2 [shape = 'f32[18,16,8]{2,1,0:T(8,128)}', space=vmem, size = 0x24000, scoped, tag = 'scratch operand']
  #allocation3 [shape = 'f32[256,8]{1,0:T(8,128)}', space=vmem, size = 0x20000, scoped, tag = 'scratch operand']
  %s0 = inlined_call_operand.vmem [shape: f32[2,16,16,8], index: 0, kind: input, shape index: {}]
  %s1 = inlined_call_operand.vmem [shape: f32[72,8], index: 1, kind: input, shape index: {}]
  %s2 = inlined_call_operand.vmem [shape: f32[72,8], index: 2, kind: input, shape index: {}]
  %s3 = inlined_call_operand.vmem [shape: f32[2,16,16,8], index: 3, kind: output, shape index: {}]
  %s4 = sld [smem:[#allocation0]]
  $region45: #{tpu_custom_call.1} parent=0
    _
  %s6 = ssub.s32 1, %s4
  %s7 = scalar_select 0, %s6, %s4
  loop: start=0, step=1, limit=4
  $region2: #{tpu_custom_call.1} parent=0 // loop_pre_header
    _
  $region3: #{tpu_custom_call.1} parent=0 // loop_header
    %s9 = sphi 0, %s13
    %p10 = scmp.ge.s32.totalorder %s9, 4
    %s19 = sphi 0, %s21
    %s22 = sphi 0, %s19
    %s23 = sphi 0, %s22
    %s39 = sphi 0, %s23
    %s43 = sphi 0, %s43
    %s45 = sphi 0, %s43
    %s46 = sphi 0, %s45
    %s60 = sphi 0, %s46
    %s64 = sphi 0, %s64
    %s66 = sphi 0, %s64
    %s67 = sphi 0, %s66
    %s81 = sphi 0, %s67
    %s87 = sphi 0, %s89
    %s90 = sphi 0, %s87
    %s91 = sphi 0, %s90
    %s107 = sphi 0, %s91
  $region4: #{tpu_custom_call.1} parent=0 // loop_header_branch
    %12 = sbr.rel (%p10) target = $region8
  $region5: #{tpu_custom_call.1} parent=0 // loop_body
    %s14 = ssub.s32 %s9, 1
    %s15 = ssub.s32 %s9, 2
    %s16 = sadd.s32 %s9, 1
    %s17 = ssub.s32 %s9, %s16
    %p18 = scmp.eq.s32.totalorder %s17, 0
    %s20 = sadd.s32 %s19, 1
    %s21 = scalar_select %p18, %s19, %s20
    %p24 = pneg %p18
    %p25 = scmp.eq.s32.totalorder %s9, 1
    %p26 = por %p24, %p25
    %p27 = scmp.ne.s32.totalorder %s19, %s22
    %p28 = scmp.eq.s32.totalorder %s9, 0
    %p29 = por %p27, %p28
    %p30 = scmp.ne.s32.totalorder %s19, %s22
    %p31 = scmp.eq.s32.totalorder %s14, 1
    %p32 = por %p30, %p31
    %p33 = scmp.ne.s32.totalorder %s22, %s23
    %p34 = scmp.eq.s32.totalorder %s14, 0
    %p35 = por %p33, %p34
    %p36 = scmp.ne.s32.totalorder %s22, %s23
    %p37 = scmp.eq.s32.totalorder %s15, 1
    %p38 = por %p36, %p37
    %p40 = scmp.ne.s32.totalorder %s23, %s39
    %p41 = scmp.eq.s32.totalorder %s15, 0
    %p42 = por %p40, %p41
    %s44 = sadd.s32 %s43, 1
    %p47 = scmp.eq.s32.totalorder %s9, 1
    %p48 = scmp.ne.s32.totalorder %s43, %s45
    %p49 = scmp.eq.s32.totalorder %s9, 0
    %p50 = por %p48, %p49
    %p51 = scmp.ne.s32.totalorder %s43, %s45
    %p52 = scmp.eq.s32.totalorder %s14, 1
    %p53 = por %p51, %p52
    %p54 = scmp.ne.s32.totalorder %s45, %s46
    %p55 = scmp.eq.s32.totalorder %s14, 0
    %p56 = por %p54, %p55
    %p57 = scmp.ne.s32.totalorder %s45, %s46
    %p58 = scmp.eq.s32.totalorder %s15, 1
    %p59 = por %p57, %p58
    %p61 = scmp.ne.s32.totalorder %s46, %s60
    %p62 = scmp.eq.s32.totalorder %s15, 0
    %p63 = por %p61, %p62
    %s65 = sadd.s32 %s64, 1
    %p68 = scmp.eq.s32.totalorder %s9, 1
    %p69 = scmp.ne.s32.totalorder %s64, %s66
    %p70 = scmp.eq.s32.totalorder %s9, 0
    %p71 = por %p69, %p70
    %p72 = scmp.ne.s32.totalorder %s64, %s66
    %p73 = scmp.eq.s32.totalorder %s14, 1
    %p74 = por %p72, %p73
    %p75 = scmp.ne.s32.totalorder %s66, %s67
    %p76 = scmp.eq.s32.totalorder %s14, 0
    %p77 = por %p75, %p76
    %p78 = scmp.ne.s32.totalorder %s66, %s67
    %p79 = scmp.eq.s32.totalorder %s15, 1
    %p80 = por %p78, %p79
    %p82 = scmp.ne.s32.totalorder %s67, %s81
    %p83 = scmp.eq.s32.totalorder %s15, 0
    %p84 = por %p82, %p83
    %s85 = ssub.s32 %s9, %s16
    %p86 = scmp.eq.s32.totalorder %s85, 0
    %s88 = sadd.s32 %s87, 1
    %s89 = scalar_select %p86, %s87, %s88
    %p92 = pneg %p86
    %p93 = scmp.eq.s32.totalorder %s9, 1
    %p94 = por %p92, %p93
    %p95 = scmp.ne.s32.totalorder %s87, %s90
    %p96 = scmp.eq.s32.totalorder %s9, 0
    %p97 = por %p95, %p96
    %p98 = scmp.ne.s32.totalorder %s87, %s90
    %p99 = scmp.eq.s32.totalorder %s14, 1
    %p100 = por %p98, %p99
    %p101 = scmp.ne.s32.totalorder %s90, %s91
    %p102 = scmp.eq.s32.totalorder %s14, 0
    %p103 = por %p101, %p102
    %p104 = scmp.ne.s32.totalorder %s90, %s91
    %p105 = scmp.eq.s32.totalorder %s15, 1
    %p106 = por %p104, %p105
    %p108 = scmp.ne.s32.totalorder %s91, %s107
    %p109 = scmp.eq.s32.totalorder %s15, 0
    %p110 = por %p108, %p109
    %p111 = scmp.le.s32.totalorder 1, %s9
    %p112 = scmp.lt.s32.totalorder %s9, 3
    %p113 = pnand %p111, %p112
    %p114 = pneg %p113
    // Predicated region
    $region9: #{tpu_custom_call.1} parent=5 // pred_check
      _
    $region10: #{tpu_custom_call.1} parent=5 // pred_check_branch
      %116 = sbr.rel (%p113) target = $region12
    $region11: #{tpu_custom_call.1} parent=5 // pred_region
      %s117 = ssub.s32 %s9, 1
      // Predicated region
      $region13: #{tpu_custom_call.1} parent=11 // pred_check
        %p118 = pneg %p56
      $region14: #{tpu_custom_call.1} parent=11 // pred_check_branch
        %120 = sbr.rel (%p118) target = $region16
      $region15: #{tpu_custom_call.1} parent=11 // pred_region
        _
      $region16: #{tpu_custom_call.1} parent=11 // pred_fallthru
        _
      // Predicated region
      $region17: #{tpu_custom_call.1} parent=11 // pred_check
        %p121 = pneg %p77
      $region18: #{tpu_custom_call.1} parent=11 // pred_check_branch
        %123 = sbr.rel (%p121) target = $region20
      $region19: #{tpu_custom_call.1} parent=11 // pred_region
        _
      $region20: #{tpu_custom_call.1} parent=11 // pred_fallthru
        _
    $region12: #{tpu_custom_call.1} parent=5 // pred_fallthru
      _
    %p124 = scmp.lt.s32.totalorder %s9, 2
    // Predicated region
    $region21: #{tpu_custom_call.1} parent=5 // pred_check
      %p125 = pneg %p124
    $region22: #{tpu_custom_call.1} parent=5 // pred_check_branch
      %127 = sbr.rel (%p125) target = $region24
    $region23: #{tpu_custom_call.1} parent=5 // pred_region
      // Predicated region
      $region25: #{tpu_custom_call.1} parent=23 // pred_check
        %p128 = pneg %p29
      $region26: #{tpu_custom_call.1} parent=23 // pred_check_branch
        %130 = sbr.rel (%p128) target = $region28
      $region27: #{tpu_custom_call.1} parent=23 // pred_region
        %p131 = scmp.lt.s32.totalorder %s9, 1
        %s132 = scalar_select %p131, %s9, 1
        %s133 = smul.addr %s132, 32
        %s134 = smul.addr %s133, 8
        %s135 = scalar_lea.vmem %s0, %s134
      $region28: #{tpu_custom_call.1} parent=23 // pred_fallthru
        _
    $region24: #{tpu_custom_call.1} parent=5 // pred_fallthru
      _
    %p136 = scmp.le.s32.totalorder 1, %s9
    %p137 = scmp.lt.s32.totalorder %s9, 3
    %p138 = pnand %p136, %p137
    %p139 = pneg %p138
    // Predicated region
    $region29: #{tpu_custom_call.1} parent=5 // pred_check
      _
    $region30: #{tpu_custom_call.1} parent=5 // pred_check_branch
      %141 = sbr.rel (%p138) target = $region32
    $region31: #{tpu_custom_call.1} parent=5 // pred_region
      %s142 = ssub.s32 %s9, 1
      %p143 = scmp.lt.s32.totalorder %s14, 1
      %s144 = scalar_select %p143, %s14, 1
      %s145 = smul.addr %s144, 32
      %s146 = smul.addr %s145, 8
      %s147 = scalar_lea.vmem %s0, %s146
      %p148 = pneg %p35
      %p149 = pneg %p32
      %p150 = pneg %p56
      %p151 = pneg %p53
      %p152 = pneg %p77
      %p153 = pneg %p74
      %p154 = pneg %p103
      %p155 = pneg %p100
      %p156 = scmp.lt.s32.totalorder %s14, 1
      %s157 = scalar_select %p156, %s14, 1
      %s158 = smul.addr %s157, 32
      %s159 = smul.addr %s158, 8
      %s160 = scalar_lea.vmem %s3, %s159
      %p161 = scmp.lt.s32.totalorder %s14, 1
      %s162 = scalar_select %p161, %s14, 1
      %s163 = smul.addr %s162, 32
      %s164 = smul.addr %s163, 8
      %s165 = scalar_lea.vmem %s0, %s164
      %p166 = scmp.lt.s32.totalorder %s14, 1
      %s167 = scalar_select %p166, %s14, 1
      %s168 = smul.addr %s167, 32
      %s169 = smul.addr %s168, 8
      %s170 = scalar_lea.vmem %s3, %s169
      %v171 = vld [vmem:[%s165] sm:$0xff]
      %v172 = vld [vmem:[%s165 + $0x8] sm:$0xff]
      %v173 = vld [vmem:[%s165 + $0x10] sm:$0xff]
      %v174 = vld [vmem:[%s165 + $0x18] sm:$0xff]
      %v175 = vld [vmem:[%s165 + $0x20] sm:$0xff]
      %v176 = vld [vmem:[%s165 + $0x28] sm:$0xff]
      %v177 = vld [vmem:[%s165 + $0x30] sm:$0xff]
      %v178 = vld [vmem:[%s165 + $0x38] sm:$0xff]
      %v179 = vld [vmem:[%s165 + $0x40] sm:$0xff]
      %v180 = vld [vmem:[%s165 + $0x48] sm:$0xff]
      %v181 = vld [vmem:[%s165 + $0x50] sm:$0xff]
      %v182 = vld [vmem:[%s165 + $0x58] sm:$0xff]
      %v183 = vld [vmem:[%s165 + $0x60] sm:$0xff]
      %v184 = vld [vmem:[%s165 + $0x68] sm:$0xff]
      %v185 = vld [vmem:[%s165 + $0x70] sm:$0xff]
      %v186 = vld [vmem:[%s165 + $0x78] sm:$0xff]
      %v187 = vld [vmem:[%s165 + $0x80] sm:$0xff]
      %v188 = vld [vmem:[%s165 + $0x88] sm:$0xff]
      %v189 = vld [vmem:[%s165 + $0x90] sm:$0xff]
      %v190 = vld [vmem:[%s165 + $0x98] sm:$0xff]
      %v191 = vld [vmem:[%s165 + $0xa0] sm:$0xff]
      %v192 = vld [vmem:[%s165 + $0xa8] sm:$0xff]
      %v193 = vld [vmem:[%s165 + $0xb0] sm:$0xff]
      %v194 = vld [vmem:[%s165 + $0xb8] sm:$0xff]
      %v195 = vld [vmem:[%s165 + $0xc0] sm:$0xff]
      %v196 = vld [vmem:[%s165 + $0xc8] sm:$0xff]
      %v197 = vld [vmem:[%s165 + $0xd0] sm:$0xff]
      %v198 = vld [vmem:[%s165 + $0xd8] sm:$0xff]
      %v199 = vld [vmem:[%s165 + $0xe0] sm:$0xff]
      %v200 = vld [vmem:[%s165 + $0xe8] sm:$0xff]
      %v201 = vld [vmem:[%s165 + $0xf0] sm:$0xff]
      %v202 = vld [vmem:[%s165 + $0xf8] sm:$0xff]
      %s203 = scalar_lea.vmem [#allocation2], 16
      %vm204 = vcmask 64512
      %205 = vst.msk [vmem:[%s203] sm:$0xff] %vm204, %v171
      %206 = vst.msk [vmem:[%s203 + $0x8] sm:$0xff] %vm204, %v172
      %207 = vst.msk [vmem:[%s203 + $0x10] sm:$0xff] %vm204, %v173
      %208 = vst.msk [vmem:[%s203 + $0x18] sm:$0xff] %vm204, %v174
      %209 = vst.msk [vmem:[%s203 + $0x20] sm:$0xff] %vm204, %v175
      %210 = vst.msk [vmem:[%s203 + $0x28] sm:$0xff] %vm204, %v176
      %211 = vst.msk [vmem:[%s203 + $0x30] sm:$0xff] %vm204, %v177
      %212 = vst.msk [vmem:[%s203 + $0x38] sm:$0xff] %vm204, %v178
      %213 = vst.msk [vmem:[%s203 + $0x40] sm:$0xff] %vm204, %v179
      %214 = vst.msk [vmem:[%s203 + $0x48] sm:$0xff] %vm204, %v180
      %215 = vst.msk [vmem:[%s203 + $0x50] sm:$0xff] %vm204, %v181
      %216 = vst.msk [vmem:[%s203 + $0x58] sm:$0xff] %vm204, %v182
      %217 = vst.msk [vmem:[%s203 + $0x60] sm:$0xff] %vm204, %v183
      %218 = vst.msk [vmem:[%s203 + $0x68] sm:$0xff] %vm204, %v184
      %219 = vst.msk [vmem:[%s203 + $0x70] sm:$0xff] %vm204, %v185
      %220 = vst.msk [vmem:[%s203 + $0x78] sm:$0xff] %vm204, %v186
      %221 = vst.msk [vmem:[%s203 + $0x80] sm:$0xff] %vm204, %v187
      %222 = vst.msk [vmem:[%s203 + $0x88] sm:$0xff] %vm204, %v188
      %223 = vst.msk [vmem:[%s203 + $0x90] sm:$0xff] %vm204, %v189
      %224 = vst.msk [vmem:[%s203 + $0x98] sm:$0xff] %vm204, %v190
      %225 = vst.msk [vmem:[%s203 + $0xa0] sm:$0xff] %vm204, %v191
      %226 = vst.msk [vmem:[%s203 + $0xa8] sm:$0xff] %vm204, %v192
      %227 = vst.msk [vmem:[%s203 + $0xb0] sm:$0xff] %vm204, %v193
      %228 = vst.msk [vmem:[%s203 + $0xb8] sm:$0xff] %vm204, %v194
      %229 = vst.msk [vmem:[%s203 + $0xc0] sm:$0xff] %vm204, %v195
      %230 = vst.msk [vmem:[%s203 + $0xc8] sm:$0xff] %vm204, %v196
      %231 = vst.msk [vmem:[%s203 + $0xd0] sm:$0xff] %vm204, %v197
      %232 = vst.msk [vmem:[%s203 + $0xd8] sm:$0xff] %vm204, %v198
      %233 = vst.msk [vmem:[%s203 + $0xe0] sm:$0xff] %vm204, %v199
      %234 = vst.msk [vmem:[%s203 + $0xe8] sm:$0xff] %vm204, %v200
      %235 = vst.msk [vmem:[%s203 + $0xf0] sm:$0xff] %vm204, %v201
      %236 = vst.msk [vmem:[%s203 + $0xf8] sm:$0xff] %vm204, %v202
      %s237 = scalar_lea.vmem [#allocation2], 32
      %v238 = vld [vmem:[%s237] sm:$0xff]
      %v239 = vld [vmem:[%s237 + $0x8] sm:$0xff]
      %240 = vst.msk [vmem:[#allocation2] sm:$0xff] %vm204, %v238
      %241 = vst.msk [vmem:[#allocation2 + $0x8] sm:$0xff] %vm204, %v239
      %s242 = scalar_lea.vmem [#allocation2], 240
      %v243 = vld [vmem:[%s242] sm:$0xff]
      %v244 = vld [vmem:[%s242 + $0x8] sm:$0xff]
      %s245 = scalar_lea.vmem [#allocation2], 272
      %246 = vst.msk [vmem:[%s245] sm:$0xff] %vm204, %v243
      %247 = vst.msk [vmem:[%s245 + $0x8] sm:$0xff] %vm204, %v244
      %v248 = vld [vmem:[#allocation2] sm:$0xff]
      %v249 = vld [vmem:[#allocation2 + $0x8] sm:$0xff]
      %v250 = vld [vmem:[#allocation2 + $0x10] sm:$0xff]
      %v251 = vld [vmem:[#allocation2 + $0x18] sm:$0xff]
      %v252 = vld [vmem:[#allocation2 + $0x20] sm:$0xff]
      %v253 = vld [vmem:[#allocation2 + $0x28] sm:$0xff]
      %v254 = vld [vmem:[#allocation2 + $0x30] sm:$0xff]
      %v255 = vld [vmem:[#allocation2 + $0x38] sm:$0xff]
      %v256 = vld [vmem:[#allocation2 + $0x40] sm:$0xff]
      %v257 = vld [vmem:[#allocation2 + $0x48] sm:$0xff]
      %v258 = vld [vmem:[#allocation2 + $0x50] sm:$0xff]
      %v259 = vld [vmem:[#allocation2 + $0x58] sm:$0xff]
      %v260 = vld [vmem:[#allocation2 + $0x60] sm:$0xff]
      %v261 = vld [vmem:[#allocation2 + $0x68] sm:$0xff]
      %v262 = vld [vmem:[#allocation2 + $0x70] sm:$0xff]
      %v263 = vld [vmem:[#allocation2 + $0x78] sm:$0xff]
      %v264 = vld [vmem:[#allocation2 + $0x80] sm:$0xff]
      %v265 = vld [vmem:[#allocation2 + $0x88] sm:$0xff]
      %v266 = vld [vmem:[#allocation2 + $0x90] sm:$0xff]
      %v267 = vld [vmem:[#allocation2 + $0x98] sm:$0xff]
      %v268 = vld [vmem:[#allocation2 + $0xa0] sm:$0xff]
      %v269 = vld [vmem:[#allocation2 + $0xa8] sm:$0xff]
      %v270 = vld [vmem:[#allocation2 + $0xb0] sm:$0xff]
      %v271 = vld [vmem:[#allocation2 + $0xb8] sm:$0xff]
      %v272 = vld [vmem:[#allocation2 + $0xc0] sm:$0xff]
      %v273 = vld [vmem:[#allocation2 + $0xc8] sm:$0xff]
      %v274 = vld [vmem:[#allocation2 + $0xd0] sm:$0xff]
      %v275 = vld [vmem:[#allocation2 + $0xd8] sm:$0xff]
      %v276 = vld [vmem:[#allocation2 + $0xe0] sm:$0xff]
      %v277 = vld [vmem:[#allocation2 + $0xe8] sm:$0xff]
      %v278 = vld [vmem:[#allocation2 + $0xf0] sm:$0xff]
      %v279 = vld [vmem:[#allocation2 + $0xf8] sm:$0xff]
      %v280 = vld [vmem:[#allocation2 + $0x100] sm:$0xff]
      %v281 = vld [vmem:[#allocation2 + $0x108] sm:$0xff]
      %v282 = vld [vmem:[#allocation2 + $0x110] sm:$0xff]
      %v283 = vld [vmem:[#allocation2 + $0x118] sm:$0xff]
      %v302 = vrot.slane %v248, 1
      %v303 = vrot.slane %v250, 1
      %v304 = vrot.slane %v252, 1
      %v305 = vrot.slane %v254, 1
      %v306 = vrot.slane %v256, 1
      %v307 = vrot.slane %v258, 1
      %v308 = vrot.slane %v260, 1
      %v309 = vrot.slane %v262, 1
      %v310 = vrot.slane %v264, 1
      %v311 = vrot.slane %v266, 1
      %v312 = vrot.slane %v268, 1
      %v313 = vrot.slane %v270, 1
      %v314 = vrot.slane %v272, 1
      %v315 = vrot.slane %v274, 1
      %v316 = vrot.slane %v276, 1
      %v317 = vrot.slane %v278, 1
      %v318 = vrot.slane %v280, 1
      %v319 = vrot.slane %v282, 1
      %vm356 = vcmask 1040384
      %v357 = vrot.slane %v248, 7
      %v358 = vrot.slane %v249, 7
      %v359 = vsel %vm356, %v357, %v358
      %v360 = vrot.slane %v250, 7
      %v361 = vrot.slane %v251, 7
      %v362 = vsel %vm356, %v360, %v361
      %v363 = vrot.slane %v252, 7
      %v364 = vrot.slane %v253, 7
      %v365 = vsel %vm356, %v363, %v364
      %v366 = vrot.slane %v254, 7
      %v367 = vrot.slane %v255, 7
      %v368 = vsel %vm356, %v366, %v367
      %v369 = vrot.slane %v256, 7
      %v370 = vrot.slane %v257, 7
      %v371 = vsel %vm356, %v369, %v370
      %v372 = vrot.slane %v258, 7
      %v373 = vrot.slane %v259, 7
      %v374 = vsel %vm356, %v372, %v373
      %v375 = vrot.slane %v260, 7
      %v376 = vrot.slane %v261, 7
      %v377 = vsel %vm356, %v375, %v376
      %v378 = vrot.slane %v262, 7
      %v379 = vrot.slane %v263, 7
      %v380 = vsel %vm356, %v378, %v379
      %v381 = vrot.slane %v264, 7
      %v382 = vrot.slane %v265, 7
      %v383 = vsel %vm356, %v381, %v382
      %v384 = vrot.slane %v266, 7
      %v385 = vrot.slane %v267, 7
      %v386 = vsel %vm356, %v384, %v385
      %v387 = vrot.slane %v268, 7
      %v388 = vrot.slane %v269, 7
      %v389 = vsel %vm356, %v387, %v388
      %v390 = vrot.slane %v270, 7
      %v391 = vrot.slane %v271, 7
      %v392 = vsel %vm356, %v390, %v391
      %v393 = vrot.slane %v272, 7
      %v394 = vrot.slane %v273, 7
      %v395 = vsel %vm356, %v393, %v394
      %v396 = vrot.slane %v274, 7
      %v397 = vrot.slane %v275, 7
      %v398 = vsel %vm356, %v396, %v397
      %v399 = vrot.slane %v276, 7
      %v400 = vrot.slane %v277, 7
      %v401 = vsel %vm356, %v399, %v400
      %v402 = vrot.slane %v278, 7
      %v403 = vrot.slane %v279, 7
      %v404 = vsel %vm356, %v402, %v403
      %v405 = vrot.slane %v280, 7
      %v406 = vrot.slane %v281, 7
      %v407 = vsel %vm356, %v405, %v406
      %v408 = vrot.slane %v282, 7
      %v409 = vrot.slane %v283, 7
      %v410 = vsel %vm356, %v408, %v409
      %v463 = vrot.slane %v249, 5
      %v464 = vrot.slane %v251, 5
      %v465 = vrot.slane %v253, 5
      %v466 = vrot.slane %v255, 5
      %v467 = vrot.slane %v257, 5
      %v468 = vrot.slane %v259, 5
      %v469 = vrot.slane %v261, 5
      %v470 = vrot.slane %v263, 5
      %v471 = vrot.slane %v265, 5
      %v472 = vrot.slane %v267, 5
      %v473 = vrot.slane %v269, 5
      %v474 = vrot.slane %v271, 5
      %v475 = vrot.slane %v273, 5
      %v476 = vrot.slane %v275, 5
      %v477 = vrot.slane %v277, 5
      %v478 = vrot.slane %v279, 5
      %v479 = vrot.slane %v281, 5
      %v480 = vrot.slane %v283, 5
      %v499 = vsel %vm356, %v302, %v357
      %v500 = vsel %vm356, %v303, %v360
      %v501 = vsel %vm356, %v304, %v363
      %v502 = vsel %vm356, %v305, %v366
      %v503 = vsel %vm356, %v306, %v369
      %v504 = vsel %vm356, %v307, %v372
      %v505 = vsel %vm356, %v308, %v375
      %v506 = vsel %vm356, %v309, %v378
      %v507 = vsel %vm356, %v310, %v381
      %v508 = vsel %vm356, %v311, %v384
      %v509 = vsel %vm356, %v312, %v387
      %v510 = vsel %vm356, %v313, %v390
      %v511 = vsel %vm356, %v314, %v393
      %v512 = vsel %vm356, %v315, %v396
      %v513 = vsel %vm356, %v316, %v399
      %v514 = vsel %vm356, %v317, %v402
      %v515 = vsel %vm356, %v318, %v405
      %v516 = vsel %vm356, %v319, %v408
      %v517 = vsel %vm356, %v358, %v463
      %v518 = vsel %vm356, %v361, %v464
      %v519 = vsel %vm356, %v364, %v465
      %v520 = vsel %vm356, %v367, %v466
      %v521 = vsel %vm356, %v370, %v467
      %v522 = vsel %vm356, %v373, %v468
      %v523 = vsel %vm356, %v376, %v469
      %v524 = vsel %vm356, %v379, %v470
      %v525 = vsel %vm356, %v382, %v471
      %v526 = vsel %vm356, %v385, %v472
      %v527 = vsel %vm356, %v388, %v473
      %v528 = vsel %vm356, %v391, %v474
      %v529 = vsel %vm356, %v394, %v475
      %v530 = vsel %vm356, %v397, %v476
      %v531 = vsel %vm356, %v400, %v477
      %v532 = vsel %vm356, %v403, %v478
      %v533 = vsel %vm356, %v406, %v479
      %v534 = vsel %vm356, %v409, %v480
      %vm567 = vcmask 1046528
      %v568 = vrot.slane %v499, 1
      %v569 = vrot.slane %v359, 1
      %v570 = vsel %vm567, %v568, %v569
      %v571 = vrot.slane %v517, 1
      %v572 = vsel %vm567, %v569, %v571
      %v573 = vrot.slane %v500, 1
      %v574 = vrot.slane %v362, 1
      %v575 = vsel %vm567, %v573, %v574
      %v576 = vrot.slane %v518, 1
      %v577 = vsel %vm567, %v574, %v576
      %v578 = vrot.slane %v501, 1
      %v579 = vrot.slane %v365, 1
      %v580 = vsel %vm567, %v578, %v579
      %v581 = vrot.slane %v519, 1
      %v582 = vsel %vm567, %v579, %v581
      %v583 = vrot.slane %v502, 1
      %v584 = vrot.slane %v368, 1
      %v585 = vsel %vm567, %v583, %v584
      %v586 = vrot.slane %v520, 1
      %v587 = vsel %vm567, %v584, %v586
      %v588 = vrot.slane %v503, 1
      %v589 = vrot.slane %v371, 1
      %v590 = vsel %vm567, %v588, %v589
      %v591 = vrot.slane %v521, 1
      %v592 = vsel %vm567, %v589, %v591
      %v593 = vrot.slane %v504, 1
      %v594 = vrot.slane %v374, 1
      %v595 = vsel %vm567, %v593, %v594
      %v596 = vrot.slane %v522, 1
      %v597 = vsel %vm567, %v594, %v596
      %v598 = vrot.slane %v505, 1
      %v599 = vrot.slane %v377, 1
      %v600 = vsel %vm567, %v598, %v599
      %v601 = vrot.slane %v523, 1
      %v602 = vsel %vm567, %v599, %v601
      %v603 = vrot.slane %v506, 1
      %v604 = vrot.slane %v380, 1
      %v605 = vsel %vm567, %v603, %v604
      %v606 = vrot.slane %v524, 1
      %v607 = vsel %vm567, %v604, %v606
      %v608 = vrot.slane %v507, 1
      %v609 = vrot.slane %v383, 1
      %v610 = vsel %vm567, %v608, %v609
      %v611 = vrot.slane %v525, 1
      %v612 = vsel %vm567, %v609, %v611
      %v613 = vrot.slane %v508, 1
      %v614 = vrot.slane %v386, 1
      %v615 = vsel %vm567, %v613, %v614
      %v616 = vrot.slane %v526, 1
      %v617 = vsel %vm567, %v614, %v616
      %v618 = vrot.slane %v509, 1
      %v619 = vrot.slane %v389, 1
      %v620 = vsel %vm567, %v618, %v619
      %v621 = vrot.slane %v527, 1
      %v622 = vsel %vm567, %v619, %v621
      %v623 = vrot.slane %v510, 1
      %v624 = vrot.slane %v392, 1
      %v625 = vsel %vm567, %v623, %v624
      %v626 = vrot.slane %v528, 1
      %v627 = vsel %vm567, %v624, %v626
      %v628 = vrot.slane %v511, 1
      %v629 = vrot.slane %v395, 1
      %v630 = vsel %vm567, %v628, %v629
      %v631 = vrot.slane %v529, 1
      %v632 = vsel %vm567, %v629, %v631
      %v633 = vrot.slane %v512, 1
      %v634 = vrot.slane %v398, 1
      %v635 = vsel %vm567, %v633, %v634
      %v636 = vrot.slane %v530, 1
      %v637 = vsel %vm567, %v634, %v636
      %v638 = vrot.slane %v513, 1
      %v639 = vrot.slane %v401, 1
      %v640 = vsel %vm567, %v638, %v639
      %v641 = vrot.slane %v531, 1
      %v642 = vsel %vm567, %v639, %v641
      %v643 = vrot.slane %v514, 1
      %v644 = vrot.slane %v404, 1
      %v645 = vsel %vm567, %v643, %v644
      %v646 = vrot.slane %v532, 1
      %v647 = vsel %vm567, %v644, %v646
      %648 = vrot.lane.b32.xlu0 %v570, 8
      %v649 = vpop.permute.xlu0 %648
      %650 = vrot.lane.b32.xlu0 %v572, 8
      %v651 = vpop.permute.xlu0 %650
      %652 = vrot.lane.b32.xlu0 %v575, 8
      %v653 = vpop.permute.xlu0 %652
      %654 = vrot.lane.b32.xlu0 %v577, 8
      %v655 = vpop.permute.xlu0 %654
      %656 = vrot.lane.b32.xlu0 %v580, 8
      %v657 = vpop.permute.xlu0 %656
      %658 = vrot.lane.b32.xlu0 %v582, 8
      %v659 = vpop.permute.xlu0 %658
      %660 = vrot.lane.b32.xlu0 %v585, 8
      %v661 = vpop.permute.xlu0 %660
      %662 = vrot.lane.b32.xlu0 %v587, 8
      %v663 = vpop.permute.xlu0 %662
      %664 = vrot.lane.b32.xlu0 %v590, 8
      %v665 = vpop.permute.xlu0 %664
      %666 = vrot.lane.b32.xlu0 %v592, 8
      %v667 = vpop.permute.xlu0 %666
      %668 = vrot.lane.b32.xlu0 %v595, 8
      %v669 = vpop.permute.xlu0 %668
      %670 = vrot.lane.b32.xlu0 %v597, 8
      %v671 = vpop.permute.xlu0 %670
      %672 = vrot.lane.b32.xlu0 %v600, 8
      %v673 = vpop.permute.xlu0 %672
      %674 = vrot.lane.b32.xlu0 %v602, 8
      %v675 = vpop.permute.xlu0 %674
      %676 = vrot.lane.b32.xlu0 %v605, 8
      %v677 = vpop.permute.xlu0 %676
      %678 = vrot.lane.b32.xlu0 %v607, 8
      %v679 = vpop.permute.xlu0 %678
      %680 = vrot.lane.b32.xlu0 %v610, 8
      %v681 = vpop.permute.xlu0 %680
      %682 = vrot.lane.b32.xlu0 %v612, 8
      %v683 = vpop.permute.xlu0 %682
      %684 = vrot.lane.b32.xlu0 %v615, 8
      %v685 = vpop.permute.xlu0 %684
      %686 = vrot.lane.b32.xlu0 %v617, 8
      %v687 = vpop.permute.xlu0 %686
      %688 = vrot.lane.b32.xlu0 %v620, 8
      %v689 = vpop.permute.xlu0 %688
      %690 = vrot.lane.b32.xlu0 %v622, 8
      %v691 = vpop.permute.xlu0 %690
      %692 = vrot.lane.b32.xlu0 %v625, 8
      %v693 = vpop.permute.xlu0 %692
      %694 = vrot.lane.b32.xlu0 %v627, 8
      %v695 = vpop.permute.xlu0 %694
      %696 = vrot.lane.b32.xlu0 %v630, 8
      %v697 = vpop.permute.xlu0 %696
      %698 = vrot.lane.b32.xlu0 %v632, 8
      %v699 = vpop.permute.xlu0 %698
      %700 = vrot.lane.b32.xlu0 %v635, 8
      %v701 = vpop.permute.xlu0 %700
      %702 = vrot.lane.b32.xlu0 %v637, 8
      %v703 = vpop.permute.xlu0 %702
      %704 = vrot.lane.b32.xlu0 %v640, 8
      %v705 = vpop.permute.xlu0 %704
      %706 = vrot.lane.b32.xlu0 %v642, 8
      %v707 = vpop.permute.xlu0 %706
      %708 = vrot.lane.b32.xlu0 %v645, 8
      %v709 = vpop.permute.xlu0 %708
      %710 = vrot.lane.b32.xlu0 %v647, 8
      %v711 = vpop.permute.xlu0 %710
      %vm744 = vcmask 1045504
      %v745 = vrot.slane %v499, 2
      %v746 = vrot.slane %v359, 2
      %v747 = vsel %vm744, %v745, %v746
      %v748 = vrot.slane %v517, 2
      %v749 = vsel %vm744, %v746, %v748
      %v750 = vrot.slane %v500, 2
      %v751 = vrot.slane %v362, 2
      %v752 = vsel %vm744, %v750, %v751
      %v753 = vrot.slane %v518, 2
      %v754 = vsel %vm744, %v751, %v753
      %v755 = vrot.slane %v501, 2
      %v756 = vrot.slane %v365, 2
      %v757 = vsel %vm744, %v755, %v756
      %v758 = vrot.slane %v519, 2
      %v759 = vsel %vm744, %v756, %v758
      %v760 = vrot.slane %v502, 2
      %v761 = vrot.slane %v368, 2
      %v762 = vsel %vm744, %v760, %v761
      %v763 = vrot.slane %v520, 2
      %v764 = vsel %vm744, %v761, %v763
      %v765 = vrot.slane %v503, 2
      %v766 = vrot.slane %v371, 2
      %v767 = vsel %vm744, %v765, %v766
      %v768 = vrot.slane %v521, 2
      %v769 = vsel %vm744, %v766, %v768
      %v770 = vrot.slane %v504, 2
      %v771 = vrot.slane %v374, 2
      %v772 = vsel %vm744, %v770, %v771
      %v773 = vrot.slane %v522, 2
      %v774 = vsel %vm744, %v771, %v773
      %v775 = vrot.slane %v505, 2
      %v776 = vrot.slane %v377, 2
      %v777 = vsel %vm744, %v775, %v776
      %v778 = vrot.slane %v523, 2
      %v779 = vsel %vm744, %v776, %v778
      %v780 = vrot.slane %v506, 2
      %v781 = vrot.slane %v380, 2
      %v782 = vsel %vm744, %v780, %v781
      %v783 = vrot.slane %v524, 2
      %v784 = vsel %vm744, %v781, %v783
      %v785 = vrot.slane %v507, 2
      %v786 = vrot.slane %v383, 2
      %v787 = vsel %vm744, %v785, %v786
      %v788 = vrot.slane %v525, 2
      %v789 = vsel %vm744, %v786, %v788
      %v790 = vrot.slane %v508, 2
      %v791 = vrot.slane %v386, 2
      %v792 = vsel %vm744, %v790, %v791
      %v793 = vrot.slane %v526, 2
      %v794 = vsel %vm744, %v791, %v793
      %v795 = vrot.slane %v509, 2
      %v796 = vrot.slane %v389, 2
      %v797 = vsel %vm744, %v795, %v796
      %v798 = vrot.slane %v527, 2
      %v799 = vsel %vm744, %v796, %v798
      %v800 = vrot.slane %v510, 2
      %v801 = vrot.slane %v392, 2
      %v802 = vsel %vm744, %v800, %v801
      %v803 = vrot.slane %v528, 2
      %v804 = vsel %vm744, %v801, %v803
      %v805 = vrot.slane %v511, 2
      %v806 = vrot.slane %v395, 2
      %v807 = vsel %vm744, %v805, %v806
      %v808 = vrot.slane %v529, 2
      %v809 = vsel %vm744, %v806, %v808
      %v810 = vrot.slane %v512, 2
      %v811 = vrot.slane %v398, 2
      %v812 = vsel %vm744, %v810, %v811
      %v813 = vrot.slane %v530, 2
      %v814 = vsel %vm744, %v811, %v813
      %v815 = vrot.slane %v513, 2
      %v816 = vrot.slane %v401, 2
      %v817 = vsel %vm744, %v815, %v816
      %v818 = vrot.slane %v531, 2
      %v819 = vsel %vm744, %v816, %v818
      %v820 = vrot.slane %v514, 2
      %v821 = vrot.slane %v404, 2
      %v822 = vsel %vm744, %v820, %v821
      %v823 = vrot.slane %v532, 2
      %v824 = vsel %vm744, %v821, %v823
      %825 = vrot.lane.b32.xlu0 %v747, 16
      %v826 = vpop.permute.xlu0 %825
      %827 = vrot.lane.b32.xlu0 %v749, 16
      %v828 = vpop.permute.xlu0 %827
      %829 = vrot.lane.b32.xlu0 %v752, 16
      %v830 = vpop.permute.xlu0 %829
      %831 = vrot.lane.b32.xlu0 %v754, 16
      %v832 = vpop.permute.xlu0 %831
      %833 = vrot.lane.b32.xlu0 %v757, 16
      %v834 = vpop.permute.xlu0 %833
      %835 = vrot.lane.b32.xlu0 %v759, 16
      %v836 = vpop.permute.xlu0 %835
      %837 = vrot.lane.b32.xlu0 %v762, 16
      %v838 = vpop.permute.xlu0 %837
      %839 = vrot.lane.b32.xlu0 %v764, 16
      %v840 = vpop.permute.xlu0 %839
      %841 = vrot.lane.b32.xlu0 %v767, 16
      %v842 = vpop.permute.xlu0 %841
      %843 = vrot.lane.b32.xlu0 %v769, 16
      %v844 = vpop.permute.xlu0 %843
      %845 = vrot.lane.b32.xlu0 %v772, 16
      %v846 = vpop.permute.xlu0 %845
      %847 = vrot.lane.b32.xlu0 %v774, 16
      %v848 = vpop.permute.xlu0 %847
      %849 = vrot.lane.b32.xlu0 %v777, 16
      %v850 = vpop.permute.xlu0 %849
      %851 = vrot.lane.b32.xlu0 %v779, 16
      %v852 = vpop.permute.xlu0 %851
      %853 = vrot.lane.b32.xlu0 %v782, 16
      %v854 = vpop.permute.xlu0 %853
      %855 = vrot.lane.b32.xlu0 %v784, 16
      %v856 = vpop.permute.xlu0 %855
      %857 = vrot.lane.b32.xlu0 %v787, 16
      %v858 = vpop.permute.xlu0 %857
      %859 = vrot.lane.b32.xlu0 %v789, 16
      %v860 = vpop.permute.xlu0 %859
      %861 = vrot.lane.b32.xlu0 %v792, 16
      %v862 = vpop.permute.xlu0 %861
      %863 = vrot.lane.b32.xlu0 %v794, 16
      %v864 = vpop.permute.xlu0 %863
      %865 = vrot.lane.b32.xlu0 %v797, 16
      %v866 = vpop.permute.xlu0 %865
      %867 = vrot.lane.b32.xlu0 %v799, 16
      %v868 = vpop.permute.xlu0 %867
      %869 = vrot.lane.b32.xlu0 %v802, 16
      %v870 = vpop.permute.xlu0 %869
      %871 = vrot.lane.b32.xlu0 %v804, 16
      %v872 = vpop.permute.xlu0 %871
      %873 = vrot.lane.b32.xlu0 %v807, 16
      %v874 = vpop.permute.xlu0 %873
      %875 = vrot.lane.b32.xlu0 %v809, 16
      %v876 = vpop.permute.xlu0 %875
      %877 = vrot.lane.b32.xlu0 %v812, 16
      %v878 = vpop.permute.xlu0 %877
      %879 = vrot.lane.b32.xlu0 %v814, 16
      %v880 = vpop.permute.xlu0 %879
      %881 = vrot.lane.b32.xlu0 %v817, 16
      %v882 = vpop.permute.xlu0 %881
      %883 = vrot.lane.b32.xlu0 %v819, 16
      %v884 = vpop.permute.xlu0 %883
      %885 = vrot.lane.b32.xlu0 %v822, 16
      %v886 = vpop.permute.xlu0 %885
      %887 = vrot.lane.b32.xlu0 %v824, 16
      %v888 = vpop.permute.xlu0 %887
      %922 = vrot.lane.b32.xlu0 %v500, 24
      %v923 = vpop.permute.xlu0 %922
      %924 = vrot.lane.b32.xlu0 %v362, 24
      %v925 = vpop.permute.xlu0 %924
      %926 = vrot.lane.b32.xlu0 %v501, 24
      %v927 = vpop.permute.xlu0 %926
      %928 = vrot.lane.b32.xlu0 %v365, 24
      %v929 = vpop.permute.xlu0 %928
      %930 = vrot.lane.b32.xlu0 %v502, 24
      %v931 = vpop.permute.xlu0 %930
      %932 = vrot.lane.b32.xlu0 %v368, 24
      %v933 = vpop.permute.xlu0 %932
      %934 = vrot.lane.b32.xlu0 %v503, 24
      %v935 = vpop.permute.xlu0 %934
      %936 = vrot.lane.b32.xlu0 %v371, 24
      %v937 = vpop.permute.xlu0 %936
      %938 = vrot.lane.b32.xlu0 %v504, 24
      %v939 = vpop.permute.xlu0 %938
      %940 = vrot.lane.b32.xlu0 %v374, 24
      %v941 = vpop.permute.xlu0 %940
      %942 = vrot.lane.b32.xlu0 %v505, 24
      %v943 = vpop.permute.xlu0 %942
      %944 = vrot.lane.b32.xlu0 %v377, 24
      %v945 = vpop.permute.xlu0 %944
      %946 = vrot.lane.b32.xlu0 %v506, 24
      %v947 = vpop.permute.xlu0 %946
      %948 = vrot.lane.b32.xlu0 %v380, 24
      %v949 = vpop.permute.xlu0 %948
      %950 = vrot.lane.b32.xlu0 %v507, 24
      %v951 = vpop.permute.xlu0 %950
      %952 = vrot.lane.b32.xlu0 %v383, 24
      %v953 = vpop.permute.xlu0 %952
      %954 = vrot.lane.b32.xlu0 %v508, 24
      %v955 = vpop.permute.xlu0 %954
      %956 = vrot.lane.b32.xlu0 %v386, 24
      %v957 = vpop.permute.xlu0 %956
      %958 = vrot.lane.b32.xlu0 %v509, 24
      %v959 = vpop.permute.xlu0 %958
      %960 = vrot.lane.b32.xlu0 %v389, 24
      %v961 = vpop.permute.xlu0 %960
      %962 = vrot.lane.b32.xlu0 %v510, 24
      %v963 = vpop.permute.xlu0 %962
      %964 = vrot.lane.b32.xlu0 %v392, 24
      %v965 = vpop.permute.xlu0 %964
      %966 = vrot.lane.b32.xlu0 %v511, 24
      %v967 = vpop.permute.xlu0 %966
      %968 = vrot.lane.b32.xlu0 %v395, 24
      %v969 = vpop.permute.xlu0 %968
      %970 = vrot.lane.b32.xlu0 %v512, 24
      %v971 = vpop.permute.xlu0 %970
      %972 = vrot.lane.b32.xlu0 %v398, 24
      %v973 = vpop.permute.xlu0 %972
      %974 = vrot.lane.b32.xlu0 %v513, 24
      %v975 = vpop.permute.xlu0 %974
      %976 = vrot.lane.b32.xlu0 %v401, 24
      %v977 = vpop.permute.xlu0 %976
      %978 = vrot.lane.b32.xlu0 %v514, 24
      %v979 = vpop.permute.xlu0 %978
      %980 = vrot.lane.b32.xlu0 %v404, 24
      %v981 = vpop.permute.xlu0 %980
      %982 = vrot.lane.b32.xlu0 %v515, 24
      %v983 = vpop.permute.xlu0 %982
      %984 = vrot.lane.b32.xlu0 %v407, 24
      %v985 = vpop.permute.xlu0 %984
      %v1019 = vrot.slane %v515, 1
      %v1020 = vrot.slane %v407, 1
      %v1021 = vsel %vm567, %v1019, %v1020
      %v1022 = vrot.slane %v533, 1
      %v1023 = vsel %vm567, %v1020, %v1022
      %1024 = vrot.lane.b32.xlu0 %v575, 32
      %v1025 = vpop.permute.xlu0 %1024
      %1026 = vrot.lane.b32.xlu0 %v577, 32
      %v1027 = vpop.permute.xlu0 %1026
      %1028 = vrot.lane.b32.xlu0 %v580, 32
      %v1029 = vpop.permute.xlu0 %1028
      %1030 = vrot.lane.b32.xlu0 %v582, 32
      %v1031 = vpop.permute.xlu0 %1030
      %1032 = vrot.lane.b32.xlu0 %v585, 32
      %v1033 = vpop.permute.xlu0 %1032
      %1034 = vrot.lane.b32.xlu0 %v587, 32
      %v1035 = vpop.permute.xlu0 %1034
      %1036 = vrot.lane.b32.xlu0 %v590, 32
      %v1037 = vpop.permute.xlu0 %1036
      %1038 = vrot.lane.b32.xlu0 %v592, 32
      %v1039 = vpop.permute.xlu0 %1038
      %1040 = vrot.lane.b32.xlu0 %v595, 32
      %v1041 = vpop.permute.xlu0 %1040
      %1042 = vrot.lane.b32.xlu0 %v597, 32
      %v1043 = vpop.permute.xlu0 %1042
      %1044 = vrot.lane.b32.xlu0 %v600, 32
      %v1045 = vpop.permute.xlu0 %1044
      %1046 = vrot.lane.b32.xlu0 %v602, 32
      %v1047 = vpop.permute.xlu0 %1046
      %1048 = vrot.lane.b32.xlu0 %v605, 32
      %v1049 = vpop.permute.xlu0 %1048
      %1050 = vrot.lane.b32.xlu0 %v607, 32
      %v1051 = vpop.permute.xlu0 %1050
      %1052 = vrot.lane.b32.xlu0 %v610, 32
      %v1053 = vpop.permute.xlu0 %1052
      %1054 = vrot.lane.b32.xlu0 %v612, 32
      %v1055 = vpop.permute.xlu0 %1054
      %1056 = vrot.lane.b32.xlu0 %v615, 32
      %v1057 = vpop.permute.xlu0 %1056
      %1058 = vrot.lane.b32.xlu0 %v617, 32
      %v1059 = vpop.permute.xlu0 %1058
      %1060 = vrot.lane.b32.xlu0 %v620, 32
      %v1061 = vpop.permute.xlu0 %1060
      %1062 = vrot.lane.b32.xlu0 %v622, 32
      %v1063 = vpop.permute.xlu0 %1062
      %1064 = vrot.lane.b32.xlu0 %v625, 32
      %v1065 = vpop.permute.xlu0 %1064
      %1066 = vrot.lane.b32.xlu0 %v627, 32
      %v1067 = vpop.permute.xlu0 %1066
      %1068 = vrot.lane.b32.xlu0 %v630, 32
      %v1069 = vpop.permute.xlu0 %1068
      %1070 = vrot.lane.b32.xlu0 %v632, 32
      %v1071 = vpop.permute.xlu0 %1070
      %1072 = vrot.lane.b32.xlu0 %v635, 32
      %v1073 = vpop.permute.xlu0 %1072
      %1074 = vrot.lane.b32.xlu0 %v637, 32
      %v1075 = vpop.permute.xlu0 %1074
      %1076 = vrot.lane.b32.xlu0 %v640, 32
      %v1077 = vpop.permute.xlu0 %1076
      %1078 = vrot.lane.b32.xlu0 %v642, 32
      %v1079 = vpop.permute.xlu0 %1078
      %1080 = vrot.lane.b32.xlu0 %v645, 32
      %v1081 = vpop.permute.xlu0 %1080
      %1082 = vrot.lane.b32.xlu0 %v647, 32
      %v1083 = vpop.permute.xlu0 %1082
      %1084 = vrot.lane.b32.xlu0 %v1021, 32
      %v1085 = vpop.permute.xlu0 %1084
      %1086 = vrot.lane.b32.xlu0 %v1023, 32
      %v1087 = vpop.permute.xlu0 %1086
      %v1120 = vrot.slane %v515, 2
      %v1121 = vrot.slane %v407, 2
      %v1122 = vsel %vm744, %v1120, %v1121
      %v1123 = vrot.slane %v533, 2
      %v1124 = vsel %vm744, %v1121, %v1123
      %1125 = vrot.lane.b32.xlu0 %v752, 40
      %v1126 = vpop.permute.xlu0 %1125
      %1127 = vrot.lane.b32.xlu0 %v754, 40
      %v1128 = vpop.permute.xlu0 %1127
      %1129 = vrot.lane.b32.xlu0 %v757, 40
      %v1130 = vpop.permute.xlu0 %1129
      %1131 = vrot.lane.b32.xlu0 %v759, 40
      %v1132 = vpop.permute.xlu0 %1131
      %1133 = vrot.lane.b32.xlu0 %v762, 40
      %v1134 = vpop.permute.xlu0 %1133
      %1135 = vrot.lane.b32.xlu0 %v764, 40
      %v1136 = vpop.permute.xlu0 %1135
      %1137 = vrot.lane.b32.xlu0 %v767, 40
      %v1138 = vpop.permute.xlu0 %1137
      %1139 = vrot.lane.b32.xlu0 %v769, 40
      %v1140 = vpop.permute.xlu0 %1139
      %1141 = vrot.lane.b32.xlu0 %v772, 40
      %v1142 = vpop.permute.xlu0 %1141
      %1143 = vrot.lane.b32.xlu0 %v774, 40
      %v1144 = vpop.permute.xlu0 %1143
      %1145 = vrot.lane.b32.xlu0 %v777, 40
      %v1146 = vpop.permute.xlu0 %1145
      %1147 = vrot.lane.b32.xlu0 %v779, 40
      %v1148 = vpop.permute.xlu0 %1147
      %1149 = vrot.lane.b32.xlu0 %v782, 40
      %v1150 = vpop.permute.xlu0 %1149
      %1151 = vrot.lane.b32.xlu0 %v784, 40
      %v1152 = vpop.permute.xlu0 %1151
      %1153 = vrot.lane.b32.xlu0 %v787, 40
      %v1154 = vpop.permute.xlu0 %1153
      %1155 = vrot.lane.b32.xlu0 %v789, 40
      %v1156 = vpop.permute.xlu0 %1155
      %1157 = vrot.lane.b32.xlu0 %v792, 40
      %v1158 = vpop.permute.xlu0 %1157
      %1159 = vrot.lane.b32.xlu0 %v794, 40
      %v1160 = vpop.permute.xlu0 %1159
      %1161 = vrot.lane.b32.xlu0 %v797, 40
      %v1162 = vpop.permute.xlu0 %1161
      %1163 = vrot.lane.b32.xlu0 %v799, 40
      %v1164 = vpop.permute.xlu0 %1163
      %1165 = vrot.lane.b32.xlu0 %v802, 40
      %v1166 = vpop.permute.xlu0 %1165
      %1167 = vrot.lane.b32.xlu0 %v804, 40
      %v1168 = vpop.permute.xlu0 %1167
      %1169 = vrot.lane.b32.xlu0 %v807, 40
      %v1170 = vpop.permute.xlu0 %1169
      %1171 = vrot.lane.b32.xlu0 %v809, 40
      %v1172 = vpop.permute.xlu0 %1171
      %1173 = vrot.lane.b32.xlu0 %v812, 40
      %v1174 = vpop.permute.xlu0 %1173
      %1175 = vrot.lane.b32.xlu0 %v814, 40
      %v1176 = vpop.permute.xlu0 %1175
      %1177 = vrot.lane.b32.xlu0 %v817, 40
      %v1178 = vpop.permute.xlu0 %1177
      %1179 = vrot.lane.b32.xlu0 %v819, 40
      %v1180 = vpop.permute.xlu0 %1179
      %1181 = vrot.lane.b32.xlu0 %v822, 40
      %v1182 = vpop.permute.xlu0 %1181
      %1183 = vrot.lane.b32.xlu0 %v824, 40
      %v1184 = vpop.permute.xlu0 %1183
      %1185 = vrot.lane.b32.xlu0 %v1122, 40
      %v1186 = vpop.permute.xlu0 %1185
      %1187 = vrot.lane.b32.xlu0 %v1124, 40
      %v1188 = vpop.permute.xlu0 %1187
      %1222 = vrot.lane.b32.xlu0 %v501, 48
      %v1223 = vpop.permute.xlu0 %1222
      %1224 = vrot.lane.b32.xlu0 %v365, 48
      %v1225 = vpop.permute.xlu0 %1224
      %1226 = vrot.lane.b32.xlu0 %v502, 48
      %v1227 = vpop.permute.xlu0 %1226
      %1228 = vrot.lane.b32.xlu0 %v368, 48
      %v1229 = vpop.permute.xlu0 %1228
      %1230 = vrot.lane.b32.xlu0 %v503, 48
      %v1231 = vpop.permute.xlu0 %1230
      %1232 = vrot.lane.b32.xlu0 %v371, 48
      %v1233 = vpop.permute.xlu0 %1232
      %1234 = vrot.lane.b32.xlu0 %v504, 48
      %v1235 = vpop.permute.xlu0 %1234
      %1236 = vrot.lane.b32.xlu0 %v374, 48
      %v1237 = vpop.permute.xlu0 %1236
      %1238 = vrot.lane.b32.xlu0 %v505, 48
      %v1239 = vpop.permute.xlu0 %1238
      %1240 = vrot.lane.b32.xlu0 %v377, 48
      %v1241 = vpop.permute.xlu0 %1240
      %1242 = vrot.lane.b32.xlu0 %v506, 48
      %v1243 = vpop.permute.xlu0 %1242
      %1244 = vrot.lane.b32.xlu0 %v380, 48
      %v1245 = vpop.permute.xlu0 %1244
      %1246 = vrot.lane.b32.xlu0 %v507, 48
      %v1247 = vpop.permute.xlu0 %1246
      %1248 = vrot.lane.b32.xlu0 %v383, 48
      %v1249 = vpop.permute.xlu0 %1248
      %1250 = vrot.lane.b32.xlu0 %v508, 48
      %v1251 = vpop.permute.xlu0 %1250
      %1252 = vrot.lane.b32.xlu0 %v386, 48
      %v1253 = vpop.permute.xlu0 %1252
      %1254 = vrot.lane.b32.xlu0 %v509, 48
      %v1255 = vpop.permute.xlu0 %1254
      %1256 = vrot.lane.b32.xlu0 %v389, 48
      %v1257 = vpop.permute.xlu0 %1256
      %1258 = vrot.lane.b32.xlu0 %v510, 48
      %v1259 = vpop.permute.xlu0 %1258
      %1260 = vrot.lane.b32.xlu0 %v392, 48
      %v1261 = vpop.permute.xlu0 %1260
      %1262 = vrot.lane.b32.xlu0 %v511, 48
      %v1263 = vpop.permute.xlu0 %1262
      %1264 = vrot.lane.b32.xlu0 %v395, 48
      %v1265 = vpop.permute.xlu0 %1264
      %1266 = vrot.lane.b32.xlu0 %v512, 48
      %v1267 = vpop.permute.xlu0 %1266
      %1268 = vrot.lane.b32.xlu0 %v398, 48
      %v1269 = vpop.permute.xlu0 %1268
      %1270 = vrot.lane.b32.xlu0 %v513, 48
      %v1271 = vpop.permute.xlu0 %1270
      %1272 = vrot.lane.b32.xlu0 %v401, 48
      %v1273 = vpop.permute.xlu0 %1272
      %1274 = vrot.lane.b32.xlu0 %v514, 48
      %v1275 = vpop.permute.xlu0 %1274
      %1276 = vrot.lane.b32.xlu0 %v404, 48
      %v1277 = vpop.permute.xlu0 %1276
      %1278 = vrot.lane.b32.xlu0 %v515, 48
      %v1279 = vpop.permute.xlu0 %1278
      %1280 = vrot.lane.b32.xlu0 %v407, 48
      %v1281 = vpop.permute.xlu0 %1280
      %1282 = vrot.lane.b32.xlu0 %v516, 48
      %v1283 = vpop.permute.xlu0 %1282
      %1284 = vrot.lane.b32.xlu0 %v410, 48
      %v1285 = vpop.permute.xlu0 %1284
      %v1319 = vrot.slane %v516, 1
      %v1320 = vrot.slane %v410, 1
      %v1321 = vsel %vm567, %v1319, %v1320
      %v1322 = vrot.slane %v534, 1
      %v1323 = vsel %vm567, %v1320, %v1322
      %1324 = vrot.lane.b32.xlu0 %v580, 56
      %v1325 = vpop.permute.xlu0 %1324
      %1326 = vrot.lane.b32.xlu0 %v582, 56
      %v1327 = vpop.permute.xlu0 %1326
      %1328 = vrot.lane.b32.xlu0 %v585, 56
      %v1329 = vpop.permute.xlu0 %1328
      %1330 = vrot.lane.b32.xlu0 %v587, 56
      %v1331 = vpop.permute.xlu0 %1330
      %1332 = vrot.lane.b32.xlu0 %v590, 56
      %v1333 = vpop.permute.xlu0 %1332
      %1334 = vrot.lane.b32.xlu0 %v592, 56
      %v1335 = vpop.permute.xlu0 %1334
      %1336 = vrot.lane.b32.xlu0 %v595, 56
      %v1337 = vpop.permute.xlu0 %1336
      %1338 = vrot.lane.b32.xlu0 %v597, 56
      %v1339 = vpop.permute.xlu0 %1338
      %1340 = vrot.lane.b32.xlu0 %v600, 56
      %v1341 = vpop.permute.xlu0 %1340
      %1342 = vrot.lane.b32.xlu0 %v602, 56
      %v1343 = vpop.permute.xlu0 %1342
      %1344 = vrot.lane.b32.xlu0 %v605, 56
      %v1345 = vpop.permute.xlu0 %1344
      %1346 = vrot.lane.b32.xlu0 %v607, 56
      %v1347 = vpop.permute.xlu0 %1346
      %1348 = vrot.lane.b32.xlu0 %v610, 56
      %v1349 = vpop.permute.xlu0 %1348
      %1350 = vrot.lane.b32.xlu0 %v612, 56
      %v1351 = vpop.permute.xlu0 %1350
      %1352 = vrot.lane.b32.xlu0 %v615, 56
      %v1353 = vpop.permute.xlu0 %1352
      %1354 = vrot.lane.b32.xlu0 %v617, 56
      %v1355 = vpop.permute.xlu0 %1354
      %1356 = vrot.lane.b32.xlu0 %v620, 56
      %v1357 = vpop.permute.xlu0 %1356
      %1358 = vrot.lane.b32.xlu0 %v622, 56
      %v1359 = vpop.permute.xlu0 %1358
      %1360 = vrot.lane.b32.xlu0 %v625, 56
      %v1361 = vpop.permute.xlu0 %1360
      %1362 = vrot.lane.b32.xlu0 %v627, 56
      %v1363 = vpop.permute.xlu0 %1362
      %1364 = vrot.lane.b32.xlu0 %v630, 56
      %v1365 = vpop.permute.xlu0 %1364
      %1366 = vrot.lane.b32.xlu0 %v632, 56
      %v1367 = vpop.permute.xlu0 %1366
      %1368 = vrot.lane.b32.xlu0 %v635, 56
      %v1369 = vpop.permute.xlu0 %1368
      %1370 = vrot.lane.b32.xlu0 %v637, 56
      %v1371 = vpop.permute.xlu0 %1370
      %1372 = vrot.lane.b32.xlu0 %v640, 56
      %v1373 = vpop.permute.xlu0 %1372
      %1374 = vrot.lane.b32.xlu0 %v642, 56
      %v1375 = vpop.permute.xlu0 %1374
      %1376 = vrot.lane.b32.xlu0 %v645, 56
      %v1377 = vpop.permute.xlu0 %1376
      %1378 = vrot.lane.b32.xlu0 %v647, 56
      %v1379 = vpop.permute.xlu0 %1378
      %1380 = vrot.lane.b32.xlu0 %v1021, 56
      %v1381 = vpop.permute.xlu0 %1380
      %1382 = vrot.lane.b32.xlu0 %v1023, 56
      %v1383 = vpop.permute.xlu0 %1382
      %1384 = vrot.lane.b32.xlu0 %v1321, 56
      %v1385 = vpop.permute.xlu0 %1384
      %1386 = vrot.lane.b32.xlu0 %v1323, 56
      %v1387 = vpop.permute.xlu0 %1386
      %v1420 = vrot.slane %v516, 2
      %v1421 = vrot.slane %v410, 2
      %v1422 = vsel %vm744, %v1420, %v1421
      %v1423 = vrot.slane %v534, 2
      %v1424 = vsel %vm744, %v1421, %v1423
      %1425 = vrot.lane.b32.xlu0 %v757, 64
      %v1426 = vpop.permute.xlu0 %1425
      %1427 = vrot.lane.b32.xlu0 %v759, 64
      %v1428 = vpop.permute.xlu0 %1427
      %1429 = vrot.lane.b32.xlu0 %v762, 64
      %v1430 = vpop.permute.xlu0 %1429
      %1431 = vrot.lane.b32.xlu0 %v764, 64
      %v1432 = vpop.permute.xlu0 %1431
      %1433 = vrot.lane.b32.xlu0 %v767, 64
      %v1434 = vpop.permute.xlu0 %1433
      %1435 = vrot.lane.b32.xlu0 %v769, 64
      %v1436 = vpop.permute.xlu0 %1435
      %1437 = vrot.lane.b32.xlu0 %v772, 64
      %v1438 = vpop.permute.xlu0 %1437
      %1439 = vrot.lane.b32.xlu0 %v774, 64
      %v1440 = vpop.permute.xlu0 %1439
      %1441 = vrot.lane.b32.xlu0 %v777, 64
      %v1442 = vpop.permute.xlu0 %1441
      %1443 = vrot.lane.b32.xlu0 %v779, 64
      %v1444 = vpop.permute.xlu0 %1443
      %1445 = vrot.lane.b32.xlu0 %v782, 64
      %v1446 = vpop.permute.xlu0 %1445
      %1447 = vrot.lane.b32.xlu0 %v784, 64
      %v1448 = vpop.permute.xlu0 %1447
      %1449 = vrot.lane.b32.xlu0 %v787, 64
      %v1450 = vpop.permute.xlu0 %1449
      %1451 = vrot.lane.b32.xlu0 %v789, 64
      %v1452 = vpop.permute.xlu0 %1451
      %1453 = vrot.lane.b32.xlu0 %v792, 64
      %v1454 = vpop.permute.xlu0 %1453
      %1455 = vrot.lane.b32.xlu0 %v794, 64
      %v1456 = vpop.permute.xlu0 %1455
      %1457 = vrot.lane.b32.xlu0 %v797, 64
      %v1458 = vpop.permute.xlu0 %1457
      %1459 = vrot.lane.b32.xlu0 %v799, 64
      %v1460 = vpop.permute.xlu0 %1459
      %1461 = vrot.lane.b32.xlu0 %v802, 64
      %v1462 = vpop.permute.xlu0 %1461
      %1463 = vrot.lane.b32.xlu0 %v804, 64
      %v1464 = vpop.permute.xlu0 %1463
      %1465 = vrot.lane.b32.xlu0 %v807, 64
      %v1466 = vpop.permute.xlu0 %1465
      %1467 = vrot.lane.b32.xlu0 %v809, 64
      %v1468 = vpop.permute.xlu0 %1467
      %1469 = vrot.lane.b32.xlu0 %v812, 64
      %v1470 = vpop.permute.xlu0 %1469
      %1471 = vrot.lane.b32.xlu0 %v814, 64
      %v1472 = vpop.permute.xlu0 %1471
      %1473 = vrot.lane.b32.xlu0 %v817, 64
      %v1474 = vpop.permute.xlu0 %1473
      %1475 = vrot.lane.b32.xlu0 %v819, 64
      %v1476 = vpop.permute.xlu0 %1475
      %1477 = vrot.lane.b32.xlu0 %v822, 64
      %v1478 = vpop.permute.xlu0 %1477
      %1479 = vrot.lane.b32.xlu0 %v824, 64
      %v1480 = vpop.permute.xlu0 %1479
      %1481 = vrot.lane.b32.xlu0 %v1122, 64
      %v1482 = vpop.permute.xlu0 %1481
      %1483 = vrot.lane.b32.xlu0 %v1124, 64
      %v1484 = vpop.permute.xlu0 %1483
      %1485 = vrot.lane.b32.xlu0 %v1422, 64
      %v1486 = vpop.permute.xlu0 %1485
      %1487 = vrot.lane.b32.xlu0 %v1424, 64
      %v1488 = vpop.permute.xlu0 %1487
      %v1521 = vsel %vm204, %v499, %v649
      %v1522 = vsel %vm204, %v359, %v651
      %v1523 = vsel %vm204, %v500, %v653
      %v1524 = vsel %vm204, %v362, %v655
      %v1525 = vsel %vm204, %v501, %v657
      %v1526 = vsel %vm204, %v365, %v659
      %v1527 = vsel %vm204, %v502, %v661
      %v1528 = vsel %vm204, %v368, %v663
      %v1529 = vsel %vm204, %v503, %v665
      %v1530 = vsel %vm204, %v371, %v667
      %v1531 = vsel %vm204, %v504, %v669
      %v1532 = vsel %vm204, %v374, %v671
      %v1533 = vsel %vm204, %v505, %v673
      %v1534 = vsel %vm204, %v377, %v675
      %v1535 = vsel %vm204, %v506, %v677
      %v1536 = vsel %vm204, %v380, %v679
      %v1537 = vsel %vm204, %v507, %v681
      %v1538 = vsel %vm204, %v383, %v683
      %v1539 = vsel %vm204, %v508, %v685
      %v1540 = vsel %vm204, %v386, %v687
      %v1541 = vsel %vm204, %v509, %v689
      %v1542 = vsel %vm204, %v389, %v691
      %v1543 = vsel %vm204, %v510, %v693
      %v1544 = vsel %vm204, %v392, %v695
      %v1545 = vsel %vm204, %v511, %v697
      %v1546 = vsel %vm204, %v395, %v699
      %v1547 = vsel %vm204, %v512, %v701
      %v1548 = vsel %vm204, %v398, %v703
      %v1549 = vsel %vm204, %v513, %v705
      %v1550 = vsel %vm204, %v401, %v707
      %v1551 = vsel %vm204, %v514, %v709
      %v1552 = vsel %vm204, %v404, %v711
      %vm1553 = vcmask 130048
      %v1554 = vsel %vm1553, %v1521, %v826
      %v1555 = vsel %vm1553, %v1522, %v828
      %v1556 = vsel %vm1553, %v1523, %v830
      %v1557 = vsel %vm1553, %v1524, %v832
      %v1558 = vsel %vm1553, %v1525, %v834
      %v1559 = vsel %vm1553, %v1526, %v836
      %v1560 = vsel %vm1553, %v1527, %v838
      %v1561 = vsel %vm1553, %v1528, %v840
      %v1562 = vsel %vm1553, %v1529, %v842
      %v1563 = vsel %vm1553, %v1530, %v844
      %v1564 = vsel %vm1553, %v1531, %v846
      %v1565 = vsel %vm1553, %v1532, %v848
      %v1566 = vsel %vm1553, %v1533, %v850
      %v1567 = vsel %vm1553, %v1534, %v852
      %v1568 = vsel %vm1553, %v1535, %v854
      %v1569 = vsel %vm1553, %v1536, %v856
      %v1570 = vsel %vm1553, %v1537, %v858
      %v1571 = vsel %vm1553, %v1538, %v860
      %v1572 = vsel %vm1553, %v1539, %v862
      %v1573 = vsel %vm1553, %v1540, %v864
      %v1574 = vsel %vm1553, %v1541, %v866
      %v1575 = vsel %vm1553, %v1542, %v868
      %v1576 = vsel %vm1553, %v1543, %v870
      %v1577 = vsel %vm1553, %v1544, %v872
      %v1578 = vsel %vm1553, %v1545, %v874
      %v1579 = vsel %vm1553, %v1546, %v876
      %v1580 = vsel %vm1553, %v1547, %v878
      %v1581 = vsel %vm1553, %v1548, %v880
      %v1582 = vsel %vm1553, %v1549, %v882
      %v1583 = vsel %vm1553, %v1550, %v884
      %v1584 = vsel %vm1553, %v1551, %v886
      %v1585 = vsel %vm1553, %v1552, %v888
      %vm1586 = vcmask 195584
      %v1587 = vsel %vm1586, %v1554, %v923
      %v1588 = vsel %vm1586, %v1555, %v925
      %v1589 = vsel %vm1586, %v1556, %v927
      %v1590 = vsel %vm1586, %v1557, %v929
      %v1591 = vsel %vm1586, %v1558, %v931
      %v1592 = vsel %vm1586, %v1559, %v933
      %v1593 = vsel %vm1586, %v1560, %v935
      %v1594 = vsel %vm1586, %v1561, %v937
      %v1595 = vsel %vm1586, %v1562, %v939
      %v1596 = vsel %vm1586, %v1563, %v941
      %v1597 = vsel %vm1586, %v1564, %v943
      %v1598 = vsel %vm1586, %v1565, %v945
      %v1599 = vsel %vm1586, %v1566, %v947
      %v1600 = vsel %vm1586, %v1567, %v949
      %v1601 = vsel %vm1586, %v1568, %v951
      %v1602 = vsel %vm1586, %v1569, %v953
      %v1603 = vsel %vm1586, %v1570, %v955
      %v1604 = vsel %vm1586, %v1571, %v957
      %v1605 = vsel %vm1586, %v1572, %v959
      %v1606 = vsel %vm1586, %v1573, %v961
      %v1607 = vsel %vm1586, %v1574, %v963
      %v1608 = vsel %vm1586, %v1575, %v965
      %v1609 = vsel %vm1586, %v1576, %v967
      %v1610 = vsel %vm1586, %v1577, %v969
      %v1611 = vsel %vm1586, %v1578, %v971
      %v1612 = vsel %vm1586, %v1579, %v973
      %v1613 = vsel %vm1586, %v1580, %v975
      %v1614 = vsel %vm1586, %v1581, %v977
      %v1615 = vsel %vm1586, %v1582, %v979
      %v1616 = vsel %vm1586, %v1583, %v981
      %v1617 = vsel %vm1586, %v1584, %v983
      %v1618 = vsel %vm1586, %v1585, %v985
      %vm1619 = vcmask 261120
      %v1620 = vsel %vm1619, %v1587, %v1025
      %v1621 = vsel %vm1619, %v1588, %v1027
      %v1622 = vsel %vm1619, %v1589, %v1029
      %v1623 = vsel %vm1619, %v1590, %v1031
      %v1624 = vsel %vm1619, %v1591, %v1033
      %v1625 = vsel %vm1619, %v1592, %v1035
      %v1626 = vsel %vm1619, %v1593, %v1037
      %v1627 = vsel %vm1619, %v1594, %v1039
      %v1628 = vsel %vm1619, %v1595, %v1041
      %v1629 = vsel %vm1619, %v1596, %v1043
      %v1630 = vsel %vm1619, %v1597, %v1045
      %v1631 = vsel %vm1619, %v1598, %v1047
      %v1632 = vsel %vm1619, %v1599, %v1049
      %v1633 = vsel %vm1619, %v1600, %v1051
      %v1634 = vsel %vm1619, %v1601, %v1053
      %v1635 = vsel %vm1619, %v1602, %v1055
      %v1636 = vsel %vm1619, %v1603, %v1057
      %v1637 = vsel %vm1619, %v1604, %v1059
      %v1638 = vsel %vm1619, %v1605, %v1061
      %v1639 = vsel %vm1619, %v1606, %v1063
      %v1640 = vsel %vm1619, %v1607, %v1065
      %v1641 = vsel %vm1619, %v1608, %v1067
      %v1642 = vsel %vm1619, %v1609, %v1069
      %v1643 = vsel %vm1619, %v1610, %v1071
      %v1644 = vsel %vm1619, %v1611, %v1073
      %v1645 = vsel %vm1619, %v1612, %v1075
      %v1646 = vsel %vm1619, %v1613, %v1077
      %v1647 = vsel %vm1619, %v1614, %v1079
      %v1648 = vsel %vm1619, %v1615, %v1081
      %v1649 = vsel %vm1619, %v1616, %v1083
      %v1650 = vsel %vm1619, %v1617, %v1085
      %v1651 = vsel %vm1619, %v1618, %v1087
      %vm1652 = vcmask 326656
      %v1653 = vsel %vm1652, %v1620, %v1126
      %v1654 = vsel %vm1652, %v1621, %v1128
      %v1655 = vsel %vm1652, %v1622, %v1130
      %v1656 = vsel %vm1652, %v1623, %v1132
      %v1657 = vsel %vm1652, %v1624, %v1134
      %v1658 = vsel %vm1652, %v1625, %v1136
      %v1659 = vsel %vm1652, %v1626, %v1138
      %v1660 = vsel %vm1652, %v1627, %v1140
      %v1661 = vsel %vm1652, %v1628, %v1142
      %v1662 = vsel %vm1652, %v1629, %v1144
      %v1663 = vsel %vm1652, %v1630, %v1146
      %v1664 = vsel %vm1652, %v1631, %v1148
      %v1665 = vsel %vm1652, %v1632, %v1150
      %v1666 = vsel %vm1652, %v1633, %v1152
      %v1667 = vsel %vm1652, %v1634, %v1154
      %v1668 = vsel %vm1652, %v1635, %v1156
      %v1669 = vsel %vm1652, %v1636, %v1158
      %v1670 = vsel %vm1652, %v1637, %v1160
      %v1671 = vsel %vm1652, %v1638, %v1162
      %v1672 = vsel %vm1652, %v1639, %v1164
      %v1673 = vsel %vm1652, %v1640, %v1166
      %v1674 = vsel %vm1652, %v1641, %v1168
      %v1675 = vsel %vm1652, %v1642, %v1170
      %v1676 = vsel %vm1652, %v1643, %v1172
      %v1677 = vsel %vm1652, %v1644, %v1174
      %v1678 = vsel %vm1652, %v1645, %v1176
      %v1679 = vsel %vm1652, %v1646, %v1178
      %v1680 = vsel %vm1652, %v1647, %v1180
      %v1681 = vsel %vm1652, %v1648, %v1182
      %v1682 = vsel %vm1652, %v1649, %v1184
      %v1683 = vsel %vm1652, %v1650, %v1186
      %v1684 = vsel %vm1652, %v1651, %v1188
      %vm1685 = vcmask 392192
      %v1686 = vsel %vm1685, %v1653, %v1223
      %v1687 = vsel %vm1685, %v1654, %v1225
      %v1688 = vsel %vm1685, %v1655, %v1227
      %v1689 = vsel %vm1685, %v1656, %v1229
      %v1690 = vsel %vm1685, %v1657, %v1231
      %v1691 = vsel %vm1685, %v1658, %v1233
      %v1692 = vsel %vm1685, %v1659, %v1235
      %v1693 = vsel %vm1685, %v1660, %v1237
      %v1694 = vsel %vm1685, %v1661, %v1239
      %v1695 = vsel %vm1685, %v1662, %v1241
      %v1696 = vsel %vm1685, %v1663, %v1243
      %v1697 = vsel %vm1685, %v1664, %v1245
      %v1698 = vsel %vm1685, %v1665, %v1247
      %v1699 = vsel %vm1685, %v1666, %v1249
      %v1700 = vsel %vm1685, %v1667, %v1251
      %v1701 = vsel %vm1685, %v1668, %v1253
      %v1702 = vsel %vm1685, %v1669, %v1255
      %v1703 = vsel %vm1685, %v1670, %v1257
      %v1704 = vsel %vm1685, %v1671, %v1259
      %v1705 = vsel %vm1685, %v1672, %v1261
      %v1706 = vsel %vm1685, %v1673, %v1263
      %v1707 = vsel %vm1685, %v1674, %v1265
      %v1708 = vsel %vm1685, %v1675, %v1267
      %v1709 = vsel %vm1685, %v1676, %v1269
      %v1710 = vsel %vm1685, %v1677, %v1271
      %v1711 = vsel %vm1685, %v1678, %v1273
      %v1712 = vsel %vm1685, %v1679, %v1275
      %v1713 = vsel %vm1685, %v1680, %v1277
      %v1714 = vsel %vm1685, %v1681, %v1279
      %v1715 = vsel %vm1685, %v1682, %v1281
      %v1716 = vsel %vm1685, %v1683, %v1283
      %v1717 = vsel %vm1685, %v1684, %v1285
      %vm1718 = vcmask 457728
      %v1719 = vsel %vm1718, %v1686, %v1325
      %v1720 = vsel %vm1718, %v1687, %v1327
      %v1721 = vsel %vm1718, %v1688, %v1329
      %v1722 = vsel %vm1718, %v1689, %v1331
      %v1723 = vsel %vm1718, %v1690, %v1333
      %v1724 = vsel %vm1718, %v1691, %v1335
      %v1725 = vsel %vm1718, %v1692, %v1337
      %v1726 = vsel %vm1718, %v1693, %v1339
      %v1727 = vsel %vm1718, %v1694, %v1341
      %v1728 = vsel %vm1718, %v1695, %v1343
      %v1729 = vsel %vm1718, %v1696, %v1345
      %v1730 = vsel %vm1718, %v1697, %v1347
      %v1731 = vsel %vm1718, %v1698, %v1349
      %v1732 = vsel %vm1718, %v1699, %v1351
      %v1733 = vsel %vm1718, %v1700, %v1353
      %v1734 = vsel %vm1718, %v1701, %v1355
      %v1735 = vsel %vm1718, %v1702, %v1357
      %v1736 = vsel %vm1718, %v1703, %v1359
      %v1737 = vsel %vm1718, %v1704, %v1361
      %v1738 = vsel %vm1718, %v1705, %v1363
      %v1739 = vsel %vm1718, %v1706, %v1365
      %v1740 = vsel %vm1718, %v1707, %v1367
      %v1741 = vsel %vm1718, %v1708, %v1369
      %v1742 = vsel %vm1718, %v1709, %v1371
      %v1743 = vsel %vm1718, %v1710, %v1373
      %v1744 = vsel %vm1718, %v1711, %v1375
      %v1745 = vsel %vm1718, %v1712, %v1377
      %v1746 = vsel %vm1718, %v1713, %v1379
      %v1747 = vsel %vm1718, %v1714, %v1381
      %v1748 = vsel %vm1718, %v1715, %v1383
      %v1749 = vsel %vm1718, %v1716, %v1385
      %v1750 = vsel %vm1718, %v1717, %v1387
      %vm1751 = vcmask 523264
      %v1752 = vsel %vm1751, %v1719, %v1426
      %v1753 = vsel %vm1751, %v1720, %v1428
      %v1754 = vsel %vm1751, %v1721, %v1430
      %v1755 = vsel %vm1751, %v1722, %v1432
      %v1756 = vsel %vm1751, %v1723, %v1434
      %v1757 = vsel %vm1751, %v1724, %v1436
      %v1758 = vsel %vm1751, %v1725, %v1438
      %v1759 = vsel %vm1751, %v1726, %v1440
      %v1760 = vsel %vm1751, %v1727, %v1442
      %v1761 = vsel %vm1751, %v1728, %v1444
      %v1762 = vsel %vm1751, %v1729, %v1446
      %v1763 = vsel %vm1751, %v1730, %v1448
      %v1764 = vsel %vm1751, %v1731, %v1450
      %v1765 = vsel %vm1751, %v1732, %v1452
      %v1766 = vsel %vm1751, %v1733, %v1454
      %v1767 = vsel %vm1751, %v1734, %v1456
      %v1768 = vsel %vm1751, %v1735, %v1458
      %v1769 = vsel %vm1751, %v1736, %v1460
      %v1770 = vsel %vm1751, %v1737, %v1462
      %v1771 = vsel %vm1751, %v1738, %v1464
      %v1772 = vsel %vm1751, %v1739, %v1466
      %v1773 = vsel %vm1751, %v1740, %v1468
      %v1774 = vsel %vm1751, %v1741, %v1470
      %v1775 = vsel %vm1751, %v1742, %v1472
      %v1776 = vsel %vm1751, %v1743, %v1474
      %v1777 = vsel %vm1751, %v1744, %v1476
      %v1778 = vsel %vm1751, %v1745, %v1478
      %v1779 = vsel %vm1751, %v1746, %v1480
      %v1780 = vsel %vm1751, %v1747, %v1482
      %v1781 = vsel %vm1751, %v1748, %v1484
      %v1782 = vsel %vm1751, %v1749, %v1486
      %v1783 = vsel %vm1751, %v1750, %v1488
      %v1784 = vld [vmem:[%s1] sm:$0xff]
      %v1785 = vld [vmem:[%s1 + $0x8] sm:$0xff]
      %v1786 = vld [vmem:[%s1 + $0x10] sm:$0xff]
      %v1787 = vld [vmem:[%s1 + $0x18] sm:$0xff]
      %v1788 = vld [vmem:[%s1 + $0x20] sm:$0xff]
      %v1789 = vld [vmem:[%s1 + $0x28] sm:$0xff]
      %v1790 = vld [vmem:[%s1 + $0x30] sm:$0xff]
      %v1791 = vld [vmem:[%s1 + $0x38] sm:$0xff]
      %v1792 = vld [vmem:[%s1 + $0x40] sm:$0xff]
      %vm1793 = vcmask 588800
      %v1795 = vsel %vm1793, %v1752, 0
      %v1798 = vsel %vm1793, %v1753, 0
      %v1801 = vsel %vm1793, %v1754, 0
      %v1804 = vsel %vm1793, %v1755, 0
      %v1807 = vsel %vm1793, %v1756, 0
      %v1810 = vsel %vm1793, %v1757, 0
      %v1813 = vsel %vm1793, %v1758, 0
      %v1816 = vsel %vm1793, %v1759, 0
      %v1819 = vsel %vm1793, %v1760, 0
      %v1822 = vsel %vm1793, %v1761, 0
      %v1825 = vsel %vm1793, %v1762, 0
      %v1828 = vsel %vm1793, %v1763, 0
      %v1831 = vsel %vm1793, %v1764, 0
      %v1834 = vsel %vm1793, %v1765, 0
      %v1837 = vsel %vm1793, %v1766, 0
      %v1840 = vsel %vm1793, %v1767, 0
      %v1843 = vsel %vm1793, %v1768, 0
      %v1846 = vsel %vm1793, %v1769, 0
      %v1849 = vsel %vm1793, %v1770, 0
      %v1852 = vsel %vm1793, %v1771, 0
      %v1855 = vsel %vm1793, %v1772, 0
      %v1858 = vsel %vm1793, %v1773, 0
      %v1861 = vsel %vm1793, %v1774, 0
      %v1864 = vsel %vm1793, %v1775, 0
      %v1867 = vsel %vm1793, %v1776, 0
      %v1870 = vsel %vm1793, %v1777, 0
      %v1873 = vsel %vm1793, %v1778, 0
      %v1876 = vsel %vm1793, %v1779, 0
      %v1879 = vsel %vm1793, %v1780, 0
      %v1882 = vsel %vm1793, %v1781, 0
      %v1885 = vsel %vm1793, %v1782, 0
      %v1888 = vsel %vm1793, %v1783, 0
      %1890 = vmatprep.subr.mxu0 0.0
      %1891 = vmatpush1.msra.mxu0 %v1784
      %1892 = vmatprep.subr.mxu0 0.0
      %1893 = vmatpush1.msra.mxu0 %v1785
      %1894 = vmatprep.subr.mxu0 0.0
      %1895 = vmatpush1.msra.mxu0 %v1786
      %1896 = vmatprep.subr.mxu0 0.0
      %1897 = vmatpush1.msra.mxu0 %v1787
      %1898 = vmatprep.subr.mxu0 0.0
      %1899 = vmatpush1.msra.mxu0 %v1788
      %1900 = vmatprep.subr.mxu0 0.0
      %1901 = vmatpush1.msra.mxu0 %v1789
      %1902 = vmatprep.subr.mxu0 0.0
      %1903 = vmatpush1.msra.mxu0 %v1790
      %1904 = vmatprep.subr.mxu0 0.0
      %1905 = vmatpush1.msra.mxu0 %v1791
      %1906 = vmatprep.subr.mxu0 0.0
      %1907 = vmatpush1.msra.mxu0 %v1792
      %1908 = vmatprep.subr.mxu0 0.0
      %1909 = vmatpush1.msra.mxu0 0.0
      %1910 = vmatprep.subr.mxu0 0.0
      %1911 = vmatpush1.msra.mxu0 0.0
      %1912 = vmatprep.subr.mxu0 0.0
      %1913 = vmatpush1.msra.mxu0 0.0
      %1914 = vmatprep.subr.mxu0 0.0
      %1915 = vmatpush1.msra.mxu0 0.0
      %1916 = vmatprep.subr.mxu0 0.0
      %1917 = vmatpush1.msra.mxu0 0.0
      %1918 = vmatprep.subr.mxu0 0.0
      %1919 = vmatpush1.msra.mxu0 0.0
      %1920 = vmatprep.subr.mxu0 0.0
      %1921 = vmatpush1.msra.mxu0 0.0
      %1922 = vmatprep.subr.mxu0 0.0
      %1923 = vmatpush1.msra.mxu0 0.0
      %1924 = vmatprep.subr.mxu0 0.0
      %1925 = vmatpush1.msra.mxu0 0.0
      %1926 = vmatprep.subr.mxu0 0.0
      %1927 = vmatpush1.msra.mxu0 0.0
      %1928 = vmatprep.subr.mxu0 0.0
      %1929 = vmatpush1.msra.mxu0 0.0
      %1930 = vmatprep.subr.mxu0 0.0
      %1931 = vmatpush1.msra.mxu0 0.0
      %1932 = vmatprep.subr.mxu0 0.0
      %1933 = vmatpush1.msra.mxu0 0.0
      %1934 = vmatprep.subr.mxu0 0.0
      %1935 = vmatpush1.msra.mxu0 0.0
      %1936 = vmatprep.subr.mxu0 0.0
      %1937 = vmatpush1.msra.mxu0 0.0
      %1938 = vmatprep.subr.mxu0 0.0
      %1939 = vmatpush1.msra.mxu0 0.0
      %1940 = vmatprep.subr.mxu0 0.0
      %1941 = vmatpush1.msra.mxu0 0.0
      %1942 = vmatprep.subr.mxu0 0.0
      %1943 = vmatpush1.msra.mxu0 0.0
      %1944 = vmatprep.subr.mxu0 0.0
      %1945 = vmatpush1.msra.mxu0 0.0
      %1946 = vmatprep.subr.mxu0 0.0
      %1947 = vmatpush1.msra.mxu0 0.0
      %1948 = vmatprep.subr.mxu0 0.0
      %1949 = vmatpush1.msra.mxu0 0.0
      %1950 = vmatprep.subr.mxu0 0.0
      %1951 = vmatpush1.msra.mxu0 0.0
      %1952 = vmatprep.subr.mxu0 0.0
      %1953 = vmatpush1.msra.mxu0 0.0
      %1954 = vmatprep.mubr.f32.mxu0 0.0
      %1955 = vmatmul.mubr.f32.gmra.mrb[0].mxu0 %v1795
      %v1956 = vpop.f32.mrb[0].mxu0
      %v1957 = vadd.f32 0.0, %v1956
      %v1958 = vpop.f32.mrb[0].mxu0
      %1959 = vmatprep.mubr.f32.mxu0 0.0
      %1960 = vmatmul.mubr.f32.gmra.mrb[0].mxu0 %v1798
      %v1961 = vpop.f32.mrb[0].mxu0
      %v1962 = vadd.f32 0.0, %v1961
      %v1963 = vpop.f32.mrb[0].mxu0
      %1964 = vmatprep.mubr.f32.mxu0 0.0
      %1965 = vmatmul.mubr.f32.gmra.mrb[0].mxu0 %v1801
      %v1966 = vpop.f32.mrb[0].mxu0
      %v1967 = vadd.f32 0.0, %v1966
      %v1968 = vpop.f32.mrb[0].mxu0
      %1969 = vmatprep.mubr.f32.mxu0 0.0
      %1970 = vmatmul.mubr.f32.gmra.mrb[0].mxu0 %v1804
      %v1971 = vpop.f32.mrb[0].mxu0
      %v1972 = vadd.f32 0.0, %v1971
      %v1973 = vpop.f32.mrb[0].mxu0
      %1974 = vmatprep.mubr.f32.mxu0 0.0
      %1975 = vmatmul.mubr.f32.gmra.mrb[0].mxu0 %v1807
      %v1976 = vpop.f32.mrb[0].mxu0
      %v1977 = vadd.f32 0.0, %v1976
      %v1978 = vpop.f32.mrb[0].mxu0
      %1979 = vmatprep.mubr.f32.mxu0 0.0
      %1980 = vmatmul.mubr.f32.gmra.mrb[0].mxu0 %v1810
      %v1981 = vpop.f32.mrb[0].mxu0
      %v1982 = vadd.f32 0.0, %v1981
      %v1983 = vpop.f32.mrb[0].mxu0
      %1984 = vmatprep.mubr.f32.mxu0 0.0
      %1985 = vmatmul.mubr.f32.gmra.mrb[0].mxu0 %v1813
      %v1986 = vpop.f32.mrb[0].mxu0
      %v1987 = vadd.f32 0.0, %v1986
      %v1988 = vpop.f32.mrb[0].mxu0
      %1989 = vmatprep.mubr.f32.mxu0 0.0
      %1990 = vmatmul.mubr.f32.gmra.mrb[0].mxu0 %v1816
      %v1991 = vpop.f32.mrb[0].mxu0
      %v1992 = vadd.f32 0.0, %v1991
      %v1993 = vpop.f32.mrb[0].mxu0
      %1994 = vmatprep.mubr.f32.mxu0 0.0
      %1995 = vmatmul.mubr.f32.gmra.mrb[0].mxu0 %v1819
      %v1996 = vpop.f32.mrb[0].mxu0
      %v1997 = vadd.f32 0.0, %v1996
      %v1998 = vpop.f32.mrb[0].mxu0
      %1999 = vmatprep.mubr.f32.mxu0 0.0
      %2000 = vmatmul.mubr.f32.gmra.mrb[0].mxu0 %v1822
      %v2001 = vpop.f32.mrb[0].mxu0
      %v2002 = vadd.f32 0.0, %v2001
      %v2003 = vpop.f32.mrb[0].mxu0
      %2004 = vmatprep.mubr.f32.mxu0 0.0
      %2005 = vmatmul.mubr.f32.gmra.mrb[0].mxu0 %v1825
      %v2006 = vpop.f32.mrb[0].mxu0
      %v2007 = vadd.f32 0.0, %v2006
      %v2008 = vpop.f32.mrb[0].mxu0
      %2009 = vmatprep.mubr.f32.mxu0 0.0
      %2010 = vmatmul.mubr.f32.gmra.mrb[0].mxu0 %v1828
      %v2011 = vpop.f32.mrb[0].mxu0
      %v2012 = vadd.f32 0.0, %v2011
      %v2013 = vpop.f32.mrb[0].mxu0
      %2014 = vmatprep.mubr.f32.mxu0 0.0
      %2015 = vmatmul.mubr.f32.gmra.mrb[0].mxu0 %v1831
      %v2016 = vpop.f32.mrb[0].mxu0
      %v2017 = vadd.f32 0.0, %v2016
      %v2018 = vpop.f32.mrb[0].mxu0
      %2019 = vmatprep.mubr.f32.mxu0 0.0
      %2020 = vmatmul.mubr.f32.gmra.mrb[0].mxu0 %v1834
      %v2021 = vpop.f32.mrb[0].mxu0
      %v2022 = vadd.f32 0.0, %v2021
      %v2023 = vpop.f32.mrb[0].mxu0
      %2024 = vmatprep.mubr.f32.mxu0 0.0
      %2025 = vmatmul.mubr.f32.gmra.mrb[0].mxu0 %v1837
      %v2026 = vpop.f32.mrb[0].mxu0
      %v2027 = vadd.f32 0.0, %v2026
      %v2028 = vpop.f32.mrb[0].mxu0
      %2029 = vmatprep.mubr.f32.mxu0 0.0
      %2030 = vmatmul.mubr.f32.gmra.mrb[0].mxu0 %v1840
      %v2031 = vpop.f32.mrb[0].mxu0
      %v2032 = vadd.f32 0.0, %v2031
      %v2033 = vpop.f32.mrb[0].mxu0
      %2034 = vmatprep.mubr.f32.mxu0 0.0
      %2035 = vmatmul.mubr.f32.gmra.mrb[0].mxu0 %v1843
      %v2036 = vpop.f32.mrb[0].mxu0
      %v2037 = vadd.f32 0.0, %v2036
      %v2038 = vpop.f32.mrb[0].mxu0
      %2039 = vmatprep.mubr.f32.mxu0 0.0
      %2040 = vmatmul.mubr.f32.gmra.mrb[0].mxu0 %v1846
      %v2041 = vpop.f32.mrb[0].mxu0
      %v2042 = vadd.f32 0.0, %v2041
      %v2043 = vpop.f32.mrb[0].mxu0
      %2044 = vmatprep.mubr.f32.mxu0 0.0
      %2045 = vmatmul.mubr.f32.gmra.mrb[0].mxu0 %v1849
      %v2046 = vpop.f32.mrb[0].mxu0
      %v2047 = vadd.f32 0.0, %v2046
      %v2048 = vpop.f32.mrb[0].mxu0
      %2049 = vmatprep.mubr.f32.mxu0 0.0
      %2050 = vmatmul.mubr.f32.gmra.mrb[0].mxu0 %v1852
      %v2051 = vpop.f32.mrb[0].mxu0
      %v2052 = vadd.f32 0.0, %v2051
      %v2053 = vpop.f32.mrb[0].mxu0
      %2054 = vmatprep.mubr.f32.mxu0 0.0
      %2055 = vmatmul.mubr.f32.gmra.mrb[0].mxu0 %v1855
      %v2056 = vpop.f32.mrb[0].mxu0
      %v2057 = vadd.f32 0.0, %v2056
      %v2058 = vpop.f32.mrb[0].mxu0
      %2059 = vmatprep.mubr.f32.mxu0 0.0
      %2060 = vmatmul.mubr.f32.gmra.mrb[0].mxu0 %v1858
      %v2061 = vpop.f32.mrb[0].mxu0
      %v2062 = vadd.f32 0.0, %v2061
      %v2063 = vpop.f32.mrb[0].mxu0
      %2064 = vmatprep.mubr.f32.mxu0 0.0
      %2065 = vmatmul.mubr.f32.gmra.mrb[0].mxu0 %v1861
      %v2066 = vpop.f32.mrb[0].mxu0
      %v2067 = vadd.f32 0.0, %v2066
      %v2068 = vpop.f32.mrb[0].mxu0
      %2069 = vmatprep.mubr.f32.mxu0 0.0
      %2070 = vmatmul.mubr.f32.gmra.mrb[0].mxu0 %v1864
      %v2071 = vpop.f32.mrb[0].mxu0
      %v2072 = vadd.f32 0.0, %v2071
      %v2073 = vpop.f32.mrb[0].mxu0
      %2074 = vmatprep.mubr.f32.mxu0 0.0
      %2075 = vmatmul.mubr.f32.gmra.mrb[0].mxu0 %v1867
      %v2076 = vpop.f32.mrb[0].mxu0
      %v2077 = vadd.f32 0.0, %v2076
      %v2078 = vpop.f32.mrb[0].mxu0
      %2079 = vmatprep.mubr.f32.mxu0 0.0
      %2080 = vmatmul.mubr.f32.gmra.mrb[0].mxu0 %v1870
      %v2081 = vpop.f32.mrb[0].mxu0
      %v2082 = vadd.f32 0.0, %v2081
      %v2083 = vpop.f32.mrb[0].mxu0
      %2084 = vmatprep.mubr.f32.mxu0 0.0
      %2085 = vmatmul.mubr.f32.gmra.mrb[0].mxu0 %v1873
      %v2086 = vpop.f32.mrb[0].mxu0
      %v2087 = vadd.f32 0.0, %v2086
      %v2088 = vpop.f32.mrb[0].mxu0
      %2089 = vmatprep.mubr.f32.mxu0 0.0
      %2090 = vmatmul.mubr.f32.gmra.mrb[0].mxu0 %v1876
      %v2091 = vpop.f32.mrb[0].mxu0
      %v2092 = vadd.f32 0.0, %v2091
      %v2093 = vpop.f32.mrb[0].mxu0
      %2094 = vmatprep.mubr.f32.mxu0 0.0
      %2095 = vmatmul.mubr.f32.gmra.mrb[0].mxu0 %v1879
      %v2096 = vpop.f32.mrb[0].mxu0
      %v2097 = vadd.f32 0.0, %v2096
      %v2098 = vpop.f32.mrb[0].mxu0
      %2099 = vmatprep.mubr.f32.mxu0 0.0
      %2100 = vmatmul.mubr.f32.gmra.mrb[0].mxu0 %v1882
      %v2101 = vpop.f32.mrb[0].mxu0
      %v2102 = vadd.f32 0.0, %v2101
      %v2103 = vpop.f32.mrb[0].mxu0
      %2104 = vmatprep.mubr.f32.mxu0 0.0
      %2105 = vmatmul.mubr.f32.gmra.mrb[0].mxu0 %v1885
      %v2106 = vpop.f32.mrb[0].mxu0
      %v2107 = vadd.f32 0.0, %v2106
      %v2108 = vpop.f32.mrb[0].mxu0
      %2109 = vmatprep.mubr.f32.mxu0 0.0
      %2110 = vmatmul.mubr.f32.gmra.mrb[0].mxu0 %v1888
      %v2111 = vpop.f32.mrb[0].mxu0
      %v2112 = vadd.f32 0.0, %v2111
      %v2113 = vpop.f32.mrb[0].mxu0
      %2114 = vdwg.mxu0
      %2115 = vst.msk [vmem:[#allocation3] sm:$0xff] %vm204, %v1957
      %2116 = vst.msk [vmem:[#allocation3 + $0x8] sm:$0xff] %vm204, %v1962
      %2117 = vst.msk [vmem:[#allocation3 + $0x10] sm:$0xff] %vm204, %v1967
      %2118 = vst.msk [vmem:[#allocation3 + $0x18] sm:$0xff] %vm204, %v1972
      %2119 = vst.msk [vmem:[#allocation3 + $0x20] sm:$0xff] %vm204, %v1977
      %2120 = vst.msk [vmem:[#allocation3 + $0x28] sm:$0xff] %vm204, %v1982
      %2121 = vst.msk [vmem:[#allocation3 + $0x30] sm:$0xff] %vm204, %v1987
      %2122 = vst.msk [vmem:[#allocation3 + $0x38] sm:$0xff] %vm204, %v1992
      %2123 = vst.msk [vmem:[#allocation3 + $0x40] sm:$0xff] %vm204, %v1997
      %2124 = vst.msk [vmem:[#allocation3 + $0x48] sm:$0xff] %vm204, %v2002
      %2125 = vst.msk [vmem:[#allocation3 + $0x50] sm:$0xff] %vm204, %v2007
      %2126 = vst.msk [vmem:[#allocation3 + $0x58] sm:$0xff] %vm204, %v2012
      %2127 = vst.msk [vmem:[#allocation3 + $0x60] sm:$0xff] %vm204, %v2017
      %2128 = vst.msk [vmem:[#allocation3 + $0x68] sm:$0xff] %vm204, %v2022
      %2129 = vst.msk [vmem:[#allocation3 + $0x70] sm:$0xff] %vm204, %v2027
      %2130 = vst.msk [vmem:[#allocation3 + $0x78] sm:$0xff] %vm204, %v2032
      %2131 = vst.msk [vmem:[#allocation3 + $0x80] sm:$0xff] %vm204, %v2037
      %2132 = vst.msk [vmem:[#allocation3 + $0x88] sm:$0xff] %vm204, %v2042
      %2133 = vst.msk [vmem:[#allocation3 + $0x90] sm:$0xff] %vm204, %v2047
      %2134 = vst.msk [vmem:[#allocation3 + $0x98] sm:$0xff] %vm204, %v2052
      %2135 = vst.msk [vmem:[#allocation3 + $0xa0] sm:$0xff] %vm204, %v2057
      %2136 = vst.msk [vmem:[#allocation3 + $0xa8] sm:$0xff] %vm204, %v2062
      %2137 = vst.msk [vmem:[#allocation3 + $0xb0] sm:$0xff] %vm204, %v2067
      %2138 = vst.msk [vmem:[#allocation3 + $0xb8] sm:$0xff] %vm204, %v2072
      %2139 = vst.msk [vmem:[#allocation3 + $0xc0] sm:$0xff] %vm204, %v2077
      %2140 = vst.msk [vmem:[#allocation3 + $0xc8] sm:$0xff] %vm204, %v2082
      %2141 = vst.msk [vmem:[#allocation3 + $0xd0] sm:$0xff] %vm204, %v2087
      %2142 = vst.msk [vmem:[#allocation3 + $0xd8] sm:$0xff] %vm204, %v2092
      %2143 = vst.msk [vmem:[#allocation3 + $0xe0] sm:$0xff] %vm204, %v2097
      %2144 = vst.msk [vmem:[#allocation3 + $0xe8] sm:$0xff] %vm204, %v2102
      %2145 = vst.msk [vmem:[#allocation3 + $0xf0] sm:$0xff] %vm204, %v2107
      %2146 = vst.msk [vmem:[#allocation3 + $0xf8] sm:$0xff] %vm204, %v2112
      %v2147 = vsel %vm204, %v1957, 0.0
      %v2148 = vsel %vm204, %v1962, 0.0
      %v2149 = vadd.f32 %v2147, %v2148
      %v2150 = vsel %vm204, %v1967, 0.0
      %v2151 = vadd.f32 %v2149, %v2150
      %v2152 = vsel %vm204, %v1972, 0.0
      %v2153 = vadd.f32 %v2151, %v2152
      %v2154 = vsel %vm204, %v1977, 0.0
      %v2155 = vadd.f32 %v2153, %v2154
      %v2156 = vsel %vm204, %v1982, 0.0
      %v2157 = vadd.f32 %v2155, %v2156
      %v2158 = vsel %vm204, %v1987, 0.0
      %v2159 = vadd.f32 %v2157, %v2158
      %v2160 = vsel %vm204, %v1992, 0.0
      %v2161 = vadd.f32 %v2159, %v2160
      %v2162 = vsel %vm204, %v1997, 0.0
      %v2163 = vadd.f32 %v2161, %v2162
      %v2164 = vsel %vm204, %v2002, 0.0
      %v2165 = vadd.f32 %v2163, %v2164
      %v2166 = vsel %vm204, %v2007, 0.0
      %v2167 = vadd.f32 %v2165, %v2166
      %v2168 = vsel %vm204, %v2012, 0.0
      %v2169 = vadd.f32 %v2167, %v2168
      %v2170 = vsel %vm204, %v2017, 0.0
      %v2171 = vadd.f32 %v2169, %v2170
      %v2172 = vsel %vm204, %v2022, 0.0
      %v2173 = vadd.f32 %v2171, %v2172
      %v2174 = vsel %vm204, %v2027, 0.0
      %v2175 = vadd.f32 %v2173, %v2174
      %v2176 = vsel %vm204, %v2032, 0.0
      %v2177 = vadd.f32 %v2175, %v2176
      %v2178 = vsel %vm204, %v2037, 0.0
      %v2179 = vadd.f32 %v2177, %v2178
      %v2180 = vsel %vm204, %v2042, 0.0
      %v2181 = vadd.f32 %v2179, %v2180
      %v2182 = vsel %vm204, %v2047, 0.0
      %v2183 = vadd.f32 %v2181, %v2182
      %v2184 = vsel %vm204, %v2052, 0.0
      %v2185 = vadd.f32 %v2183, %v2184
      %v2186 = vsel %vm204, %v2057, 0.0
      %v2187 = vadd.f32 %v2185, %v2186
      %v2188 = vsel %vm204, %v2062, 0.0
      %v2189 = vadd.f32 %v2187, %v2188
      %v2190 = vsel %vm204, %v2067, 0.0
      %v2191 = vadd.f32 %v2189, %v2190
      %v2192 = vsel %vm204, %v2072, 0.0
      %v2193 = vadd.f32 %v2191, %v2192
      %v2194 = vsel %vm204, %v2077, 0.0
      %v2195 = vadd.f32 %v2193, %v2194
      %v2196 = vsel %vm204, %v2082, 0.0
      %v2197 = vadd.f32 %v2195, %v2196
      %v2198 = vsel %vm204, %v2087, 0.0
      %v2199 = vadd.f32 %v2197, %v2198
      %v2200 = vsel %vm204, %v2092, 0.0
      %v2201 = vadd.f32 %v2199, %v2200
      %v2202 = vsel %vm204, %v2097, 0.0
      %v2203 = vadd.f32 %v2201, %v2202
      %v2204 = vsel %vm204, %v2102, 0.0
      %v2205 = vadd.f32 %v2203, %v2204
      %v2206 = vsel %vm204, %v2107, 0.0
      %v2207 = vadd.f32 %v2205, %v2206
      %v2208 = vsel %vm204, %v2112, 0.0
      %v2209 = vadd.f32 %v2207, %v2208
      %v2210 = vrot.slane %v2209, 4
      %v2211 = vadd.f32 %v2209, %v2210
      %v2212 = vrot.slane %v2211, 2
      %v2213 = vadd.f32 %v2211, %v2212
      %v2214 = vrot.slane %v2213, 1
      %v2215 = vadd.f32 %v2213, %v2214
      %v2216 = vadd.f32 %v2215, 0.0
      %v2217 = vmul.f32 %v1957, %v1957
      %v2218 = vmul.f32 %v1962, %v1962
      %v2219 = vmul.f32 %v1967, %v1967
      %v2220 = vmul.f32 %v1972, %v1972
      %v2221 = vmul.f32 %v1977, %v1977
      %v2222 = vmul.f32 %v1982, %v1982
      %v2223 = vmul.f32 %v1987, %v1987
      %v2224 = vmul.f32 %v1992, %v1992
      %v2225 = vmul.f32 %v1997, %v1997
      %v2226 = vmul.f32 %v2002, %v2002
      %v2227 = vmul.f32 %v2007, %v2007
      %v2228 = vmul.f32 %v2012, %v2012
      %v2229 = vmul.f32 %v2017, %v2017
      %v2230 = vmul.f32 %v2022, %v2022
      %v2231 = vmul.f32 %v2027, %v2027
      %v2232 = vmul.f32 %v2032, %v2032
      %v2233 = vmul.f32 %v2037, %v2037
      %v2234 = vmul.f32 %v2042, %v2042
      %v2235 = vmul.f32 %v2047, %v2047
      %v2236 = vmul.f32 %v2052, %v2052
      %v2237 = vmul.f32 %v2057, %v2057
      %v2238 = vmul.f32 %v2062, %v2062
      %v2239 = vmul.f32 %v2067, %v2067
      %v2240 = vmul.f32 %v2072, %v2072
      %v2241 = vmul.f32 %v2077, %v2077
      %v2242 = vmul.f32 %v2082, %v2082
      %v2243 = vmul.f32 %v2087, %v2087
      %v2244 = vmul.f32 %v2092, %v2092
      %v2245 = vmul.f32 %v2097, %v2097
      %v2246 = vmul.f32 %v2102, %v2102
      %v2247 = vmul.f32 %v2107, %v2107
      %v2248 = vmul.f32 %v2112, %v2112
      %v2249 = vsel %vm204, %v2217, 0.0
      %v2250 = vsel %vm204, %v2218, 0.0
      %v2251 = vadd.f32 %v2249, %v2250
      %v2252 = vsel %vm204, %v2219, 0.0
      %v2253 = vadd.f32 %v2251, %v2252
      %v2254 = vsel %vm204, %v2220, 0.0
      %v2255 = vadd.f32 %v2253, %v2254
      %v2256 = vsel %vm204, %v2221, 0.0
      %v2257 = vadd.f32 %v2255, %v2256
      %v2258 = vsel %vm204, %v2222, 0.0
      %v2259 = vadd.f32 %v2257, %v2258
      %v2260 = vsel %vm204, %v2223, 0.0
      %v2261 = vadd.f32 %v2259, %v2260
      %v2262 = vsel %vm204, %v2224, 0.0
      %v2263 = vadd.f32 %v2261, %v2262
      %v2264 = vsel %vm204, %v2225, 0.0
      %v2265 = vadd.f32 %v2263, %v2264
      %v2266 = vsel %vm204, %v2226, 0.0
      %v2267 = vadd.f32 %v2265, %v2266
      %v2268 = vsel %vm204, %v2227, 0.0
      %v2269 = vadd.f32 %v2267, %v2268
      %v2270 = vsel %vm204, %v2228, 0.0
      %v2271 = vadd.f32 %v2269, %v2270
      %v2272 = vsel %vm204, %v2229, 0.0
      %v2273 = vadd.f32 %v2271, %v2272
      %v2274 = vsel %vm204, %v2230, 0.0
      %v2275 = vadd.f32 %v2273, %v2274
      %v2276 = vsel %vm204, %v2231, 0.0
      %v2277 = vadd.f32 %v2275, %v2276
      %v2278 = vsel %vm204, %v2232, 0.0
      %v2279 = vadd.f32 %v2277, %v2278
      %v2280 = vsel %vm204, %v2233, 0.0
      %v2281 = vadd.f32 %v2279, %v2280
      %v2282 = vsel %vm204, %v2234, 0.0
      %v2283 = vadd.f32 %v2281, %v2282
      %v2284 = vsel %vm204, %v2235, 0.0
      %v2285 = vadd.f32 %v2283, %v2284
      %v2286 = vsel %vm204, %v2236, 0.0
      %v2287 = vadd.f32 %v2285, %v2286
      %v2288 = vsel %vm204, %v2237, 0.0
      %v2289 = vadd.f32 %v2287, %v2288
      %v2290 = vsel %vm204, %v2238, 0.0
      %v2291 = vadd.f32 %v2289, %v2290
      %v2292 = vsel %vm204, %v2239, 0.0
      %v2293 = vadd.f32 %v2291, %v2292
      %v2294 = vsel %vm204, %v2240, 0.0
      %v2295 = vadd.f32 %v2293, %v2294
      %v2296 = vsel %vm204, %v2241, 0.0
      %v2297 = vadd.f32 %v2295, %v2296
      %v2298 = vsel %vm204, %v2242, 0.0
      %v2299 = vadd.f32 %v2297, %v2298
      %v2300 = vsel %vm204, %v2243, 0.0
      %v2301 = vadd.f32 %v2299, %v2300
      %v2302 = vsel %vm204, %v2244, 0.0
      %v2303 = vadd.f32 %v2301, %v2302
      %v2304 = vsel %vm204, %v2245, 0.0
      %v2305 = vadd.f32 %v2303, %v2304
      %v2306 = vsel %vm204, %v2246, 0.0
      %v2307 = vadd.f32 %v2305, %v2306
      %v2308 = vsel %vm204, %v2247, 0.0
      %v2309 = vadd.f32 %v2307, %v2308
      %v2310 = vsel %vm204, %v2248, 0.0
      %v2311 = vadd.f32 %v2309, %v2310
      %v2312 = vrot.slane %v2311, 4
      %v2313 = vadd.f32 %v2311, %v2312
      %v2314 = vrot.slane %v2313, 2
      %v2315 = vadd.f32 %v2313, %v2314
      %v2316 = vrot.slane %v2315, 1
      %v2317 = vadd.f32 %v2315, %v2316
      %v2318 = vadd.f32 %v2317, 0.0
      %v2319 = vmul.f32 %v2216, 0.00390625
      %v2320 = vmul.f32 %v2318, 0.00390625
      %v2321 = vmul.f32 %v2319, %v2319
      %v2322 = vsub.f32 %v2320, %v2321
      %v2323 = vmax.f32 %v2322, 0.0
      %v2324 = vadd.f32 %v2323, 1e-05
      %v2325 = vrsqrt.pop %v2324
      %v2326 = vld [vmem:[#allocation3] sm:$0xff]
      %v2327 = vld [vmem:[#allocation3 + $0x8] sm:$0xff]
      %v2328 = vld [vmem:[#allocation3 + $0x10] sm:$0xff]
      %v2329 = vld [vmem:[#allocation3 + $0x18] sm:$0xff]
      %v2330 = vld [vmem:[#allocation3 + $0x20] sm:$0xff]
      %v2331 = vld [vmem:[#allocation3 + $0x28] sm:$0xff]
      %v2332 = vld [vmem:[#allocation3 + $0x30] sm:$0xff]
      %v2333 = vld [vmem:[#allocation3 + $0x38] sm:$0xff]
      %v2334 = vld [vmem:[#allocation3 + $0x40] sm:$0xff]
      %v2335 = vld [vmem:[#allocation3 + $0x48] sm:$0xff]
      %v2336 = vld [vmem:[#allocation3 + $0x50] sm:$0xff]
      %v2337 = vld [vmem:[#allocation3 + $0x58] sm:$0xff]
      %v2338 = vld [vmem:[#allocation3 + $0x60] sm:$0xff]
      %v2339 = vld [vmem:[#allocation3 + $0x68] sm:$0xff]
      %v2340 = vld [vmem:[#allocation3 + $0x70] sm:$0xff]
      %v2341 = vld [vmem:[#allocation3 + $0x78] sm:$0xff]
      %v2342 = vld [vmem:[#allocation3 + $0x80] sm:$0xff]
      %v2343 = vld [vmem:[#allocation3 + $0x88] sm:$0xff]
      %v2344 = vld [vmem:[#allocation3 + $0x90] sm:$0xff]
      %v2345 = vld [vmem:[#allocation3 + $0x98] sm:$0xff]
      %v2346 = vld [vmem:[#allocation3 + $0xa0] sm:$0xff]
      %v2347 = vld [vmem:[#allocation3 + $0xa8] sm:$0xff]
      %v2348 = vld [vmem:[#allocation3 + $0xb0] sm:$0xff]
      %v2349 = vld [vmem:[#allocation3 + $0xb8] sm:$0xff]
      %v2350 = vld [vmem:[#allocation3 + $0xc0] sm:$0xff]
      %v2351 = vld [vmem:[#allocation3 + $0xc8] sm:$0xff]
      %v2352 = vld [vmem:[#allocation3 + $0xd0] sm:$0xff]
      %v2353 = vld [vmem:[#allocation3 + $0xd8] sm:$0xff]
      %v2354 = vld [vmem:[#allocation3 + $0xe0] sm:$0xff]
      %v2355 = vld [vmem:[#allocation3 + $0xe8] sm:$0xff]
      %v2356 = vld [vmem:[#allocation3 + $0xf0] sm:$0xff]
      %v2357 = vld [vmem:[#allocation3 + $0xf8] sm:$0xff]
      %v2358 = vsub.f32 %v2326, %v2319
      %v2359 = vsub.f32 %v2327, %v2319
      %v2360 = vsub.f32 %v2328, %v2319
      %v2361 = vsub.f32 %v2329, %v2319
      %v2362 = vsub.f32 %v2330, %v2319
      %v2363 = vsub.f32 %v2331, %v2319
      %v2364 = vsub.f32 %v2332, %v2319
      %v2365 = vsub.f32 %v2333, %v2319
      %v2366 = vsub.f32 %v2334, %v2319
      %v2367 = vsub.f32 %v2335, %v2319
      %v2368 = vsub.f32 %v2336, %v2319
      %v2369 = vsub.f32 %v2337, %v2319
      %v2370 = vsub.f32 %v2338, %v2319
      %v2371 = vsub.f32 %v2339, %v2319
      %v2372 = vsub.f32 %v2340, %v2319
      %v2373 = vsub.f32 %v2341, %v2319
      %v2374 = vsub.f32 %v2342, %v2319
      %v2375 = vsub.f32 %v2343, %v2319
      %v2376 = vsub.f32 %v2344, %v2319
      %v2377 = vsub.f32 %v2345, %v2319
      %v2378 = vsub.f32 %v2346, %v2319
      %v2379 = vsub.f32 %v2347, %v2319
      %v2380 = vsub.f32 %v2348, %v2319
      %v2381 = vsub.f32 %v2349, %v2319
      %v2382 = vsub.f32 %v2350, %v2319
      %v2383 = vsub.f32 %v2351, %v2319
      %v2384 = vsub.f32 %v2352, %v2319
      %v2385 = vsub.f32 %v2353, %v2319
      %v2386 = vsub.f32 %v2354, %v2319
      %v2387 = vsub.f32 %v2355, %v2319
      %v2388 = vsub.f32 %v2356, %v2319
      %v2389 = vsub.f32 %v2357, %v2319
      %v2390 = vmul.f32 %v2358, %v2325
      %v2391 = vmul.f32 %v2359, %v2325
      %v2392 = vmul.f32 %v2360, %v2325
      %v2393 = vmul.f32 %v2361, %v2325
      %v2394 = vmul.f32 %v2362, %v2325
      %v2395 = vmul.f32 %v2363, %v2325
      %v2396 = vmul.f32 %v2364, %v2325
      %v2397 = vmul.f32 %v2365, %v2325
      %v2398 = vmul.f32 %v2366, %v2325
      %v2399 = vmul.f32 %v2367, %v2325
      %v2400 = vmul.f32 %v2368, %v2325
      %v2401 = vmul.f32 %v2369, %v2325
      %v2402 = vmul.f32 %v2370, %v2325
      %v2403 = vmul.f32 %v2371, %v2325
      %v2404 = vmul.f32 %v2372, %v2325
      %v2405 = vmul.f32 %v2373, %v2325
      %v2406 = vmul.f32 %v2374, %v2325
      %v2407 = vmul.f32 %v2375, %v2325
      %v2408 = vmul.f32 %v2376, %v2325
      %v2409 = vmul.f32 %v2377, %v2325
      %v2410 = vmul.f32 %v2378, %v2325
      %v2411 = vmul.f32 %v2379, %v2325
      %v2412 = vmul.f32 %v2380, %v2325
      %v2413 = vmul.f32 %v2381, %v2325
      %v2414 = vmul.f32 %v2382, %v2325
      %v2415 = vmul.f32 %v2383, %v2325
      %v2416 = vmul.f32 %v2384, %v2325
      %v2417 = vmul.f32 %v2385, %v2325
      %v2418 = vmul.f32 %v2386, %v2325
      %v2419 = vmul.f32 %v2387, %v2325
      %v2420 = vmul.f32 %v2388, %v2325
      %v2421 = vmul.f32 %v2389, %v2325
      %v2422 = vmax.f32 %v2390, 0.0
      %v2423 = vmax.f32 %v2391, 0.0
      %v2424 = vmax.f32 %v2392, 0.0
      %v2425 = vmax.f32 %v2393, 0.0
      %v2426 = vmax.f32 %v2394, 0.0
      %v2427 = vmax.f32 %v2395, 0.0
      %v2428 = vmax.f32 %v2396, 0.0
      %v2429 = vmax.f32 %v2397, 0.0
      %v2430 = vmax.f32 %v2398, 0.0
      %v2431 = vmax.f32 %v2399, 0.0
      %v2432 = vmax.f32 %v2400, 0.0
      %v2433 = vmax.f32 %v2401, 0.0
      %v2434 = vmax.f32 %v2402, 0.0
      %v2435 = vmax.f32 %v2403, 0.0
      %v2436 = vmax.f32 %v2404, 0.0
      %v2437 = vmax.f32 %v2405, 0.0
      %v2438 = vmax.f32 %v2406, 0.0
      %v2439 = vmax.f32 %v2407, 0.0
      %v2440 = vmax.f32 %v2408, 0.0
      %v2441 = vmax.f32 %v2409, 0.0
      %v2442 = vmax.f32 %v2410, 0.0
      %v2443 = vmax.f32 %v2411, 0.0
      %v2444 = vmax.f32 %v2412, 0.0
      %v2445 = vmax.f32 %v2413, 0.0
      %v2446 = vmax.f32 %v2414, 0.0
      %v2447 = vmax.f32 %v2415, 0.0
      %v2448 = vmax.f32 %v2416, 0.0
      %v2449 = vmax.f32 %v2417, 0.0
      %v2450 = vmax.f32 %v2418, 0.0
      %v2451 = vmax.f32 %v2419, 0.0
      %v2452 = vmax.f32 %v2420, 0.0
      %v2453 = vmax.f32 %v2421, 0.0
      %2454 = vst.msk [vmem:[%s203] sm:$0xff] %vm204, %v2422
      %2455 = vst.msk [vmem:[%s203 + $0x8] sm:$0xff] %vm204, %v2423
      %2456 = vst.msk [vmem:[%s203 + $0x10] sm:$0xff] %vm204, %v2424
      %2457 = vst.msk [vmem:[%s203 + $0x18] sm:$0xff] %vm204, %v2425
      %2458 = vst.msk [vmem:[%s203 + $0x20] sm:$0xff] %vm204, %v2426
      %2459 = vst.msk [vmem:[%s203 + $0x28] sm:$0xff] %vm204, %v2427
      %2460 = vst.msk [vmem:[%s203 + $0x30] sm:$0xff] %vm204, %v2428
      %2461 = vst.msk [vmem:[%s203 + $0x38] sm:$0xff] %vm204, %v2429
      %2462 = vst.msk [vmem:[%s203 + $0x40] sm:$0xff] %vm204, %v2430
      %2463 = vst.msk [vmem:[%s203 + $0x48] sm:$0xff] %vm204, %v2431
      %2464 = vst.msk [vmem:[%s203 + $0x50] sm:$0xff] %vm204, %v2432
      %2465 = vst.msk [vmem:[%s203 + $0x58] sm:$0xff] %vm204, %v2433
      %2466 = vst.msk [vmem:[%s203 + $0x60] sm:$0xff] %vm204, %v2434
      %2467 = vst.msk [vmem:[%s203 + $0x68] sm:$0xff] %vm204, %v2435
      %2468 = vst.msk [vmem:[%s203 + $0x70] sm:$0xff] %vm204, %v2436
      %2469 = vst.msk [vmem:[%s203 + $0x78] sm:$0xff] %vm204, %v2437
      %2470 = vst.msk [vmem:[%s203 + $0x80] sm:$0xff] %vm204, %v2438
      %2471 = vst.msk [vmem:[%s203 + $0x88] sm:$0xff] %vm204, %v2439
      %2472 = vst.msk [vmem:[%s203 + $0x90] sm:$0xff] %vm204, %v2440
      %2473 = vst.msk [vmem:[%s203 + $0x98] sm:$0xff] %vm204, %v2441
      %2474 = vst.msk [vmem:[%s203 + $0xa0] sm:$0xff] %vm204, %v2442
      %2475 = vst.msk [vmem:[%s203 + $0xa8] sm:$0xff] %vm204, %v2443
      %2476 = vst.msk [vmem:[%s203 + $0xb0] sm:$0xff] %vm204, %v2444
      %2477 = vst.msk [vmem:[%s203 + $0xb8] sm:$0xff] %vm204, %v2445
      %2478 = vst.msk [vmem:[%s203 + $0xc0] sm:$0xff] %vm204, %v2446
      %2479 = vst.msk [vmem:[%s203 + $0xc8] sm:$0xff] %vm204, %v2447
      %2480 = vst.msk [vmem:[%s203 + $0xd0] sm:$0xff] %vm204, %v2448
      %2481 = vst.msk [vmem:[%s203 + $0xd8] sm:$0xff] %vm204, %v2449
      %2482 = vst.msk [vmem:[%s203 + $0xe0] sm:$0xff] %vm204, %v2450
      %2483 = vst.msk [vmem:[%s203 + $0xe8] sm:$0xff] %vm204, %v2451
      %2484 = vst.msk [vmem:[%s203 + $0xf0] sm:$0xff] %vm204, %v2452
      %2485 = vst.msk [vmem:[%s203 + $0xf8] sm:$0xff] %vm204, %v2453
      %v2486 = vld [vmem:[%s237] sm:$0xff]
      %v2487 = vld [vmem:[%s237 + $0x8] sm:$0xff]
      %2488 = vst.msk [vmem:[#allocation2] sm:$0xff] %vm204, %v2486
      %2489 = vst.msk [vmem:[#allocation2 + $0x8] sm:$0xff] %vm204, %v2487
      %v2490 = vld [vmem:[%s242] sm:$0xff]
      %v2491 = vld [vmem:[%s242 + $0x8] sm:$0xff]
      %2492 = vst.msk [vmem:[%s245] sm:$0xff] %vm204, %v2490
      %2493 = vst.msk [vmem:[%s245 + $0x8] sm:$0xff] %vm204, %v2491
      %v2494 = vld [vmem:[#allocation2] sm:$0xff]
      %v2495 = vld [vmem:[#allocation2 + $0x8] sm:$0xff]
      %v2496 = vld [vmem:[#allocation2 + $0x10] sm:$0xff]
      %v2497 = vld [vmem:[#allocation2 + $0x18] sm:$0xff]
      %v2498 = vld [vmem:[#allocation2 + $0x20] sm:$0xff]
      %v2499 = vld [vmem:[#allocation2 + $0x28] sm:$0xff]
      %v2500 = vld [vmem:[#allocation2 + $0x30] sm:$0xff]
      %v2501 = vld [vmem:[#allocation2 + $0x38] sm:$0xff]
      %v2502 = vld [vmem:[#allocation2 + $0x40] sm:$0xff]
      %v2503 = vld [vmem:[#allocation2 + $0x48] sm:$0xff]
      %v2504 = vld [vmem:[#allocation2 + $0x50] sm:$0xff]
      %v2505 = vld [vmem:[#allocation2 + $0x58] sm:$0xff]
      %v2506 = vld [vmem:[#allocation2 + $0x60] sm:$0xff]
      %v2507 = vld [vmem:[#allocation2 + $0x68] sm:$0xff]
      %v2508 = vld [vmem:[#allocation2 + $0x70] sm:$0xff]
      %v2509 = vld [vmem:[#allocation2 + $0x78] sm:$0xff]
      %v2510 = vld [vmem:[#allocation2 + $0x80] sm:$0xff]
      %v2511 = vld [vmem:[#allocation2 + $0x88] sm:$0xff]
      %v2512 = vld [vmem:[#allocation2 + $0x90] sm:$0xff]
      %v2513 = vld [vmem:[#allocation2 + $0x98] sm:$0xff]
      %v2514 = vld [vmem:[#allocation2 + $0xa0] sm:$0xff]
      %v2515 = vld [vmem:[#allocation2 + $0xa8] sm:$0xff]
      %v2516 = vld [vmem:[#allocation2 + $0xb0] sm:$0xff]
      %v2517 = vld [vmem:[#allocation2 + $0xb8] sm:$0xff]
      %v2518 = vld [vmem:[#allocation2 + $0xc0] sm:$0xff]
      %v2519 = vld [vmem:[#allocation2 + $0xc8] sm:$0xff]
      %v2520 = vld [vmem:[#allocation2 + $0xd0] sm:$0xff]
      %v2521 = vld [vmem:[#allocation2 + $0xd8] sm:$0xff]
      %v2522 = vld [vmem:[#allocation2 + $0xe0] sm:$0xff]
      %v2523 = vld [vmem:[#allocation2 + $0xe8] sm:$0xff]
      %v2524 = vld [vmem:[#allocation2 + $0xf0] sm:$0xff]
      %v2525 = vld [vmem:[#allocation2 + $0xf8] sm:$0xff]
      %v2526 = vld [vmem:[#allocation2 + $0x100] sm:$0xff]
      %v2527 = vld [vmem:[#allocation2 + $0x108] sm:$0xff]
      %v2528 = vld [vmem:[#allocation2 + $0x110] sm:$0xff]
      %v2529 = vld [vmem:[#allocation2 + $0x118] sm:$0xff]
      %v2548 = vrot.slane %v2494, 1
      %v2549 = vrot.slane %v2496, 1
      %v2550 = vrot.slane %v2498, 1
      %v2551 = vrot.slane %v2500, 1
      %v2552 = vrot.slane %v2502, 1
      %v2553 = vrot.slane %v2504, 1
      %v2554 = vrot.slane %v2506, 1
      %v2555 = vrot.slane %v2508, 1
      %v2556 = vrot.slane %v2510, 1
      %v2557 = vrot.slane %v2512, 1
      %v2558 = vrot.slane %v2514, 1
      %v2559 = vrot.slane %v2516, 1
      %v2560 = vrot.slane %v2518, 1
      %v2561 = vrot.slane %v2520, 1
      %v2562 = vrot.slane %v2522, 1
      %v2563 = vrot.slane %v2524, 1
      %v2564 = vrot.slane %v2526, 1
      %v2565 = vrot.slane %v2528, 1
      %v2602 = vrot.slane %v2494, 7
      %v2603 = vrot.slane %v2495, 7
      %v2604 = vsel %vm356, %v2602, %v2603
      %v2605 = vrot.slane %v2496, 7
      %v2606 = vrot.slane %v2497, 7
      %v2607 = vsel %vm356, %v2605, %v2606
      %v2608 = vrot.slane %v2498, 7
      %v2609 = vrot.slane %v2499, 7
      %v2610 = vsel %vm356, %v2608, %v2609
      %v2611 = vrot.slane %v2500, 7
      %v2612 = vrot.slane %v2501, 7
      %v2613 = vsel %vm356, %v2611, %v2612
      %v2614 = vrot.slane %v2502, 7
      %v2615 = vrot.slane %v2503, 7
      %v2616 = vsel %vm356, %v2614, %v2615
      %v2617 = vrot.slane %v2504, 7
      %v2618 = vrot.slane %v2505, 7
      %v2619 = vsel %vm356, %v2617, %v2618
      %v2620 = vrot.slane %v2506, 7
      %v2621 = vrot.slane %v2507, 7
      %v2622 = vsel %vm356, %v2620, %v2621
      %v2623 = vrot.slane %v2508, 7
      %v2624 = vrot.slane %v2509, 7
      %v2625 = vsel %vm356, %v2623, %v2624
      %v2626 = vrot.slane %v2510, 7
      %v2627 = vrot.slane %v2511, 7
      %v2628 = vsel %vm356, %v2626, %v2627
      %v2629 = vrot.slane %v2512, 7
      %v2630 = vrot.slane %v2513, 7
      %v2631 = vsel %vm356, %v2629, %v2630
      %v2632 = vrot.slane %v2514, 7
      %v2633 = vrot.slane %v2515, 7
      %v2634 = vsel %vm356, %v2632, %v2633
      %v2635 = vrot.slane %v2516, 7
      %v2636 = vrot.slane %v2517, 7
      %v2637 = vsel %vm356, %v2635, %v2636
      %v2638 = vrot.slane %v2518, 7
      %v2639 = vrot.slane %v2519, 7
      %v2640 = vsel %vm356, %v2638, %v2639
      %v2641 = vrot.slane %v2520, 7
      %v2642 = vrot.slane %v2521, 7
      %v2643 = vsel %vm356, %v2641, %v2642
      %v2644 = vrot.slane %v2522, 7
      %v2645 = vrot.slane %v2523, 7
      %v2646 = vsel %vm356, %v2644, %v2645
      %v2647 = vrot.slane %v2524, 7
      %v2648 = vrot.slane %v2525, 7
      %v2649 = vsel %vm356, %v2647, %v2648
      %v2650 = vrot.slane %v2526, 7
      %v2651 = vrot.slane %v2527, 7
      %v2652 = vsel %vm356, %v2650, %v2651
      %v2653 = vrot.slane %v2528, 7
      %v2654 = vrot.slane %v2529, 7
      %v2655 = vsel %vm356, %v2653, %v2654
      %v2708 = vrot.slane %v2495, 5
      %v2709 = vrot.slane %v2497, 5
      %v2710 = vrot.slane %v2499, 5
      %v2711 = vrot.slane %v2501, 5
      %v2712 = vrot.slane %v2503, 5
      %v2713 = vrot.slane %v2505, 5
      %v2714 = vrot.slane %v2507, 5
      %v2715 = vrot.slane %v2509, 5
      %v2716 = vrot.slane %v2511, 5
      %v2717 = vrot.slane %v2513, 5
      %v2718 = vrot.slane %v2515, 5
      %v2719 = vrot.slane %v2517, 5
      %v2720 = vrot.slane %v2519, 5
      %v2721 = vrot.slane %v2521, 5
      %v2722 = vrot.slane %v2523, 5
      %v2723 = vrot.slane %v2525, 5
      %v2724 = vrot.slane %v2527, 5
      %v2725 = vrot.slane %v2529, 5
      %v2744 = vsel %vm356, %v2548, %v2602
      %v2745 = vsel %vm356, %v2549, %v2605
      %v2746 = vsel %vm356, %v2550, %v2608
      %v2747 = vsel %vm356, %v2551, %v2611
      %v2748 = vsel %vm356, %v2552, %v2614
      %v2749 = vsel %vm356, %v2553, %v2617
      %v2750 = vsel %vm356, %v2554, %v2620
      %v2751 = vsel %vm356, %v2555, %v2623
      %v2752 = vsel %vm356, %v2556, %v2626
      %v2753 = vsel %vm356, %v2557, %v2629
      %v2754 = vsel %vm356, %v2558, %v2632
      %v2755 = vsel %vm356, %v2559, %v2635
      %v2756 = vsel %vm356, %v2560, %v2638
      %v2757 = vsel %vm356, %v2561, %v2641
      %v2758 = vsel %vm356, %v2562, %v2644
      %v2759 = vsel %vm356, %v2563, %v2647
      %v2760 = vsel %vm356, %v2564, %v2650
      %v2761 = vsel %vm356, %v2565, %v2653
      %v2762 = vsel %vm356, %v2603, %v2708
      %v2763 = vsel %vm356, %v2606, %v2709
      %v2764 = vsel %vm356, %v2609, %v2710
      %v2765 = vsel %vm356, %v2612, %v2711
      %v2766 = vsel %vm356, %v2615, %v2712
      %v2767 = vsel %vm356, %v2618, %v2713
      %v2768 = vsel %vm356, %v2621, %v2714
      %v2769 = vsel %vm356, %v2624, %v2715
      %v2770 = vsel %vm356, %v2627, %v2716
      %v2771 = vsel %vm356, %v2630, %v2717
      %v2772 = vsel %vm356, %v2633, %v2718
      %v2773 = vsel %vm356, %v2636, %v2719
      %v2774 = vsel %vm356, %v2639, %v2720
      %v2775 = vsel %vm356, %v2642, %v2721
      %v2776 = vsel %vm356, %v2645, %v2722
      %v2777 = vsel %vm356, %v2648, %v2723
      %v2778 = vsel %vm356, %v2651, %v2724
      %v2779 = vsel %vm356, %v2654, %v2725
      %v2812 = vrot.slane %v2744, 1
      %v2813 = vrot.slane %v2604, 1
      %v2814 = vsel %vm567, %v2812, %v2813
      %v2815 = vrot.slane %v2762, 1
      %v2816 = vsel %vm567, %v2813, %v2815
      %v2817 = vrot.slane %v2745, 1
      %v2818 = vrot.slane %v2607, 1
      %v2819 = vsel %vm567, %v2817, %v2818
      %v2820 = vrot.slane %v2763, 1
      %v2821 = vsel %vm567, %v2818, %v2820
      %v2822 = vrot.slane %v2746, 1
      %v2823 = vrot.slane %v2610, 1
      %v2824 = vsel %vm567, %v2822, %v2823
      %v2825 = vrot.slane %v2764, 1
      %v2826 = vsel %vm567, %v2823, %v2825
      %v2827 = vrot.slane %v2747, 1
      %v2828 = vrot.slane %v2613, 1
      %v2829 = vsel %vm567, %v2827, %v2828
      %v2830 = vrot.slane %v2765, 1
      %v2831 = vsel %vm567, %v2828, %v2830
      %v2832 = vrot.slane %v2748, 1
      %v2833 = vrot.slane %v2616, 1
      %v2834 = vsel %vm567, %v2832, %v2833
      %v2835 = vrot.slane %v2766, 1
      %v2836 = vsel %vm567, %v2833, %v2835
      %v2837 = vrot.slane %v2749, 1
      %v2838 = vrot.slane %v2619, 1
      %v2839 = vsel %vm567, %v2837, %v2838
      %v2840 = vrot.slane %v2767, 1
      %v2841 = vsel %vm567, %v2838, %v2840
      %v2842 = vrot.slane %v2750, 1
      %v2843 = vrot.slane %v2622, 1
      %v2844 = vsel %vm567, %v2842, %v2843
      %v2845 = vrot.slane %v2768, 1
      %v2846 = vsel %vm567, %v2843, %v2845
      %v2847 = vrot.slane %v2751, 1
      %v2848 = vrot.slane %v2625, 1
      %v2849 = vsel %vm567, %v2847, %v2848
      %v2850 = vrot.slane %v2769, 1
      %v2851 = vsel %vm567, %v2848, %v2850
      %v2852 = vrot.slane %v2752, 1
      %v2853 = vrot.slane %v2628, 1
      %v2854 = vsel %vm567, %v2852, %v2853
      %v2855 = vrot.slane %v2770, 1
      %v2856 = vsel %vm567, %v2853, %v2855
      %v2857 = vrot.slane %v2753, 1
      %v2858 = vrot.slane %v2631, 1
      %v2859 = vsel %vm567, %v2857, %v2858
      %v2860 = vrot.slane %v2771, 1
      %v2861 = vsel %vm567, %v2858, %v2860
      %v2862 = vrot.slane %v2754, 1
      %v2863 = vrot.slane %v2634, 1
      %v2864 = vsel %vm567, %v2862, %v2863
      %v2865 = vrot.slane %v2772, 1
      %v2866 = vsel %vm567, %v2863, %v2865
      %v2867 = vrot.slane %v2755, 1
      %v2868 = vrot.slane %v2637, 1
      %v2869 = vsel %vm567, %v2867, %v2868
      %v2870 = vrot.slane %v2773, 1
      %v2871 = vsel %vm567, %v2868, %v2870
      %v2872 = vrot.slane %v2756, 1
      %v2873 = vrot.slane %v2640, 1
      %v2874 = vsel %vm567, %v2872, %v2873
      %v2875 = vrot.slane %v2774, 1
      %v2876 = vsel %vm567, %v2873, %v2875
      %v2877 = vrot.slane %v2757, 1
      %v2878 = vrot.slane %v2643, 1
      %v2879 = vsel %vm567, %v2877, %v2878
      %v2880 = vrot.slane %v2775, 1
      %v2881 = vsel %vm567, %v2878, %v2880
      %v2882 = vrot.slane %v2758, 1
      %v2883 = vrot.slane %v2646, 1
      %v2884 = vsel %vm567, %v2882, %v2883
      %v2885 = vrot.slane %v2776, 1
      %v2886 = vsel %vm567, %v2883, %v2885
      %v2887 = vrot.slane %v2759, 1
      %v2888 = vrot.slane %v2649, 1
      %v2889 = vsel %vm567, %v2887, %v2888
      %v2890 = vrot.slane %v2777, 1
      %v2891 = vsel %vm567, %v2888, %v2890
      %2892 = vrot.lane.b32.xlu0 %v2814, 8
      %v2893 = vpop.permute.xlu0 %2892
      %2894 = vrot.lane.b32.xlu0 %v2816, 8
      %v2895 = vpop.permute.xlu0 %2894
      %2896 = vrot.lane.b32.xlu0 %v2819, 8
      %v2897 = vpop.permute.xlu0 %2896
      %2898 = vrot.lane.b32.xlu0 %v2821, 8
      %v2899 = vpop.permute.xlu0 %2898
      %2900 = vrot.lane.b32.xlu0 %v2824, 8
      %v2901 = vpop.permute.xlu0 %2900
      %2902 = vrot.lane.b32.xlu0 %v2826, 8
      %v2903 = vpop.permute.xlu0 %2902
      %2904 = vrot.lane.b32.xlu0 %v2829, 8
      %v2905 = vpop.permute.xlu0 %2904
      %2906 = vrot.lane.b32.xlu0 %v2831, 8
      %v2907 = vpop.permute.xlu0 %2906
      %2908 = vrot.lane.b32.xlu0 %v2834, 8
      %v2909 = vpop.permute.xlu0 %2908
      %2910 = vrot.lane.b32.xlu0 %v2836, 8
      %v2911 = vpop.permute.xlu0 %2910
      %2912 = vrot.lane.b32.xlu0 %v2839, 8
      %v2913 = vpop.permute.xlu0 %2912
      %2914 = vrot.lane.b32.xlu0 %v2841, 8
      %v2915 = vpop.permute.xlu0 %2914
      %2916 = vrot.lane.b32.xlu0 %v2844, 8
      %v2917 = vpop.permute.xlu0 %2916
      %2918 = vrot.lane.b32.xlu0 %v2846, 8
      %v2919 = vpop.permute.xlu0 %2918
      %2920 = vrot.lane.b32.xlu0 %v2849, 8
      %v2921 = vpop.permute.xlu0 %2920
      %2922 = vrot.lane.b32.xlu0 %v2851, 8
      %v2923 = vpop.permute.xlu0 %2922
      %2924 = vrot.lane.b32.xlu0 %v2854, 8
      %v2925 = vpop.permute.xlu0 %2924
      %2926 = vrot.lane.b32.xlu0 %v2856, 8
      %v2927 = vpop.permute.xlu0 %2926
      %2928 = vrot.lane.b32.xlu0 %v2859, 8
      %v2929 = vpop.permute.xlu0 %2928
      %2930 = vrot.lane.b32.xlu0 %v2861, 8
      %v2931 = vpop.permute.xlu0 %2930
      %2932 = vrot.lane.b32.xlu0 %v2864, 8
      %v2933 = vpop.permute.xlu0 %2932
      %2934 = vrot.lane.b32.xlu0 %v2866, 8
      %v2935 = vpop.permute.xlu0 %2934
      %2936 = vrot.lane.b32.xlu0 %v2869, 8
      %v2937 = vpop.permute.xlu0 %2936
      %2938 = vrot.lane.b32.xlu0 %v2871, 8
      %v2939 = vpop.permute.xlu0 %2938
      %2940 = vrot.lane.b32.xlu0 %v2874, 8
      %v2941 = vpop.permute.xlu0 %2940
      %2942 = vrot.lane.b32.xlu0 %v2876, 8
      %v2943 = vpop.permute.xlu0 %2942
      %2944 = vrot.lane.b32.xlu0 %v2879, 8
      %v2945 = vpop.permute.xlu0 %2944
      %2946 = vrot.lane.b32.xlu0 %v2881, 8
      %v2947 = vpop.permute.xlu0 %2946
      %2948 = vrot.lane.b32.xlu0 %v2884, 8
      %v2949 = vpop.permute.xlu0 %2948
      %2950 = vrot.lane.b32.xlu0 %v2886, 8
      %v2951 = vpop.permute.xlu0 %2950
      %2952 = vrot.lane.b32.xlu0 %v2889, 8
      %v2953 = vpop.permute.xlu0 %2952
      %2954 = vrot.lane.b32.xlu0 %v2891, 8
      %v2955 = vpop.permute.xlu0 %2954
      %v2988 = vrot.slane %v2744, 2
      %v2989 = vrot.slane %v2604, 2
      %v2990 = vsel %vm744, %v2988, %v2989
      %v2991 = vrot.slane %v2762, 2
      %v2992 = vsel %vm744, %v2989, %v2991
      %v2993 = vrot.slane %v2745, 2
      %v2994 = vrot.slane %v2607, 2
      %v2995 = vsel %vm744, %v2993, %v2994
      %v2996 = vrot.slane %v2763, 2
      %v2997 = vsel %vm744, %v2994, %v2996
      %v2998 = vrot.slane %v2746, 2
      %v2999 = vrot.slane %v2610, 2
      %v3000 = vsel %vm744, %v2998, %v2999
      %v3001 = vrot.slane %v2764, 2
      %v3002 = vsel %vm744, %v2999, %v3001
      %v3003 = vrot.slane %v2747, 2
      %v3004 = vrot.slane %v2613, 2
      %v3005 = vsel %vm744, %v3003, %v3004
      %v3006 = vrot.slane %v2765, 2
      %v3007 = vsel %vm744, %v3004, %v3006
      %v3008 = vrot.slane %v2748, 2
      %v3009 = vrot.slane %v2616, 2
      %v3010 = vsel %vm744, %v3008, %v3009
      %v3011 = vrot.slane %v2766, 2
      %v3012 = vsel %vm744, %v3009, %v3011
      %v3013 = vrot.slane %v2749, 2
      %v3014 = vrot.slane %v2619, 2
      %v3015 = vsel %vm744, %v3013, %v3014
      %v3016 = vrot.slane %v2767, 2
      %v3017 = vsel %vm744, %v3014, %v3016
      %v3018 = vrot.slane %v2750, 2
      %v3019 = vrot.slane %v2622, 2
      %v3020 = vsel %vm744, %v3018, %v3019
      %v3021 = vrot.slane %v2768, 2
      %v3022 = vsel %vm744, %v3019, %v3021
      %v3023 = vrot.slane %v2751, 2
      %v3024 = vrot.slane %v2625, 2
      %v3025 = vsel %vm744, %v3023, %v3024
      %v3026 = vrot.slane %v2769, 2
      %v3027 = vsel %vm744, %v3024, %v3026
      %v3028 = vrot.slane %v2752, 2
      %v3029 = vrot.slane %v2628, 2
      %v3030 = vsel %vm744, %v3028, %v3029
      %v3031 = vrot.slane %v2770, 2
      %v3032 = vsel %vm744, %v3029, %v3031
      %v3033 = vrot.slane %v2753, 2
      %v3034 = vrot.slane %v2631, 2
      %v3035 = vsel %vm744, %v3033, %v3034
      %v3036 = vrot.slane %v2771, 2
      %v3037 = vsel %vm744, %v3034, %v3036
      %v3038 = vrot.slane %v2754, 2
      %v3039 = vrot.slane %v2634, 2
      %v3040 = vsel %vm744, %v3038, %v3039
      %v3041 = vrot.slane %v2772, 2
      %v3042 = vsel %vm744, %v3039, %v3041
      %v3043 = vrot.slane %v2755, 2
      %v3044 = vrot.slane %v2637, 2
      %v3045 = vsel %vm744, %v3043, %v3044
      %v3046 = vrot.slane %v2773, 2
      %v3047 = vsel %vm744, %v3044, %v3046
      %v3048 = vrot.slane %v2756, 2
      %v3049 = vrot.slane %v2640, 2
      %v3050 = vsel %vm744, %v3048, %v3049
      %v3051 = vrot.slane %v2774, 2
      %v3052 = vsel %vm744, %v3049, %v3051
      %v3053 = vrot.slane %v2757, 2
      %v3054 = vrot.slane %v2643, 2
      %v3055 = vsel %vm744, %v3053, %v3054
      %v3056 = vrot.slane %v2775, 2
      %v3057 = vsel %vm744, %v3054, %v3056
      %v3058 = vrot.slane %v2758, 2
      %v3059 = vrot.slane %v2646, 2
      %v3060 = vsel %vm744, %v3058, %v3059
      %v3061 = vrot.slane %v2776, 2
      %v3062 = vsel %vm744, %v3059, %v3061
      %v3063 = vrot.slane %v2759, 2
      %v3064 = vrot.slane %v2649, 2
      %v3065 = vsel %vm744, %v3063, %v3064
      %v3066 = vrot.slane %v2777, 2
      %v3067 = vsel %vm744, %v3064, %v3066
      %3068 = vrot.lane.b32.xlu0 %v2990, 16
      %v3069 = vpop.permute.xlu0 %3068
      %3070 = vrot.lane.b32.xlu0 %v2992, 16
      %v3071 = vpop.permute.xlu0 %3070
      %3072 = vrot.lane.b32.xlu0 %v2995, 16
      %v3073 = vpop.permute.xlu0 %3072
      %3074 = vrot.lane.b32.xlu0 %v2997, 16
      %v3075 = vpop.permute.xlu0 %3074
      %3076 = vrot.lane.b32.xlu0 %v3000, 16
      %v3077 = vpop.permute.xlu0 %3076
      %3078 = vrot.lane.b32.xlu0 %v3002, 16
      %v3079 = vpop.permute.xlu0 %3078
      %3080 = vrot.lane.b32.xlu0 %v3005, 16
      %v3081 = vpop.permute.xlu0 %3080
      %3082 = vrot.lane.b32.xlu0 %v3007, 16
      %v3083 = vpop.permute.xlu0 %3082
      %3084 = vrot.lane.b32.xlu0 %v3010, 16
      %v3085 = vpop.permute.xlu0 %3084
      %3086 = vrot.lane.b32.xlu0 %v3012, 16
      %v3087 = vpop.permute.xlu0 %3086
      %3088 = vrot.lane.b32.xlu0 %v3015, 16
      %v3089 = vpop.permute.xlu0 %3088
      %3090 = vrot.lane.b32.xlu0 %v3017, 16
      %v3091 = vpop.permute.xlu0 %3090
      %3092 = vrot.lane.b32.xlu0 %v3020, 16
      %v3093 = vpop.permute.xlu0 %3092
      %3094 = vrot.lane.b32.xlu0 %v3022, 16
      %v3095 = vpop.permute.xlu0 %3094
      %3096 = vrot.lane.b32.xlu0 %v3025, 16
      %v3097 = vpop.permute.xlu0 %3096
      %3098 = vrot.lane.b32.xlu0 %v3027, 16
      %v3099 = vpop.permute.xlu0 %3098
      %3100 = vrot.lane.b32.xlu0 %v3030, 16
      %v3101 = vpop.permute.xlu0 %3100
      %3102 = vrot.lane.b32.xlu0 %v3032, 16
      %v3103 = vpop.permute.xlu0 %3102
      %3104 = vrot.lane.b32.xlu0 %v3035, 16
      %v3105 = vpop.permute.xlu0 %3104
      %3106 = vrot.lane.b32.xlu0 %v3037, 16
      %v3107 = vpop.permute.xlu0 %3106
      %3108 = vrot.lane.b32.xlu0 %v3040, 16
      %v3109 = vpop.permute.xlu0 %3108
      %3110 = vrot.lane.b32.xlu0 %v3042, 16
      %v3111 = vpop.permute.xlu0 %3110
      %3112 = vrot.lane.b32.xlu0 %v3045, 16
      %v3113 = vpop.permute.xlu0 %3112
      %3114 = vrot.lane.b32.xlu0 %v3047, 16
      %v3115 = vpop.permute.xlu0 %3114
      %3116 = vrot.lane.b32.xlu0 %v3050, 16
      %v3117 = vpop.permute.xlu0 %3116
      %3118 = vrot.lane.b32.xlu0 %v3052, 16
      %v3119 = vpop.permute.xlu0 %3118
      %3120 = vrot.lane.b32.xlu0 %v3055, 16
      %v3121 = vpop.permute.xlu0 %3120
      %3122 = vrot.lane.b32.xlu0 %v3057, 16
      %v3123 = vpop.permute.xlu0 %3122
      %3124 = vrot.lane.b32.xlu0 %v3060, 16
      %v3125 = vpop.permute.xlu0 %3124
      %3126 = vrot.lane.b32.xlu0 %v3062, 16
      %v3127 = vpop.permute.xlu0 %3126
      %3128 = vrot.lane.b32.xlu0 %v3065, 16
      %v3129 = vpop.permute.xlu0 %3128
      %3130 = vrot.lane.b32.xlu0 %v3067, 16
      %v3131 = vpop.permute.xlu0 %3130
      %3165 = vrot.lane.b32.xlu0 %v2745, 24
      %v3166 = vpop.permute.xlu0 %3165
      %3167 = vrot.lane.b32.xlu0 %v2607, 24
      %v3168 = vpop.permute.xlu0 %3167
      %3169 = vrot.lane.b32.xlu0 %v2746, 24
      %v3170 = vpop.permute.xlu0 %3169
      %3171 = vrot.lane.b32.xlu0 %v2610, 24
      %v3172 = vpop.permute.xlu0 %3171
      %3173 = vrot.lane.b32.xlu0 %v2747, 24
      %v3174 = vpop.permute.xlu0 %3173
      %3175 = vrot.lane.b32.xlu0 %v2613, 24
      %v3176 = vpop.permute.xlu0 %3175
      %3177 = vrot.lane.b32.xlu0 %v2748, 24
      %v3178 = vpop.permute.xlu0 %3177
      %3179 = vrot.lane.b32.xlu0 %v2616, 24
      %v3180 = vpop.permute.xlu0 %3179
      %3181 = vrot.lane.b32.xlu0 %v2749, 24
      %v3182 = vpop.permute.xlu0 %3181
      %3183 = vrot.lane.b32.xlu0 %v2619, 24
      %v3184 = vpop.permute.xlu0 %3183
      %3185 = vrot.lane.b32.xlu0 %v2750, 24
      %v3186 = vpop.permute.xlu0 %3185
      %3187 = vrot.lane.b32.xlu0 %v2622, 24
      %v3188 = vpop.permute.xlu0 %3187
      %3189 = vrot.lane.b32.xlu0 %v2751, 24
      %v3190 = vpop.permute.xlu0 %3189
      %3191 = vrot.lane.b32.xlu0 %v2625, 24
      %v3192 = vpop.permute.xlu0 %3191
      %3193 = vrot.lane.b32.xlu0 %v2752, 24
      %v3194 = vpop.permute.xlu0 %3193
      %3195 = vrot.lane.b32.xlu0 %v2628, 24
      %v3196 = vpop.permute.xlu0 %3195
      %3197 = vrot.lane.b32.xlu0 %v2753, 24
      %v3198 = vpop.permute.xlu0 %3197
      %3199 = vrot.lane.b32.xlu0 %v2631, 24
      %v3200 = vpop.permute.xlu0 %3199
      %3201 = vrot.lane.b32.xlu0 %v2754, 24
      %v3202 = vpop.permute.xlu0 %3201
      %3203 = vrot.lane.b32.xlu0 %v2634, 24
      %v3204 = vpop.permute.xlu0 %3203
      %3205 = vrot.lane.b32.xlu0 %v2755, 24
      %v3206 = vpop.permute.xlu0 %3205
      %3207 = vrot.lane.b32.xlu0 %v2637, 24
      %v3208 = vpop.permute.xlu0 %3207
      %3209 = vrot.lane.b32.xlu0 %v2756, 24
      %v3210 = vpop.permute.xlu0 %3209
      %3211 = vrot.lane.b32.xlu0 %v2640, 24
      %v3212 = vpop.permute.xlu0 %3211
      %3213 = vrot.lane.b32.xlu0 %v2757, 24
      %v3214 = vpop.permute.xlu0 %3213
      %3215 = vrot.lane.b32.xlu0 %v2643, 24
      %v3216 = vpop.permute.xlu0 %3215
      %3217 = vrot.lane.b32.xlu0 %v2758, 24
      %v3218 = vpop.permute.xlu0 %3217
      %3219 = vrot.lane.b32.xlu0 %v2646, 24
      %v3220 = vpop.permute.xlu0 %3219
      %3221 = vrot.lane.b32.xlu0 %v2759, 24
      %v3222 = vpop.permute.xlu0 %3221
      %3223 = vrot.lane.b32.xlu0 %v2649, 24
      %v3224 = vpop.permute.xlu0 %3223
      %3225 = vrot.lane.b32.xlu0 %v2760, 24
      %v3226 = vpop.permute.xlu0 %3225
      %3227 = vrot.lane.b32.xlu0 %v2652, 24
      %v3228 = vpop.permute.xlu0 %3227
      %v3262 = vrot.slane %v2760, 1
      %v3263 = vrot.slane %v2652, 1
      %v3264 = vsel %vm567, %v3262, %v3263
      %v3265 = vrot.slane %v2778, 1
      %v3266 = vsel %vm567, %v3263, %v3265
      %3267 = vrot.lane.b32.xlu0 %v2819, 32
      %v3268 = vpop.permute.xlu0 %3267
      %3269 = vrot.lane.b32.xlu0 %v2821, 32
      %v3270 = vpop.permute.xlu0 %3269
      %3271 = vrot.lane.b32.xlu0 %v2824, 32
      %v3272 = vpop.permute.xlu0 %3271
      %3273 = vrot.lane.b32.xlu0 %v2826, 32
      %v3274 = vpop.permute.xlu0 %3273
      %3275 = vrot.lane.b32.xlu0 %v2829, 32
      %v3276 = vpop.permute.xlu0 %3275
      %3277 = vrot.lane.b32.xlu0 %v2831, 32
      %v3278 = vpop.permute.xlu0 %3277
      %3279 = vrot.lane.b32.xlu0 %v2834, 32
      %v3280 = vpop.permute.xlu0 %3279
      %3281 = vrot.lane.b32.xlu0 %v2836, 32
      %v3282 = vpop.permute.xlu0 %3281
      %3283 = vrot.lane.b32.xlu0 %v2839, 32
      %v3284 = vpop.permute.xlu0 %3283
      %3285 = vrot.lane.b32.xlu0 %v2841, 32
      %v3286 = vpop.permute.xlu0 %3285
      %3287 = vrot.lane.b32.xlu0 %v2844, 32
      %v3288 = vpop.permute.xlu0 %3287
      %3289 = vrot.lane.b32.xlu0 %v2846, 32
      %v3290 = vpop.permute.xlu0 %3289
      %3291 = vrot.lane.b32.xlu0 %v2849, 32
      %v3292 = vpop.permute.xlu0 %3291
      %3293 = vrot.lane.b32.xlu0 %v2851, 32
      %v3294 = vpop.permute.xlu0 %3293
      %3295 = vrot.lane.b32.xlu0 %v2854, 32
      %v3296 = vpop.permute.xlu0 %3295
      %3297 = vrot.lane.b32.xlu0 %v2856, 32
      %v3298 = vpop.permute.xlu0 %3297
      %3299 = vrot.lane.b32.xlu0 %v2859, 32
      %v3300 = vpop.permute.xlu0 %3299
      %3301 = vrot.lane.b32.xlu0 %v2861, 32
      %v3302 = vpop.permute.xlu0 %3301
      %3303 = vrot.lane.b32.xlu0 %v2864, 32
      %v3304 = vpop.permute.xlu0 %3303
      %3305 = vrot.lane.b32.xlu0 %v2866, 32
      %v3306 = vpop.permute.xlu0 %3305
      %3307 = vrot.lane.b32.xlu0 %v2869, 32
      %v3308 = vpop.permute.xlu0 %3307
      %3309 = vrot.lane.b32.xlu0 %v2871, 32
      %v3310 = vpop.permute.xlu0 %3309
      %3311 = vrot.lane.b32.xlu0 %v2874, 32
      %v3312 = vpop.permute.xlu0 %3311
      %3313 = vrot.lane.b32.xlu0 %v2876, 32
      %v3314 = vpop.permute.xlu0 %3313
      %3315 = vrot.lane.b32.xlu0 %v2879, 32
      %v3316 = vpop.permute.xlu0 %3315
      %3317 = vrot.lane.b32.xlu0 %v2881, 32
      %v3318 = vpop.permute.xlu0 %3317
      %3319 = vrot.lane.b32.xlu0 %v2884, 32
      %v3320 = vpop.permute.xlu0 %3319
      %3321 = vrot.lane.b32.xlu0 %v2886, 32
      %v3322 = vpop.permute.xlu0 %3321
      %3323 = vrot.lane.b32.xlu0 %v2889, 32
      %v3324 = vpop.permute.xlu0 %3323
      %3325 = vrot.lane.b32.xlu0 %v2891, 32
      %v3326 = vpop.permute.xlu0 %3325
      %3327 = vrot.lane.b32.xlu0 %v3264, 32
      %v3328 = vpop.permute.xlu0 %3327
      %3329 = vrot.lane.b32.xlu0 %v3266, 32
      %v3330 = vpop.permute.xlu0 %3329
      %v3363 = vrot.slane %v2760, 2
      %v3364 = vrot.slane %v2652, 2
      %v3365 = vsel %vm744, %v3363, %v3364
      %v3366 = vrot.slane %v2778, 2
      %v3367 = vsel %vm744, %v3364, %v3366
      %3368 = vrot.lane.b32.xlu0 %v2995, 40
      %v3369 = vpop.permute.xlu0 %3368
      %3370 = vrot.lane.b32.xlu0 %v2997, 40
      %v3371 = vpop.permute.xlu0 %3370
      %3372 = vrot.lane.b32.xlu0 %v3000, 40
      %v3373 = vpop.permute.xlu0 %3372
      %3374 = vrot.lane.b32.xlu0 %v3002, 40
      %v3375 = vpop.permute.xlu0 %3374
      %3376 = vrot.lane.b32.xlu0 %v3005, 40
      %v3377 = vpop.permute.xlu0 %3376
      %3378 = vrot.lane.b32.xlu0 %v3007, 40
      %v3379 = vpop.permute.xlu0 %3378
      %3380 = vrot.lane.b32.xlu0 %v3010, 40
      %v3381 = vpop.permute.xlu0 %3380
      %3382 = vrot.lane.b32.xlu0 %v3012, 40
      %v3383 = vpop.permute.xlu0 %3382
      %3384 = vrot.lane.b32.xlu0 %v3015, 40
      %v3385 = vpop.permute.xlu0 %3384
      %3386 = vrot.lane.b32.xlu0 %v3017, 40
      %v3387 = vpop.permute.xlu0 %3386
      %3388 = vrot.lane.b32.xlu0 %v3020, 40
      %v3389 = vpop.permute.xlu0 %3388
      %3390 = vrot.lane.b32.xlu0 %v3022, 40
      %v3391 = vpop.permute.xlu0 %3390
      %3392 = vrot.lane.b32.xlu0 %v3025, 40
      %v3393 = vpop.permute.xlu0 %3392
      %3394 = vrot.lane.b32.xlu0 %v3027, 40
      %v3395 = vpop.permute.xlu0 %3394
      %3396 = vrot.lane.b32.xlu0 %v3030, 40
      %v3397 = vpop.permute.xlu0 %3396
      %3398 = vrot.lane.b32.xlu0 %v3032, 40
      %v3399 = vpop.permute.xlu0 %3398
      %3400 = vrot.lane.b32.xlu0 %v3035, 40
      %v3401 = vpop.permute.xlu0 %3400
      %3402 = vrot.lane.b32.xlu0 %v3037, 40
      %v3403 = vpop.permute.xlu0 %3402
      %3404 = vrot.lane.b32.xlu0 %v3040, 40
      %v3405 = vpop.permute.xlu0 %3404
      %3406 = vrot.lane.b32.xlu0 %v3042, 40
      %v3407 = vpop.permute.xlu0 %3406
      %3408 = vrot.lane.b32.xlu0 %v3045, 40
      %v3409 = vpop.permute.xlu0 %3408
      %3410 = vrot.lane.b32.xlu0 %v3047, 40
      %v3411 = vpop.permute.xlu0 %3410
      %3412 = vrot.lane.b32.xlu0 %v3050, 40
      %v3413 = vpop.permute.xlu0 %3412
      %3414 = vrot.lane.b32.xlu0 %v3052, 40
      %v3415 = vpop.permute.xlu0 %3414
      %3416 = vrot.lane.b32.xlu0 %v3055, 40
      %v3417 = vpop.permute.xlu0 %3416
      %3418 = vrot.lane.b32.xlu0 %v3057, 40
      %v3419 = vpop.permute.xlu0 %3418
      %3420 = vrot.lane.b32.xlu0 %v3060, 40
      %v3421 = vpop.permute.xlu0 %3420
      %3422 = vrot.lane.b32.xlu0 %v3062, 40
      %v3423 = vpop.permute.xlu0 %3422
      %3424 = vrot.lane.b32.xlu0 %v3065, 40
      %v3425 = vpop.permute.xlu0 %3424
      %3426 = vrot.lane.b32.xlu0 %v3067, 40
      %v3427 = vpop.permute.xlu0 %3426
      %3428 = vrot.lane.b32.xlu0 %v3365, 40
      %v3429 = vpop.permute.xlu0 %3428
      %3430 = vrot.lane.b32.xlu0 %v3367, 40
      %v3431 = vpop.permute.xlu0 %3430
      %3465 = vrot.lane.b32.xlu0 %v2746, 48
      %v3466 = vpop.permute.xlu0 %3465
      %3467 = vrot.lane.b32.xlu0 %v2610, 48
      %v3468 = vpop.permute.xlu0 %3467
      %3469 = vrot.lane.b32.xlu0 %v2747, 48
      %v3470 = vpop.permute.xlu0 %3469
      %3471 = vrot.lane.b32.xlu0 %v2613, 48
      %v3472 = vpop.permute.xlu0 %3471
      %3473 = vrot.lane.b32.xlu0 %v2748, 48
      %v3474 = vpop.permute.xlu0 %3473
      %3475 = vrot.lane.b32.xlu0 %v2616, 48
      %v3476 = vpop.permute.xlu0 %3475
      %3477 = vrot.lane.b32.xlu0 %v2749, 48
      %v3478 = vpop.permute.xlu0 %3477
      %3479 = vrot.lane.b32.xlu0 %v2619, 48
      %v3480 = vpop.permute.xlu0 %3479
      %3481 = vrot.lane.b32.xlu0 %v2750, 48
      %v3482 = vpop.permute.xlu0 %3481
      %3483 = vrot.lane.b32.xlu0 %v2622, 48
      %v3484 = vpop.permute.xlu0 %3483
      %3485 = vrot.lane.b32.xlu0 %v2751, 48
      %v3486 = vpop.permute.xlu0 %3485
      %3487 = vrot.lane.b32.xlu0 %v2625, 48
      %v3488 = vpop.permute.xlu0 %3487
      %3489 = vrot.lane.b32.xlu0 %v2752, 48
      %v3490 = vpop.permute.xlu0 %3489
      %3491 = vrot.lane.b32.xlu0 %v2628, 48
      %v3492 = vpop.permute.xlu0 %3491
      %3493 = vrot.lane.b32.xlu0 %v2753, 48
      %v3494 = vpop.permute.xlu0 %3493
      %3495 = vrot.lane.b32.xlu0 %v2631, 48
      %v3496 = vpop.permute.xlu0 %3495
      %3497 = vrot.lane.b32.xlu0 %v2754, 48
      %v3498 = vpop.permute.xlu0 %3497
      %3499 = vrot.lane.b32.xlu0 %v2634, 48
      %v3500 = vpop.permute.xlu0 %3499
      %3501 = vrot.lane.b32.xlu0 %v2755, 48
      %v3502 = vpop.permute.xlu0 %3501
      %3503 = vrot.lane.b32.xlu0 %v2637, 48
      %v3504 = vpop.permute.xlu0 %3503
      %3505 = vrot.lane.b32.xlu0 %v2756, 48
      %v3506 = vpop.permute.xlu0 %3505
      %3507 = vrot.lane.b32.xlu0 %v2640, 48
      %v3508 = vpop.permute.xlu0 %3507
      %3509 = vrot.lane.b32.xlu0 %v2757, 48
      %v3510 = vpop.permute.xlu0 %3509
      %3511 = vrot.lane.b32.xlu0 %v2643, 48
      %v3512 = vpop.permute.xlu0 %3511
      %3513 = vrot.lane.b32.xlu0 %v2758, 48
      %v3514 = vpop.permute.xlu0 %3513
      %3515 = vrot.lane.b32.xlu0 %v2646, 48
      %v3516 = vpop.permute.xlu0 %3515
      %3517 = vrot.lane.b32.xlu0 %v2759, 48
      %v3518 = vpop.permute.xlu0 %3517
      %3519 = vrot.lane.b32.xlu0 %v2649, 48
      %v3520 = vpop.permute.xlu0 %3519
      %3521 = vrot.lane.b32.xlu0 %v2760, 48
      %v3522 = vpop.permute.xlu0 %3521
      %3523 = vrot.lane.b32.xlu0 %v2652, 48
      %v3524 = vpop.permute.xlu0 %3523
      %3525 = vrot.lane.b32.xlu0 %v2761, 48
      %v3526 = vpop.permute.xlu0 %3525
      %3527 = vrot.lane.b32.xlu0 %v2655, 48
      %v3528 = vpop.permute.xlu0 %3527
      %v3562 = vrot.slane %v2761, 1
      %v3563 = vrot.slane %v2655, 1
      %v3564 = vsel %vm567, %v3562, %v3563
      %v3565 = vrot.slane %v2779, 1
      %v3566 = vsel %vm567, %v3563, %v3565
      %3567 = vrot.lane.b32.xlu0 %v2824, 56
      %v3568 = vpop.permute.xlu0 %3567
      %3569 = vrot.lane.b32.xlu0 %v2826, 56
      %v3570 = vpop.permute.xlu0 %3569
      %3571 = vrot.lane.b32.xlu0 %v2829, 56
      %v3572 = vpop.permute.xlu0 %3571
      %3573 = vrot.lane.b32.xlu0 %v2831, 56
      %v3574 = vpop.permute.xlu0 %3573
      %3575 = vrot.lane.b32.xlu0 %v2834, 56
      %v3576 = vpop.permute.xlu0 %3575
      %3577 = vrot.lane.b32.xlu0 %v2836, 56
      %v3578 = vpop.permute.xlu0 %3577
      %3579 = vrot.lane.b32.xlu0 %v2839, 56
      %v3580 = vpop.permute.xlu0 %3579
      %3581 = vrot.lane.b32.xlu0 %v2841, 56
      %v3582 = vpop.permute.xlu0 %3581
      %3583 = vrot.lane.b32.xlu0 %v2844, 56
      %v3584 = vpop.permute.xlu0 %3583
      %3585 = vrot.lane.b32.xlu0 %v2846, 56
      %v3586 = vpop.permute.xlu0 %3585
      %3587 = vrot.lane.b32.xlu0 %v2849, 56
      %v3588 = vpop.permute.xlu0 %3587
      %3589 = vrot.lane.b32.xlu0 %v2851, 56
      %v3590 = vpop.permute.xlu0 %3589
      %3591 = vrot.lane.b32.xlu0 %v2854, 56
      %v3592 = vpop.permute.xlu0 %3591
      %3593 = vrot.lane.b32.xlu0 %v2856, 56
      %v3594 = vpop.permute.xlu0 %3593
      %3595 = vrot.lane.b32.xlu0 %v2859, 56
      %v3596 = vpop.permute.xlu0 %3595
      %3597 = vrot.lane.b32.xlu0 %v2861, 56
      %v3598 = vpop.permute.xlu0 %3597
      %3599 = vrot.lane.b32.xlu0 %v2864, 56
      %v3600 = vpop.permute.xlu0 %3599
      %3601 = vrot.lane.b32.xlu0 %v2866, 56
      %v3602 = vpop.permute.xlu0 %3601
      %3603 = vrot.lane.b32.xlu0 %v2869, 56
      %v3604 = vpop.permute.xlu0 %3603
      %3605 = vrot.lane.b32.xlu0 %v2871, 56
      %v3606 = vpop.permute.xlu0 %3605
      %3607 = vrot.lane.b32.xlu0 %v2874, 56
      %v3608 = vpop.permute.xlu0 %3607
      %3609 = vrot.lane.b32.xlu0 %v2876, 56
      %v3610 = vpop.permute.xlu0 %3609
      %3611 = vrot.lane.b32.xlu0 %v2879, 56
      %v3612 = vpop.permute.xlu0 %3611
      %3613 = vrot.lane.b32.xlu0 %v2881, 56
      %v3614 = vpop.permute.xlu0 %3613
      %3615 = vrot.lane.b32.xlu0 %v2884, 56
      %v3616 = vpop.permute.xlu0 %3615
      %3617 = vrot.lane.b32.xlu0 %v2886, 56
      %v3618 = vpop.permute.xlu0 %3617
      %3619 = vrot.lane.b32.xlu0 %v2889, 56
      %v3620 = vpop.permute.xlu0 %3619
      %3621 = vrot.lane.b32.xlu0 %v2891, 56
      %v3622 = vpop.permute.xlu0 %3621
      %3623 = vrot.lane.b32.xlu0 %v3264, 56
      %v3624 = vpop.permute.xlu0 %3623
      %3625 = vrot.lane.b32.xlu0 %v3266, 56
      %v3626 = vpop.permute.xlu0 %3625
      %3627 = vrot.lane.b32.xlu0 %v3564, 56
      %v3628 = vpop.permute.xlu0 %3627
      %3629 = vrot.lane.b32.xlu0 %v3566, 56
      %v3630 = vpop.permute.xlu0 %3629
      %v3663 = vrot.slane %v2761, 2
      %v3664 = vrot.slane %v2655, 2
      %v3665 = vsel %vm744, %v3663, %v3664
      %v3666 = vrot.slane %v2779, 2
      %v3667 = vsel %vm744, %v3664, %v3666
      %3668 = vrot.lane.b32.xlu0 %v3000, 64
      %v3669 = vpop.permute.xlu0 %3668
      %3670 = vrot.lane.b32.xlu0 %v3002, 64
      %v3671 = vpop.permute.xlu0 %3670
      %3672 = vrot.lane.b32.xlu0 %v3005, 64
      %v3673 = vpop.permute.xlu0 %3672
      %3674 = vrot.lane.b32.xlu0 %v3007, 64
      %v3675 = vpop.permute.xlu0 %3674
      %3676 = vrot.lane.b32.xlu0 %v3010, 64
      %v3677 = vpop.permute.xlu0 %3676
      %3678 = vrot.lane.b32.xlu0 %v3012, 64
      %v3679 = vpop.permute.xlu0 %3678
      %3680 = vrot.lane.b32.xlu0 %v3015, 64
      %v3681 = vpop.permute.xlu0 %3680
      %3682 = vrot.lane.b32.xlu0 %v3017, 64
      %v3683 = vpop.permute.xlu0 %3682
      %3684 = vrot.lane.b32.xlu0 %v3020, 64
      %v3685 = vpop.permute.xlu0 %3684
      %3686 = vrot.lane.b32.xlu0 %v3022, 64
      %v3687 = vpop.permute.xlu0 %3686
      %3688 = vrot.lane.b32.xlu0 %v3025, 64
      %v3689 = vpop.permute.xlu0 %3688
      %3690 = vrot.lane.b32.xlu0 %v3027, 64
      %v3691 = vpop.permute.xlu0 %3690
      %3692 = vrot.lane.b32.xlu0 %v3030, 64
      %v3693 = vpop.permute.xlu0 %3692
      %3694 = vrot.lane.b32.xlu0 %v3032, 64
      %v3695 = vpop.permute.xlu0 %3694
      %3696 = vrot.lane.b32.xlu0 %v3035, 64
      %v3697 = vpop.permute.xlu0 %3696
      %3698 = vrot.lane.b32.xlu0 %v3037, 64
      %v3699 = vpop.permute.xlu0 %3698
      %3700 = vrot.lane.b32.xlu0 %v3040, 64
      %v3701 = vpop.permute.xlu0 %3700
      %3702 = vrot.lane.b32.xlu0 %v3042, 64
      %v3703 = vpop.permute.xlu0 %3702
      %3704 = vrot.lane.b32.xlu0 %v3045, 64
      %v3705 = vpop.permute.xlu0 %3704
      %3706 = vrot.lane.b32.xlu0 %v3047, 64
      %v3707 = vpop.permute.xlu0 %3706
      %3708 = vrot.lane.b32.xlu0 %v3050, 64
      %v3709 = vpop.permute.xlu0 %3708
      %3710 = vrot.lane.b32.xlu0 %v3052, 64
      %v3711 = vpop.permute.xlu0 %3710
      %3712 = vrot.lane.b32.xlu0 %v3055, 64
      %v3713 = vpop.permute.xlu0 %3712
      %3714 = vrot.lane.b32.xlu0 %v3057, 64
      %v3715 = vpop.permute.xlu0 %3714
      %3716 = vrot.lane.b32.xlu0 %v3060, 64
      %v3717 = vpop.permute.xlu0 %3716
      %3718 = vrot.lane.b32.xlu0 %v3062, 64
      %v3719 = vpop.permute.xlu0 %3718
      %3720 = vrot.lane.b32.xlu0 %v3065, 64
      %v3721 = vpop.permute.xlu0 %3720
      %3722 = vrot.lane.b32.xlu0 %v3067, 64
      %v3723 = vpop.permute.xlu0 %3722
      %3724 = vrot.lane.b32.xlu0 %v3365, 64
      %v3725 = vpop.permute.xlu0 %3724
      %3726 = vrot.lane.b32.xlu0 %v3367, 64
      %v3727 = vpop.permute.xlu0 %3726
      %3728 = vrot.lane.b32.xlu0 %v3665, 64
      %v3729 = vpop.permute.xlu0 %3728
      %3730 = vrot.lane.b32.xlu0 %v3667, 64
      %v3731 = vpop.permute.xlu0 %3730
      %v3764 = vsel %vm204, %v2744, %v2893
      %v3765 = vsel %vm204, %v2604, %v2895
      %v3766 = vsel %vm204, %v2745, %v2897
      %v3767 = vsel %vm204, %v2607, %v2899
      %v3768 = vsel %vm204, %v2746, %v2901
      %v3769 = vsel %vm204, %v2610, %v2903
      %v3770 = vsel %vm204, %v2747, %v2905
      %v3771 = vsel %vm204, %v2613, %v2907
      %v3772 = vsel %vm204, %v2748, %v2909
      %v3773 = vsel %vm204, %v2616, %v2911
      %v3774 = vsel %vm204, %v2749, %v2913
      %v3775 = vsel %vm204, %v2619, %v2915
      %v3776 = vsel %vm204, %v2750, %v2917
      %v3777 = vsel %vm204, %v2622, %v2919
      %v3778 = vsel %vm204, %v2751, %v2921
      %v3779 = vsel %vm204, %v2625, %v2923
      %v3780 = vsel %vm204, %v2752, %v2925
      %v3781 = vsel %vm204, %v2628, %v2927
      %v3782 = vsel %vm204, %v2753, %v2929
      %v3783 = vsel %vm204, %v2631, %v2931
      %v3784 = vsel %vm204, %v2754, %v2933
      %v3785 = vsel %vm204, %v2634, %v2935
      %v3786 = vsel %vm204, %v2755, %v2937
      %v3787 = vsel %vm204, %v2637, %v2939
      %v3788 = vsel %vm204, %v2756, %v2941
      %v3789 = vsel %vm204, %v2640, %v2943
      %v3790 = vsel %vm204, %v2757, %v2945
      %v3791 = vsel %vm204, %v2643, %v2947
      %v3792 = vsel %vm204, %v2758, %v2949
      %v3793 = vsel %vm204, %v2646, %v2951
      %v3794 = vsel %vm204, %v2759, %v2953
      %v3795 = vsel %vm204, %v2649, %v2955
      %v3796 = vsel %vm1553, %v3764, %v3069
      %v3797 = vsel %vm1553, %v3765, %v3071
      %v3798 = vsel %vm1553, %v3766, %v3073
      %v3799 = vsel %vm1553, %v3767, %v3075
      %v3800 = vsel %vm1553, %v3768, %v3077
      %v3801 = vsel %vm1553, %v3769, %v3079
      %v3802 = vsel %vm1553, %v3770, %v3081
      %v3803 = vsel %vm1553, %v3771, %v3083
      %v3804 = vsel %vm1553, %v3772, %v3085
      %v3805 = vsel %vm1553, %v3773, %v3087
      %v3806 = vsel %vm1553, %v3774, %v3089
      %v3807 = vsel %vm1553, %v3775, %v3091
      %v3808 = vsel %vm1553, %v3776, %v3093
      %v3809 = vsel %vm1553, %v3777, %v3095
      %v3810 = vsel %vm1553, %v3778, %v3097
      %v3811 = vsel %vm1553, %v3779, %v3099
      %v3812 = vsel %vm1553, %v3780, %v3101
      %v3813 = vsel %vm1553, %v3781, %v3103
      %v3814 = vsel %vm1553, %v3782, %v3105
      %v3815 = vsel %vm1553, %v3783, %v3107
      %v3816 = vsel %vm1553, %v3784, %v3109
      %v3817 = vsel %vm1553, %v3785, %v3111
      %v3818 = vsel %vm1553, %v3786, %v3113
      %v3819 = vsel %vm1553, %v3787, %v3115
      %v3820 = vsel %vm1553, %v3788, %v3117
      %v3821 = vsel %vm1553, %v3789, %v3119
      %v3822 = vsel %vm1553, %v3790, %v3121
      %v3823 = vsel %vm1553, %v3791, %v3123
      %v3824 = vsel %vm1553, %v3792, %v3125
      %v3825 = vsel %vm1553, %v3793, %v3127
      %v3826 = vsel %vm1553, %v3794, %v3129
      %v3827 = vsel %vm1553, %v3795, %v3131
      %v3828 = vsel %vm1586, %v3796, %v3166
      %v3829 = vsel %vm1586, %v3797, %v3168
      %v3830 = vsel %vm1586, %v3798, %v3170
      %v3831 = vsel %vm1586, %v3799, %v3172
      %v3832 = vsel %vm1586, %v3800, %v3174
      %v3833 = vsel %vm1586, %v3801, %v3176
      %v3834 = vsel %vm1586, %v3802, %v3178
      %v3835 = vsel %vm1586, %v3803, %v3180
      %v3836 = vsel %vm1586, %v3804, %v3182
      %v3837 = vsel %vm1586, %v3805, %v3184
      %v3838 = vsel %vm1586, %v3806, %v3186
      %v3839 = vsel %vm1586, %v3807, %v3188
      %v3840 = vsel %vm1586, %v3808, %v3190
      %v3841 = vsel %vm1586, %v3809, %v3192
      %v3842 = vsel %vm1586, %v3810, %v3194
      %v3843 = vsel %vm1586, %v3811, %v3196
      %v3844 = vsel %vm1586, %v3812, %v3198
      %v3845 = vsel %vm1586, %v3813, %v3200
      %v3846 = vsel %vm1586, %v3814, %v3202
      %v3847 = vsel %vm1586, %v3815, %v3204
      %v3848 = vsel %vm1586, %v3816, %v3206
      %v3849 = vsel %vm1586, %v3817, %v3208
      %v3850 = vsel %vm1586, %v3818, %v3210
      %v3851 = vsel %vm1586, %v3819, %v3212
      %v3852 = vsel %vm1586, %v3820, %v3214
      %v3853 = vsel %vm1586, %v3821, %v3216
      %v3854 = vsel %vm1586, %v3822, %v3218
      %v3855 = vsel %vm1586, %v3823, %v3220
      %v3856 = vsel %vm1586, %v3824, %v3222
      %v3857 = vsel %vm1586, %v3825, %v3224
      %v3858 = vsel %vm1586, %v3826, %v3226
      %v3859 = vsel %vm1586, %v3827, %v3228
      %v3860 = vsel %vm1619, %v3828, %v3268
      %v3861 = vsel %vm1619, %v3829, %v3270
      %v3862 = vsel %vm1619, %v3830, %v3272
      %v3863 = vsel %vm1619, %v3831, %v3274
      %v3864 = vsel %vm1619, %v3832, %v3276
      %v3865 = vsel %vm1619, %v3833, %v3278
      %v3866 = vsel %vm1619, %v3834, %v3280
      %v3867 = vsel %vm1619, %v3835, %v3282
      %v3868 = vsel %vm1619, %v3836, %v3284
      %v3869 = vsel %vm1619, %v3837, %v3286
      %v3870 = vsel %vm1619, %v3838, %v3288
      %v3871 = vsel %vm1619, %v3839, %v3290
      %v3872 = vsel %vm1619, %v3840, %v3292
      %v3873 = vsel %vm1619, %v3841, %v3294
      %v3874 = vsel %vm1619, %v3842, %v3296
      %v3875 = vsel %vm1619, %v3843, %v3298
      %v3876 = vsel %vm1619, %v3844, %v3300
      %v3877 = vsel %vm1619, %v3845, %v3302
      %v3878 = vsel %vm1619, %v3846, %v3304
      %v3879 = vsel %vm1619, %v3847, %v3306
      %v3880 = vsel %vm1619, %v3848, %v3308
      %v3881 = vsel %vm1619, %v3849, %v3310
      %v3882 = vsel %vm1619, %v3850, %v3312
      %v3883 = vsel %vm1619, %v3851, %v3314
      %v3884 = vsel %vm1619, %v3852, %v3316
      %v3885 = vsel %vm1619, %v3853, %v3318
      %v3886 = vsel %vm1619, %v3854, %v3320
      %v3887 = vsel %vm1619, %v3855, %v3322
      %v3888 = vsel %vm1619, %v3856, %v3324
      %v3889 = vsel %vm1619, %v3857, %v3326
      %v3890 = vsel %vm1619, %v3858, %v3328
      %v3891 = vsel %vm1619, %v3859, %v3330
      %v3892 = vsel %vm1652, %v3860, %v3369
      %v3893 = vsel %vm1652, %v3861, %v3371
      %v3894 = vsel %vm1652, %v3862, %v3373
      %v3895 = vsel %vm1652, %v3863, %v3375
      %v3896 = vsel %vm1652, %v3864, %v3377
      %v3897 = vsel %vm1652, %v3865, %v3379
      %v3898 = vsel %vm1652, %v3866, %v3381
      %v3899 = vsel %vm1652, %v3867, %v3383
      %v3900 = vsel %vm1652, %v3868, %v3385
      %v3901 = vsel %vm1652, %v3869, %v3387
      %v3902 = vsel %vm1652, %v3870, %v3389
      %v3903 = vsel %vm1652, %v3871, %v3391
      %v3904 = vsel %vm1652, %v3872, %v3393
      %v3905 = vsel %vm1652, %v3873, %v3395
      %v3906 = vsel %vm1652, %v3874, %v3397
      %v3907 = vsel %vm1652, %v3875, %v3399
      %v3908 = vsel %vm1652, %v3876, %v3401
      %v3909 = vsel %vm1652, %v3877, %v3403
      %v3910 = vsel %vm1652, %v3878, %v3405
      %v3911 = vsel %vm1652, %v3879, %v3407
      %v3912 = vsel %vm1652, %v3880, %v3409
      %v3913 = vsel %vm1652, %v3881, %v3411
      %v3914 = vsel %vm1652, %v3882, %v3413
      %v3915 = vsel %vm1652, %v3883, %v3415
      %v3916 = vsel %vm1652, %v3884, %v3417
      %v3917 = vsel %vm1652, %v3885, %v3419
      %v3918 = vsel %vm1652, %v3886, %v3421
      %v3919 = vsel %vm1652, %v3887, %v3423
      %v3920 = vsel %vm1652, %v3888, %v3425
      %v3921 = vsel %vm1652, %v3889, %v3427
      %v3922 = vsel %vm1652, %v3890, %v3429
      %v3923 = vsel %vm1652, %v3891, %v3431
      %v3924 = vsel %vm1685, %v3892, %v3466
      %v3925 = vsel %vm1685, %v3893, %v3468
      %v3926 = vsel %vm1685, %v3894, %v3470
      %v3927 = vsel %vm1685, %v3895, %v3472
      %v3928 = vsel %vm1685, %v3896, %v3474
      %v3929 = vsel %vm1685, %v3897, %v3476
      %v3930 = vsel %vm1685, %v3898, %v3478
      %v3931 = vsel %vm1685, %v3899, %v3480
      %v3932 = vsel %vm1685, %v3900, %v3482
      %v3933 = vsel %vm1685, %v3901, %v3484
      %v3934 = vsel %vm1685, %v3902, %v3486
      %v3935 = vsel %vm1685, %v3903, %v3488
      %v3936 = vsel %vm1685, %v3904, %v3490
      %v3937 = vsel %vm1685, %v3905, %v3492
      %v3938 = vsel %vm1685, %v3906, %v3494
      %v3939 = vsel %vm1685, %v3907, %v3496
      %v3940 = vsel %vm1685, %v3908, %v3498
      %v3941 = vsel %vm1685, %v3909, %v3500
      %v3942 = vsel %vm1685, %v3910, %v3502
      %v3943 = vsel %vm1685, %v3911, %v3504
      %v3944 = vsel %vm1685, %v3912, %v3506
      %v3945 = vsel %vm1685, %v3913, %v3508
      %v3946 = vsel %vm1685, %v3914, %v3510
      %v3947 = vsel %vm1685, %v3915, %v3512
      %v3948 = vsel %vm1685, %v3916, %v3514
      %v3949 = vsel %vm1685, %v3917, %v3516
      %v3950 = vsel %vm1685, %v3918, %v3518
      %v3951 = vsel %vm1685, %v3919, %v3520
      %v3952 = vsel %vm1685, %v3920, %v3522
      %v3953 = vsel %vm1685, %v3921, %v3524
      %v3954 = vsel %vm1685, %v3922, %v3526
      %v3955 = vsel %vm1685, %v3923, %v3528
      %v3956 = vsel %vm1718, %v3924, %v3568
      %v3957 = vsel %vm1718, %v3925, %v3570
      %v3958 = vsel %vm1718, %v3926, %v3572
      %v3959 = vsel %vm1718, %v3927, %v3574
      %v3960 = vsel %vm1718, %v3928, %v3576
      %v3961 = vsel %vm1718, %v3929, %v3578
      %v3962 = vsel %vm1718, %v3930, %v3580
      %v3963 = vsel %vm1718, %v3931, %v3582
      %v3964 = vsel %vm1718, %v3932, %v3584
      %v3965 = vsel %vm1718, %v3933, %v3586
      %v3966 = vsel %vm1718, %v3934, %v3588
      %v3967 = vsel %vm1718, %v3935, %v3590
      %v3968 = vsel %vm1718, %v3936, %v3592
      %v3969 = vsel %vm1718, %v3937, %v3594
      %v3970 = vsel %vm1718, %v3938, %v3596
      %v3971 = vsel %vm1718, %v3939, %v3598
      %v3972 = vsel %vm1718, %v3940, %v3600
      %v3973 = vsel %vm1718, %v3941, %v3602
      %v3974 = vsel %vm1718, %v3942, %v3604
      %v3975 = vsel %vm1718, %v3943, %v3606
      %v3976 = vsel %vm1718, %v3944, %v3608
      %v3977 = vsel %vm1718, %v3945, %v3610
      %v3978 = vsel %vm1718, %v3946, %v3612
      %v3979 = vsel %vm1718, %v3947, %v3614
      %v3980 = vsel %vm1718, %v3948, %v3616
      %v3981 = vsel %vm1718, %v3949, %v3618
      %v3982 = vsel %vm1718, %v3950, %v3620
      %v3983 = vsel %vm1718, %v3951, %v3622
      %v3984 = vsel %vm1718, %v3952, %v3624
      %v3985 = vsel %vm1718, %v3953, %v3626
      %v3986 = vsel %vm1718, %v3954, %v3628
      %v3987 = vsel %vm1718, %v3955, %v3630
      %v3988 = vsel %vm1751, %v3956, %v3669
      %v3989 = vsel %vm1751, %v3957, %v3671
      %v3990 = vsel %vm1751, %v3958, %v3673
      %v3991 = vsel %vm1751, %v3959, %v3675
      %v3992 = vsel %vm1751, %v3960, %v3677
      %v3993 = vsel %vm1751, %v3961, %v3679
      %v3994 = vsel %vm1751, %v3962, %v3681
      %v3995 = vsel %vm1751, %v3963, %v3683
      %v3996 = vsel %vm1751, %v3964, %v3685
      %v3997 = vsel %vm1751, %v3965, %v3687
      %v3998 = vsel %vm1751, %v3966, %v3689
      %v3999 = vsel %vm1751, %v3967, %v3691
      %v4000 = vsel %vm1751, %v3968, %v3693
      %v4001 = vsel %vm1751, %v3969, %v3695
      %v4002 = vsel %vm1751, %v3970, %v3697
      %v4003 = vsel %vm1751, %v3971, %v3699
      %v4004 = vsel %vm1751, %v3972, %v3701
      %v4005 = vsel %vm1751, %v3973, %v3703
      %v4006 = vsel %vm1751, %v3974, %v3705
      %v4007 = vsel %vm1751, %v3975, %v3707
      %v4008 = vsel %vm1751, %v3976, %v3709
      %v4009 = vsel %vm1751, %v3977, %v3711
      %v4010 = vsel %vm1751, %v3978, %v3713
      %v4011 = vsel %vm1751, %v3979, %v3715
      %v4012 = vsel %vm1751, %v3980, %v3717
      %v4013 = vsel %vm1751, %v3981, %v3719
      %v4014 = vsel %vm1751, %v3982, %v3721
      %v4015 = vsel %vm1751, %v3983, %v3723
      %v4016 = vsel %vm1751, %v3984, %v3725
      %v4017 = vsel %vm1751, %v3985, %v3727
      %v4018 = vsel %vm1751, %v3986, %v3729
      %v4019 = vsel %vm1751, %v3987, %v3731
      %v4020 = vld [vmem:[%s2] sm:$0xff]
      %v4021 = vld [vmem:[%s2 + $0x8] sm:$0xff]
      %v4022 = vld [vmem:[%s2 + $0x10] sm:$0xff]
      %v4023 = vld [vmem:[%s2 + $0x18] sm:$0xff]
      %v4024 = vld [vmem:[%s2 + $0x20] sm:$0xff]
      %v4025 = vld [vmem:[%s2 + $0x28] sm:$0xff]
      %v4026 = vld [vmem:[%s2 + $0x30] sm:$0xff]
      %v4027 = vld [vmem:[%s2 + $0x38] sm:$0xff]
      %v4028 = vld [vmem:[%s2 + $0x40] sm:$0xff]
      %v4030 = vsel %vm1793, %v3988, 0
      %v4033 = vsel %vm1793, %v3989, 0
      %v4036 = vsel %vm1793, %v3990, 0
      %v4039 = vsel %vm1793, %v3991, 0
      %v4042 = vsel %vm1793, %v3992, 0
      %v4045 = vsel %vm1793, %v3993, 0
      %v4048 = vsel %vm1793, %v3994, 0
      %v4051 = vsel %vm1793, %v3995, 0
      %v4054 = vsel %vm1793, %v3996, 0
      %v4057 = vsel %vm1793, %v3997, 0
      %v4060 = vsel %vm1793, %v3998, 0
      %v4063 = vsel %vm1793, %v3999, 0
      %v4066 = vsel %vm1793, %v4000, 0
      %v4069 = vsel %vm1793, %v4001, 0
      %v4072 = vsel %vm1793, %v4002, 0
      %v4075 = vsel %vm1793, %v4003, 0
      %v4078 = vsel %vm1793, %v4004, 0
      %v4081 = vsel %vm1793, %v4005, 0
      %v4084 = vsel %vm1793, %v4006, 0
      %v4087 = vsel %vm1793, %v4007, 0
      %v4090 = vsel %vm1793, %v4008, 0
      %v4093 = vsel %vm1793, %v4009, 0
      %v4096 = vsel %vm1793, %v4010, 0
      %v4099 = vsel %vm1793, %v4011, 0
      %v4102 = vsel %vm1793, %v4012, 0
      %v4105 = vsel %vm1793, %v4013, 0
      %v4108 = vsel %vm1793, %v4014, 0
      %v4111 = vsel %vm1793, %v4015, 0
      %v4114 = vsel %vm1793, %v4016, 0
      %v4117 = vsel %vm1793, %v4017, 0
      %v4120 = vsel %vm1793, %v4018, 0
      %v4123 = vsel %vm1793, %v4019, 0
      %4125 = vmatprep.subr.mxu0 0.0
      %4126 = vmatpush1.msra.mxu0 %v4020
      %4127 = vmatprep.subr.mxu0 0.0
      %4128 = vmatpush1.msra.mxu0 %v4021
      %4129 = vmatprep.subr.mxu0 0.0
      %4130 = vmatpush1.msra.mxu0 %v4022
      %4131 = vmatprep.subr.mxu0 0.0
      %4132 = vmatpush1.msra.mxu0 %v4023
      %4133 = vmatprep.subr.mxu0 0.0
      %4134 = vmatpush1.msra.mxu0 %v4024
      %4135 = vmatprep.subr.mxu0 0.0
      %4136 = vmatpush1.msra.mxu0 %v4025
      %4137 = vmatprep.subr.mxu0 0.0
      %4138 = vmatpush1.msra.mxu0 %v4026
      %4139 = vmatprep.subr.mxu0 0.0
      %4140 = vmatpush1.msra.mxu0 %v4027
      %4141 = vmatprep.subr.mxu0 0.0
      %4142 = vmatpush1.msra.mxu0 %v4028
      %4143 = vmatprep.subr.mxu0 0.0
      %4144 = vmatpush1.msra.mxu0 0.0
      %4145 = vmatprep.subr.mxu0 0.0
      %4146 = vmatpush1.msra.mxu0 0.0
      %4147 = vmatprep.subr.mxu0 0.0
      %4148 = vmatpush1.msra.mxu0 0.0
      %4149 = vmatprep.subr.mxu0 0.0
      %4150 = vmatpush1.msra.mxu0 0.0
      %4151 = vmatprep.subr.mxu0 0.0
      %4152 = vmatpush1.msra.mxu0 0.0
      %4153 = vmatprep.subr.mxu0 0.0
      %4154 = vmatpush1.msra.mxu0 0.0
      %4155 = vmatprep.subr.mxu0 0.0
      %4156 = vmatpush1.msra.mxu0 0.0
      %4157 = vmatprep.subr.mxu0 0.0
      %4158 = vmatpush1.msra.mxu0 0.0
      %4159 = vmatprep.subr.mxu0 0.0
      %4160 = vmatpush1.msra.mxu0 0.0
      %4161 = vmatprep.subr.mxu0 0.0
      %4162 = vmatpush1.msra.mxu0 0.0
      %4163 = vmatprep.subr.mxu0 0.0
      %4164 = vmatpush1.msra.mxu0 0.0
      %4165 = vmatprep.subr.mxu0 0.0
      %4166 = vmatpush1.msra.mxu0 0.0
      %4167 = vmatprep.subr.mxu0 0.0
      %4168 = vmatpush1.msra.mxu0 0.0
      %4169 = vmatprep.subr.mxu0 0.0
      %4170 = vmatpush1.msra.mxu0 0.0
      %4171 = vmatprep.subr.mxu0 0.0
      %4172 = vmatpush1.msra.mxu0 0.0
      %4173 = vmatprep.subr.mxu0 0.0
      %4174 = vmatpush1.msra.mxu0 0.0
      %4175 = vmatprep.subr.mxu0 0.0
      %4176 = vmatpush1.msra.mxu0 0.0
      %4177 = vmatprep.subr.mxu0 0.0
      %4178 = vmatpush1.msra.mxu0 0.0
      %4179 = vmatprep.subr.mxu0 0.0
      %4180 = vmatpush1.msra.mxu0 0.0
      %4181 = vmatprep.subr.mxu0 0.0
      %4182 = vmatpush1.msra.mxu0 0.0
      %4183 = vmatprep.subr.mxu0 0.0
      %4184 = vmatpush1.msra.mxu0 0.0
      %4185 = vmatprep.subr.mxu0 0.0
      %4186 = vmatpush1.msra.mxu0 0.0
      %4187 = vmatprep.subr.mxu0 0.0
      %4188 = vmatpush1.msra.mxu0 0.0
      %4189 = vmatprep.mubr.f32.mxu0 0.0
      %4190 = vmatmul.mubr.f32.gmra.mrb[0].mxu0 %v4030
      %v4191 = vpop.f32.mrb[0].mxu0
      %v4192 = vadd.f32 0.0, %v4191
      %v4193 = vpop.f32.mrb[0].mxu0
      %4194 = vmatprep.mubr.f32.mxu0 0.0
      %4195 = vmatmul.mubr.f32.gmra.mrb[0].mxu0 %v4033
      %v4196 = vpop.f32.mrb[0].mxu0
      %v4197 = vadd.f32 0.0, %v4196
      %v4198 = vpop.f32.mrb[0].mxu0
      %4199 = vmatprep.mubr.f32.mxu0 0.0
      %4200 = vmatmul.mubr.f32.gmra.mrb[0].mxu0 %v4036
      %v4201 = vpop.f32.mrb[0].mxu0
      %v4202 = vadd.f32 0.0, %v4201
      %v4203 = vpop.f32.mrb[0].mxu0
      %4204 = vmatprep.mubr.f32.mxu0 0.0
      %4205 = vmatmul.mubr.f32.gmra.mrb[0].mxu0 %v4039
      %v4206 = vpop.f32.mrb[0].mxu0
      %v4207 = vadd.f32 0.0, %v4206
      %v4208 = vpop.f32.mrb[0].mxu0
      %4209 = vmatprep.mubr.f32.mxu0 0.0
      %4210 = vmatmul.mubr.f32.gmra.mrb[0].mxu0 %v4042
      %v4211 = vpop.f32.mrb[0].mxu0
      %v4212 = vadd.f32 0.0, %v4211
      %v4213 = vpop.f32.mrb[0].mxu0
      %4214 = vmatprep.mubr.f32.mxu0 0.0
      %4215 = vmatmul.mubr.f32.gmra.mrb[0].mxu0 %v4045
      %v4216 = vpop.f32.mrb[0].mxu0
      %v4217 = vadd.f32 0.0, %v4216
      %v4218 = vpop.f32.mrb[0].mxu0
      %4219 = vmatprep.mubr.f32.mxu0 0.0
      %4220 = vmatmul.mubr.f32.gmra.mrb[0].mxu0 %v4048
      %v4221 = vpop.f32.mrb[0].mxu0
      %v4222 = vadd.f32 0.0, %v4221
      %v4223 = vpop.f32.mrb[0].mxu0
      %4224 = vmatprep.mubr.f32.mxu0 0.0
      %4225 = vmatmul.mubr.f32.gmra.mrb[0].mxu0 %v4051
      %v4226 = vpop.f32.mrb[0].mxu0
      %v4227 = vadd.f32 0.0, %v4226
      %v4228 = vpop.f32.mrb[0].mxu0
      %4229 = vmatprep.mubr.f32.mxu0 0.0
      %4230 = vmatmul.mubr.f32.gmra.mrb[0].mxu0 %v4054
      %v4231 = vpop.f32.mrb[0].mxu0
      %v4232 = vadd.f32 0.0, %v4231
      %v4233 = vpop.f32.mrb[0].mxu0
      %4234 = vmatprep.mubr.f32.mxu0 0.0
      %4235 = vmatmul.mubr.f32.gmra.mrb[0].mxu0 %v4057
      %v4236 = vpop.f32.mrb[0].mxu0
      %v4237 = vadd.f32 0.0, %v4236
      %v4238 = vpop.f32.mrb[0].mxu0
      %4239 = vmatprep.mubr.f32.mxu0 0.0
      %4240 = vmatmul.mubr.f32.gmra.mrb[0].mxu0 %v4060
      %v4241 = vpop.f32.mrb[0].mxu0
      %v4242 = vadd.f32 0.0, %v4241
      %v4243 = vpop.f32.mrb[0].mxu0
      %4244 = vmatprep.mubr.f32.mxu0 0.0
      %4245 = vmatmul.mubr.f32.gmra.mrb[0].mxu0 %v4063
      %v4246 = vpop.f32.mrb[0].mxu0
      %v4247 = vadd.f32 0.0, %v4246
      %v4248 = vpop.f32.mrb[0].mxu0
      %4249 = vmatprep.mubr.f32.mxu0 0.0
      %4250 = vmatmul.mubr.f32.gmra.mrb[0].mxu0 %v4066
      %v4251 = vpop.f32.mrb[0].mxu0
      %v4252 = vadd.f32 0.0, %v4251
      %v4253 = vpop.f32.mrb[0].mxu0
      %4254 = vmatprep.mubr.f32.mxu0 0.0
      %4255 = vmatmul.mubr.f32.gmra.mrb[0].mxu0 %v4069
      %v4256 = vpop.f32.mrb[0].mxu0
      %v4257 = vadd.f32 0.0, %v4256
      %v4258 = vpop.f32.mrb[0].mxu0
      %4259 = vmatprep.mubr.f32.mxu0 0.0
      %4260 = vmatmul.mubr.f32.gmra.mrb[0].mxu0 %v4072
      %v4261 = vpop.f32.mrb[0].mxu0
      %v4262 = vadd.f32 0.0, %v4261
      %v4263 = vpop.f32.mrb[0].mxu0
      %4264 = vmatprep.mubr.f32.mxu0 0.0
      %4265 = vmatmul.mubr.f32.gmra.mrb[0].mxu0 %v4075
      %v4266 = vpop.f32.mrb[0].mxu0
      %v4267 = vadd.f32 0.0, %v4266
      %v4268 = vpop.f32.mrb[0].mxu0
      %4269 = vmatprep.mubr.f32.mxu0 0.0
      %4270 = vmatmul.mubr.f32.gmra.mrb[0].mxu0 %v4078
      %v4271 = vpop.f32.mrb[0].mxu0
      %v4272 = vadd.f32 0.0, %v4271
      %v4273 = vpop.f32.mrb[0].mxu0
      %4274 = vmatprep.mubr.f32.mxu0 0.0
      %4275 = vmatmul.mubr.f32.gmra.mrb[0].mxu0 %v4081
      %v4276 = vpop.f32.mrb[0].mxu0
      %v4277 = vadd.f32 0.0, %v4276
      %v4278 = vpop.f32.mrb[0].mxu0
      %4279 = vmatprep.mubr.f32.mxu0 0.0
      %4280 = vmatmul.mubr.f32.gmra.mrb[0].mxu0 %v4084
      %v4281 = vpop.f32.mrb[0].mxu0
      %v4282 = vadd.f32 0.0, %v4281
      %v4283 = vpop.f32.mrb[0].mxu0
      %4284 = vmatprep.mubr.f32.mxu0 0.0
      %4285 = vmatmul.mubr.f32.gmra.mrb[0].mxu0 %v4087
      %v4286 = vpop.f32.mrb[0].mxu0
      %v4287 = vadd.f32 0.0, %v4286
      %v4288 = vpop.f32.mrb[0].mxu0
      %4289 = vmatprep.mubr.f32.mxu0 0.0
      %4290 = vmatmul.mubr.f32.gmra.mrb[0].mxu0 %v4090
      %v4291 = vpop.f32.mrb[0].mxu0
      %v4292 = vadd.f32 0.0, %v4291
      %v4293 = vpop.f32.mrb[0].mxu0
      %4294 = vmatprep.mubr.f32.mxu0 0.0
      %4295 = vmatmul.mubr.f32.gmra.mrb[0].mxu0 %v4093
      %v4296 = vpop.f32.mrb[0].mxu0
      %v4297 = vadd.f32 0.0, %v4296
      %v4298 = vpop.f32.mrb[0].mxu0
      %4299 = vmatprep.mubr.f32.mxu0 0.0
      %4300 = vmatmul.mubr.f32.gmra.mrb[0].mxu0 %v4096
      %v4301 = vpop.f32.mrb[0].mxu0
      %v4302 = vadd.f32 0.0, %v4301
      %v4303 = vpop.f32.mrb[0].mxu0
      %4304 = vmatprep.mubr.f32.mxu0 0.0
      %4305 = vmatmul.mubr.f32.gmra.mrb[0].mxu0 %v4099
      %v4306 = vpop.f32.mrb[0].mxu0
      %v4307 = vadd.f32 0.0, %v4306
      %v4308 = vpop.f32.mrb[0].mxu0
      %4309 = vmatprep.mubr.f32.mxu0 0.0
      %4310 = vmatmul.mubr.f32.gmra.mrb[0].mxu0 %v4102
      %v4311 = vpop.f32.mrb[0].mxu0
      %v4312 = vadd.f32 0.0, %v4311
      %v4313 = vpop.f32.mrb[0].mxu0
      %4314 = vmatprep.mubr.f32.mxu0 0.0
      %4315 = vmatmul.mubr.f32.gmra.mrb[0].mxu0 %v4105
      %v4316 = vpop.f32.mrb[0].mxu0
      %v4317 = vadd.f32 0.0, %v4316
      %v4318 = vpop.f32.mrb[0].mxu0
      %4319 = vmatprep.mubr.f32.mxu0 0.0
      %4320 = vmatmul.mubr.f32.gmra.mrb[0].mxu0 %v4108
      %v4321 = vpop.f32.mrb[0].mxu0
      %v4322 = vadd.f32 0.0, %v4321
      %v4323 = vpop.f32.mrb[0].mxu0
      %4324 = vmatprep.mubr.f32.mxu0 0.0
      %4325 = vmatmul.mubr.f32.gmra.mrb[0].mxu0 %v4111
      %v4326 = vpop.f32.mrb[0].mxu0
      %v4327 = vadd.f32 0.0, %v4326
      %v4328 = vpop.f32.mrb[0].mxu0
      %4329 = vmatprep.mubr.f32.mxu0 0.0
      %4330 = vmatmul.mubr.f32.gmra.mrb[0].mxu0 %v4114
      %v4331 = vpop.f32.mrb[0].mxu0
      %v4332 = vadd.f32 0.0, %v4331
      %v4333 = vpop.f32.mrb[0].mxu0
      %4334 = vmatprep.mubr.f32.mxu0 0.0
      %4335 = vmatmul.mubr.f32.gmra.mrb[0].mxu0 %v4117
      %v4336 = vpop.f32.mrb[0].mxu0
      %v4337 = vadd.f32 0.0, %v4336
      %v4338 = vpop.f32.mrb[0].mxu0
      %4339 = vmatprep.mubr.f32.mxu0 0.0
      %4340 = vmatmul.mubr.f32.gmra.mrb[0].mxu0 %v4120
      %v4341 = vpop.f32.mrb[0].mxu0
      %v4342 = vadd.f32 0.0, %v4341
      %v4343 = vpop.f32.mrb[0].mxu0
      %4344 = vmatprep.mubr.f32.mxu0 0.0
      %4345 = vmatmul.mubr.f32.gmra.mrb[0].mxu0 %v4123
      %v4346 = vpop.f32.mrb[0].mxu0
      %v4347 = vadd.f32 0.0, %v4346
      %v4348 = vpop.f32.mrb[0].mxu0
      %4349 = vdwg.mxu0
      %4350 = vst.msk [vmem:[#allocation3] sm:$0xff] %vm204, %v4192
      %4351 = vst.msk [vmem:[#allocation3 + $0x8] sm:$0xff] %vm204, %v4197
      %4352 = vst.msk [vmem:[#allocation3 + $0x10] sm:$0xff] %vm204, %v4202
      %4353 = vst.msk [vmem:[#allocation3 + $0x18] sm:$0xff] %vm204, %v4207
      %4354 = vst.msk [vmem:[#allocation3 + $0x20] sm:$0xff] %vm204, %v4212
      %4355 = vst.msk [vmem:[#allocation3 + $0x28] sm:$0xff] %vm204, %v4217
      %4356 = vst.msk [vmem:[#allocation3 + $0x30] sm:$0xff] %vm204, %v4222
      %4357 = vst.msk [vmem:[#allocation3 + $0x38] sm:$0xff] %vm204, %v4227
      %4358 = vst.msk [vmem:[#allocation3 + $0x40] sm:$0xff] %vm204, %v4232
      %4359 = vst.msk [vmem:[#allocation3 + $0x48] sm:$0xff] %vm204, %v4237
      %4360 = vst.msk [vmem:[#allocation3 + $0x50] sm:$0xff] %vm204, %v4242
      %4361 = vst.msk [vmem:[#allocation3 + $0x58] sm:$0xff] %vm204, %v4247
      %4362 = vst.msk [vmem:[#allocation3 + $0x60] sm:$0xff] %vm204, %v4252
      %4363 = vst.msk [vmem:[#allocation3 + $0x68] sm:$0xff] %vm204, %v4257
      %4364 = vst.msk [vmem:[#allocation3 + $0x70] sm:$0xff] %vm204, %v4262
      %4365 = vst.msk [vmem:[#allocation3 + $0x78] sm:$0xff] %vm204, %v4267
      %4366 = vst.msk [vmem:[#allocation3 + $0x80] sm:$0xff] %vm204, %v4272
      %4367 = vst.msk [vmem:[#allocation3 + $0x88] sm:$0xff] %vm204, %v4277
      %4368 = vst.msk [vmem:[#allocation3 + $0x90] sm:$0xff] %vm204, %v4282
      %4369 = vst.msk [vmem:[#allocation3 + $0x98] sm:$0xff] %vm204, %v4287
      %4370 = vst.msk [vmem:[#allocation3 + $0xa0] sm:$0xff] %vm204, %v4292
      %4371 = vst.msk [vmem:[#allocation3 + $0xa8] sm:$0xff] %vm204, %v4297
      %4372 = vst.msk [vmem:[#allocation3 + $0xb0] sm:$0xff] %vm204, %v4302
      %4373 = vst.msk [vmem:[#allocation3 + $0xb8] sm:$0xff] %vm204, %v4307
      %4374 = vst.msk [vmem:[#allocation3 + $0xc0] sm:$0xff] %vm204, %v4312
      %4375 = vst.msk [vmem:[#allocation3 + $0xc8] sm:$0xff] %vm204, %v4317
      %4376 = vst.msk [vmem:[#allocation3 + $0xd0] sm:$0xff] %vm204, %v4322
      %4377 = vst.msk [vmem:[#allocation3 + $0xd8] sm:$0xff] %vm204, %v4327
      %4378 = vst.msk [vmem:[#allocation3 + $0xe0] sm:$0xff] %vm204, %v4332
      %4379 = vst.msk [vmem:[#allocation3 + $0xe8] sm:$0xff] %vm204, %v4337
      %4380 = vst.msk [vmem:[#allocation3 + $0xf0] sm:$0xff] %vm204, %v4342
      %4381 = vst.msk [vmem:[#allocation3 + $0xf8] sm:$0xff] %vm204, %v4347
      %v4382 = vsel %vm204, %v4192, 0.0
      %v4383 = vsel %vm204, %v4197, 0.0
      %v4384 = vadd.f32 %v4382, %v4383
      %v4385 = vsel %vm204, %v4202, 0.0
      %v4386 = vadd.f32 %v4384, %v4385
      %v4387 = vsel %vm204, %v4207, 0.0
      %v4388 = vadd.f32 %v4386, %v4387
      %v4389 = vsel %vm204, %v4212, 0.0
      %v4390 = vadd.f32 %v4388, %v4389
      %v4391 = vsel %vm204, %v4217, 0.0
      %v4392 = vadd.f32 %v4390, %v4391
      %v4393 = vsel %vm204, %v4222, 0.0
      %v4394 = vadd.f32 %v4392, %v4393
      %v4395 = vsel %vm204, %v4227, 0.0
      %v4396 = vadd.f32 %v4394, %v4395
      %v4397 = vsel %vm204, %v4232, 0.0
      %v4398 = vadd.f32 %v4396, %v4397
      %v4399 = vsel %vm204, %v4237, 0.0
      %v4400 = vadd.f32 %v4398, %v4399
      %v4401 = vsel %vm204, %v4242, 0.0
      %v4402 = vadd.f32 %v4400, %v4401
      %v4403 = vsel %vm204, %v4247, 0.0
      %v4404 = vadd.f32 %v4402, %v4403
      %v4405 = vsel %vm204, %v4252, 0.0
      %v4406 = vadd.f32 %v4404, %v4405
      %v4407 = vsel %vm204, %v4257, 0.0
      %v4408 = vadd.f32 %v4406, %v4407
      %v4409 = vsel %vm204, %v4262, 0.0
      %v4410 = vadd.f32 %v4408, %v4409
      %v4411 = vsel %vm204, %v4267, 0.0
      %v4412 = vadd.f32 %v4410, %v4411
      %v4413 = vsel %vm204, %v4272, 0.0
      %v4414 = vadd.f32 %v4412, %v4413
      %v4415 = vsel %vm204, %v4277, 0.0
      %v4416 = vadd.f32 %v4414, %v4415
      %v4417 = vsel %vm204, %v4282, 0.0
      %v4418 = vadd.f32 %v4416, %v4417
      %v4419 = vsel %vm204, %v4287, 0.0
      %v4420 = vadd.f32 %v4418, %v4419
      %v4421 = vsel %vm204, %v4292, 0.0
      %v4422 = vadd.f32 %v4420, %v4421
      %v4423 = vsel %vm204, %v4297, 0.0
      %v4424 = vadd.f32 %v4422, %v4423
      %v4425 = vsel %vm204, %v4302, 0.0
      %v4426 = vadd.f32 %v4424, %v4425
      %v4427 = vsel %vm204, %v4307, 0.0
      %v4428 = vadd.f32 %v4426, %v4427
      %v4429 = vsel %vm204, %v4312, 0.0
      %v4430 = vadd.f32 %v4428, %v4429
      %v4431 = vsel %vm204, %v4317, 0.0
      %v4432 = vadd.f32 %v4430, %v4431
      %v4433 = vsel %vm204, %v4322, 0.0
      %v4434 = vadd.f32 %v4432, %v4433
      %v4435 = vsel %vm204, %v4327, 0.0
      %v4436 = vadd.f32 %v4434, %v4435
      %v4437 = vsel %vm204, %v4332, 0.0
      %v4438 = vadd.f32 %v4436, %v4437
      %v4439 = vsel %vm204, %v4337, 0.0
      %v4440 = vadd.f32 %v4438, %v4439
      %v4441 = vsel %vm204, %v4342, 0.0
      %v4442 = vadd.f32 %v4440, %v4441
      %v4443 = vsel %vm204, %v4347, 0.0
      %v4444 = vadd.f32 %v4442, %v4443
      %v4445 = vrot.slane %v4444, 4
      %v4446 = vadd.f32 %v4444, %v4445
      %v4447 = vrot.slane %v4446, 2
      %v4448 = vadd.f32 %v4446, %v4447
      %v4449 = vrot.slane %v4448, 1
      %v4450 = vadd.f32 %v4448, %v4449
      %v4451 = vadd.f32 %v4450, 0.0
      %v4452 = vmul.f32 %v4192, %v4192
      %v4453 = vmul.f32 %v4197, %v4197
      %v4454 = vmul.f32 %v4202, %v4202
      %v4455 = vmul.f32 %v4207, %v4207
      %v4456 = vmul.f32 %v4212, %v4212
      %v4457 = vmul.f32 %v4217, %v4217
      %v4458 = vmul.f32 %v4222, %v4222
      %v4459 = vmul.f32 %v4227, %v4227
      %v4460 = vmul.f32 %v4232, %v4232
      %v4461 = vmul.f32 %v4237, %v4237
      %v4462 = vmul.f32 %v4242, %v4242
      %v4463 = vmul.f32 %v4247, %v4247
      %v4464 = vmul.f32 %v4252, %v4252
      %v4465 = vmul.f32 %v4257, %v4257
      %v4466 = vmul.f32 %v4262, %v4262
      %v4467 = vmul.f32 %v4267, %v4267
      %v4468 = vmul.f32 %v4272, %v4272
      %v4469 = vmul.f32 %v4277, %v4277
      %v4470 = vmul.f32 %v4282, %v4282
      %v4471 = vmul.f32 %v4287, %v4287
      %v4472 = vmul.f32 %v4292, %v4292
      %v4473 = vmul.f32 %v4297, %v4297
      %v4474 = vmul.f32 %v4302, %v4302
      %v4475 = vmul.f32 %v4307, %v4307
      %v4476 = vmul.f32 %v4312, %v4312
      %v4477 = vmul.f32 %v4317, %v4317
      %v4478 = vmul.f32 %v4322, %v4322
      %v4479 = vmul.f32 %v4327, %v4327
      %v4480 = vmul.f32 %v4332, %v4332
      %v4481 = vmul.f32 %v4337, %v4337
      %v4482 = vmul.f32 %v4342, %v4342
      %v4483 = vmul.f32 %v4347, %v4347
      %v4484 = vsel %vm204, %v4452, 0.0
      %v4485 = vsel %vm204, %v4453, 0.0
      %v4486 = vadd.f32 %v4484, %v4485
      %v4487 = vsel %vm204, %v4454, 0.0
      %v4488 = vadd.f32 %v4486, %v4487
      %v4489 = vsel %vm204, %v4455, 0.0
      %v4490 = vadd.f32 %v4488, %v4489
      %v4491 = vsel %vm204, %v4456, 0.0
      %v4492 = vadd.f32 %v4490, %v4491
      %v4493 = vsel %vm204, %v4457, 0.0
      %v4494 = vadd.f32 %v4492, %v4493
      %v4495 = vsel %vm204, %v4458, 0.0
      %v4496 = vadd.f32 %v4494, %v4495
      %v4497 = vsel %vm204, %v4459, 0.0
      %v4498 = vadd.f32 %v4496, %v4497
      %v4499 = vsel %vm204, %v4460, 0.0
      %v4500 = vadd.f32 %v4498, %v4499
      %v4501 = vsel %vm204, %v4461, 0.0
      %v4502 = vadd.f32 %v4500, %v4501
      %v4503 = vsel %vm204, %v4462, 0.0
      %v4504 = vadd.f32 %v4502, %v4503
      %v4505 = vsel %vm204, %v4463, 0.0
      %v4506 = vadd.f32 %v4504, %v4505
      %v4507 = vsel %vm204, %v4464, 0.0
      %v4508 = vadd.f32 %v4506, %v4507
      %v4509 = vsel %vm204, %v4465, 0.0
      %v4510 = vadd.f32 %v4508, %v4509
      %v4511 = vsel %vm204, %v4466, 0.0
      %v4512 = vadd.f32 %v4510, %v4511
      %v4513 = vsel %vm204, %v4467, 0.0
      %v4514 = vadd.f32 %v4512, %v4513
      %v4515 = vsel %vm204, %v4468, 0.0
      %v4516 = vadd.f32 %v4514, %v4515
      %v4517 = vsel %vm204, %v4469, 0.0
      %v4518 = vadd.f32 %v4516, %v4517
      %v4519 = vsel %vm204, %v4470, 0.0
      %v4520 = vadd.f32 %v4518, %v4519
      %v4521 = vsel %vm204, %v4471, 0.0
      %v4522 = vadd.f32 %v4520, %v4521
      %v4523 = vsel %vm204, %v4472, 0.0
      %v4524 = vadd.f32 %v4522, %v4523
      %v4525 = vsel %vm204, %v4473, 0.0
      %v4526 = vadd.f32 %v4524, %v4525
      %v4527 = vsel %vm204, %v4474, 0.0
      %v4528 = vadd.f32 %v4526, %v4527
      %v4529 = vsel %vm204, %v4475, 0.0
      %v4530 = vadd.f32 %v4528, %v4529
      %v4531 = vsel %vm204, %v4476, 0.0
      %v4532 = vadd.f32 %v4530, %v4531
      %v4533 = vsel %vm204, %v4477, 0.0
      %v4534 = vadd.f32 %v4532, %v4533
      %v4535 = vsel %vm204, %v4478, 0.0
      %v4536 = vadd.f32 %v4534, %v4535
      %v4537 = vsel %vm204, %v4479, 0.0
      %v4538 = vadd.f32 %v4536, %v4537
      %v4539 = vsel %vm204, %v4480, 0.0
      %v4540 = vadd.f32 %v4538, %v4539
      %v4541 = vsel %vm204, %v4481, 0.0
      %v4542 = vadd.f32 %v4540, %v4541
      %v4543 = vsel %vm204, %v4482, 0.0
      %v4544 = vadd.f32 %v4542, %v4543
      %v4545 = vsel %vm204, %v4483, 0.0
      %v4546 = vadd.f32 %v4544, %v4545
      %v4547 = vrot.slane %v4546, 4
      %v4548 = vadd.f32 %v4546, %v4547
      %v4549 = vrot.slane %v4548, 2
      %v4550 = vadd.f32 %v4548, %v4549
      %v4551 = vrot.slane %v4550, 1
      %v4552 = vadd.f32 %v4550, %v4551
      %v4553 = vadd.f32 %v4552, 0.0
      %v4554 = vmul.f32 %v4451, 0.00390625
      %v4555 = vmul.f32 %v4553, 0.00390625
      %v4556 = vmul.f32 %v4554, %v4554
      %v4557 = vsub.f32 %v4555, %v4556
      %v4558 = vmax.f32 %v4557, 0.0
      %v4559 = vadd.f32 %v4558, 1e-05
      %v4560 = vrsqrt.pop %v4559
      %v4561 = vld [vmem:[#allocation3] sm:$0xff]
      %v4562 = vld [vmem:[#allocation3 + $0x8] sm:$0xff]
      %v4563 = vld [vmem:[#allocation3 + $0x10] sm:$0xff]
      %v4564 = vld [vmem:[#allocation3 + $0x18] sm:$0xff]
      %v4565 = vld [vmem:[#allocation3 + $0x20] sm:$0xff]
      %v4566 = vld [vmem:[#allocation3 + $0x28] sm:$0xff]
      %v4567 = vld [vmem:[#allocation3 + $0x30] sm:$0xff]
      %v4568 = vld [vmem:[#allocation3 + $0x38] sm:$0xff]
      %v4569 = vld [vmem:[#allocation3 + $0x40] sm:$0xff]
      %v4570 = vld [vmem:[#allocation3 + $0x48] sm:$0xff]
      %v4571 = vld [vmem:[#allocation3 + $0x50] sm:$0xff]
      %v4572 = vld [vmem:[#allocation3 + $0x58] sm:$0xff]
      %v4573 = vld [vmem:[#allocation3 + $0x60] sm:$0xff]
      %v4574 = vld [vmem:[#allocation3 + $0x68] sm:$0xff]
      %v4575 = vld [vmem:[#allocation3 + $0x70] sm:$0xff]
      %v4576 = vld [vmem:[#allocation3 + $0x78] sm:$0xff]
      %v4577 = vld [vmem:[#allocation3 + $0x80] sm:$0xff]
      %v4578 = vld [vmem:[#allocation3 + $0x88] sm:$0xff]
      %v4579 = vld [vmem:[#allocation3 + $0x90] sm:$0xff]
      %v4580 = vld [vmem:[#allocation3 + $0x98] sm:$0xff]
      %v4581 = vld [vmem:[#allocation3 + $0xa0] sm:$0xff]
      %v4582 = vld [vmem:[#allocation3 + $0xa8] sm:$0xff]
      %v4583 = vld [vmem:[#allocation3 + $0xb0] sm:$0xff]
      %v4584 = vld [vmem:[#allocation3 + $0xb8] sm:$0xff]
      %v4585 = vld [vmem:[#allocation3 + $0xc0] sm:$0xff]
      %v4586 = vld [vmem:[#allocation3 + $0xc8] sm:$0xff]
      %v4587 = vld [vmem:[#allocation3 + $0xd0] sm:$0xff]
      %v4588 = vld [vmem:[#allocation3 + $0xd8] sm:$0xff]
      %v4589 = vld [vmem:[#allocation3 + $0xe0] sm:$0xff]
      %v4590 = vld [vmem:[#allocation3 + $0xe8] sm:$0xff]
      %v4591 = vld [vmem:[#allocation3 + $0xf0] sm:$0xff]
      %v4592 = vld [vmem:[#allocation3 + $0xf8] sm:$0xff]
      %v4593 = vsub.f32 %v4561, %v4554
      %v4594 = vsub.f32 %v4562, %v4554
      %v4595 = vsub.f32 %v4563, %v4554
      %v4596 = vsub.f32 %v4564, %v4554
      %v4597 = vsub.f32 %v4565, %v4554
      %v4598 = vsub.f32 %v4566, %v4554
      %v4599 = vsub.f32 %v4567, %v4554
      %v4600 = vsub.f32 %v4568, %v4554
      %v4601 = vsub.f32 %v4569, %v4554
      %v4602 = vsub.f32 %v4570, %v4554
      %v4603 = vsub.f32 %v4571, %v4554
      %v4604 = vsub.f32 %v4572, %v4554
      %v4605 = vsub.f32 %v4573, %v4554
      %v4606 = vsub.f32 %v4574, %v4554
      %v4607 = vsub.f32 %v4575, %v4554
      %v4608 = vsub.f32 %v4576, %v4554
      %v4609 = vsub.f32 %v4577, %v4554
      %v4610 = vsub.f32 %v4578, %v4554
      %v4611 = vsub.f32 %v4579, %v4554
      %v4612 = vsub.f32 %v4580, %v4554
      %v4613 = vsub.f32 %v4581, %v4554
      %v4614 = vsub.f32 %v4582, %v4554
      %v4615 = vsub.f32 %v4583, %v4554
      %v4616 = vsub.f32 %v4584, %v4554
      %v4617 = vsub.f32 %v4585, %v4554
      %v4618 = vsub.f32 %v4586, %v4554
      %v4619 = vsub.f32 %v4587, %v4554
      %v4620 = vsub.f32 %v4588, %v4554
      %v4621 = vsub.f32 %v4589, %v4554
      %v4622 = vsub.f32 %v4590, %v4554
      %v4623 = vsub.f32 %v4591, %v4554
      %v4624 = vsub.f32 %v4592, %v4554
      %v4625 = vmul.f32 %v4593, %v4560
      %v4626 = vmul.f32 %v4594, %v4560
      %v4627 = vmul.f32 %v4595, %v4560
      %v4628 = vmul.f32 %v4596, %v4560
      %v4629 = vmul.f32 %v4597, %v4560
      %v4630 = vmul.f32 %v4598, %v4560
      %v4631 = vmul.f32 %v4599, %v4560
      %v4632 = vmul.f32 %v4600, %v4560
      %v4633 = vmul.f32 %v4601, %v4560
      %v4634 = vmul.f32 %v4602, %v4560
      %v4635 = vmul.f32 %v4603, %v4560
      %v4636 = vmul.f32 %v4604, %v4560
      %v4637 = vmul.f32 %v4605, %v4560
      %v4638 = vmul.f32 %v4606, %v4560
      %v4639 = vmul.f32 %v4607, %v4560
      %v4640 = vmul.f32 %v4608, %v4560
      %v4641 = vmul.f32 %v4609, %v4560
      %v4642 = vmul.f32 %v4610, %v4560
      %v4643 = vmul.f32 %v4611, %v4560
      %v4644 = vmul.f32 %v4612, %v4560
      %v4645 = vmul.f32 %v4613, %v4560
      %v4646 = vmul.f32 %v4614, %v4560
      %v4647 = vmul.f32 %v4615, %v4560
      %v4648 = vmul.f32 %v4616, %v4560
      %v4649 = vmul.f32 %v4617, %v4560
      %v4650 = vmul.f32 %v4618, %v4560
      %v4651 = vmul.f32 %v4619, %v4560
      %v4652 = vmul.f32 %v4620, %v4560
      %v4653 = vmul.f32 %v4621, %v4560
      %v4654 = vmul.f32 %v4622, %v4560
      %v4655 = vmul.f32 %v4623, %v4560
      %v4656 = vmul.f32 %v4624, %v4560
      %v4657 = vld [vmem:[%s165] sm:$0xff]
      %v4658 = vld [vmem:[%s165 + $0x8] sm:$0xff]
      %v4659 = vld [vmem:[%s165 + $0x10] sm:$0xff]
      %v4660 = vld [vmem:[%s165 + $0x18] sm:$0xff]
      %v4661 = vld [vmem:[%s165 + $0x20] sm:$0xff]
      %v4662 = vld [vmem:[%s165 + $0x28] sm:$0xff]
      %v4663 = vld [vmem:[%s165 + $0x30] sm:$0xff]
      %v4664 = vld [vmem:[%s165 + $0x38] sm:$0xff]
      %v4665 = vld [vmem:[%s165 + $0x40] sm:$0xff]
      %v4666 = vld [vmem:[%s165 + $0x48] sm:$0xff]
      %v4667 = vld [vmem:[%s165 + $0x50] sm:$0xff]
      %v4668 = vld [vmem:[%s165 + $0x58] sm:$0xff]
      %v4669 = vld [vmem:[%s165 + $0x60] sm:$0xff]
      %v4670 = vld [vmem:[%s165 + $0x68] sm:$0xff]
      %v4671 = vld [vmem:[%s165 + $0x70] sm:$0xff]
      %v4672 = vld [vmem:[%s165 + $0x78] sm:$0xff]
      %v4673 = vld [vmem:[%s165 + $0x80] sm:$0xff]
      %v4674 = vld [vmem:[%s165 + $0x88] sm:$0xff]
      %v4675 = vld [vmem:[%s165 + $0x90] sm:$0xff]
      %v4676 = vld [vmem:[%s165 + $0x98] sm:$0xff]
      %v4677 = vld [vmem:[%s165 + $0xa0] sm:$0xff]
      %v4678 = vld [vmem:[%s165 + $0xa8] sm:$0xff]
      %v4679 = vld [vmem:[%s165 + $0xb0] sm:$0xff]
      %v4680 = vld [vmem:[%s165 + $0xb8] sm:$0xff]
      %v4681 = vld [vmem:[%s165 + $0xc0] sm:$0xff]
      %v4682 = vld [vmem:[%s165 + $0xc8] sm:$0xff]
      %v4683 = vld [vmem:[%s165 + $0xd0] sm:$0xff]
      %v4684 = vld [vmem:[%s165 + $0xd8] sm:$0xff]
      %v4685 = vld [vmem:[%s165 + $0xe0] sm:$0xff]
      %v4686 = vld [vmem:[%s165 + $0xe8] sm:$0xff]
      %v4687 = vld [vmem:[%s165 + $0xf0] sm:$0xff]
      %v4688 = vld [vmem:[%s165 + $0xf8] sm:$0xff]
      %v4689 = vadd.f32 %v4657, %v4625
      %v4690 = vadd.f32 %v4658, %v4626
      %v4691 = vadd.f32 %v4659, %v4627
      %v4692 = vadd.f32 %v4660, %v4628
      %v4693 = vadd.f32 %v4661, %v4629
      %v4694 = vadd.f32 %v4662, %v4630
      %v4695 = vadd.f32 %v4663, %v4631
      %v4696 = vadd.f32 %v4664, %v4632
      %v4697 = vadd.f32 %v4665, %v4633
      %v4698 = vadd.f32 %v4666, %v4634
      %v4699 = vadd.f32 %v4667, %v4635
      %v4700 = vadd.f32 %v4668, %v4636
      %v4701 = vadd.f32 %v4669, %v4637
      %v4702 = vadd.f32 %v4670, %v4638
      %v4703 = vadd.f32 %v4671, %v4639
      %v4704 = vadd.f32 %v4672, %v4640
      %v4705 = vadd.f32 %v4673, %v4641
      %v4706 = vadd.f32 %v4674, %v4642
      %v4707 = vadd.f32 %v4675, %v4643
      %v4708 = vadd.f32 %v4676, %v4644
      %v4709 = vadd.f32 %v4677, %v4645
      %v4710 = vadd.f32 %v4678, %v4646
      %v4711 = vadd.f32 %v4679, %v4647
      %v4712 = vadd.f32 %v4680, %v4648
      %v4713 = vadd.f32 %v4681, %v4649
      %v4714 = vadd.f32 %v4682, %v4650
      %v4715 = vadd.f32 %v4683, %v4651
      %v4716 = vadd.f32 %v4684, %v4652
      %v4717 = vadd.f32 %v4685, %v4653
      %v4718 = vadd.f32 %v4686, %v4654
      %v4719 = vadd.f32 %v4687, %v4655
      %v4720 = vadd.f32 %v4688, %v4656
      %4721 = vst.msk [vmem:[%s170] sm:$0xff] %vm204, %v4689
      %4722 = vst.msk [vmem:[%s170 + $0x8] sm:$0xff] %vm204, %v4690
      %4723 = vst.msk [vmem:[%s170 + $0x10] sm:$0xff] %vm204, %v4691
      %4724 = vst.msk [vmem:[%s170 + $0x18] sm:$0xff] %vm204, %v4692
      %4725 = vst.msk [vmem:[%s170 + $0x20] sm:$0xff] %vm204, %v4693
      %4726 = vst.msk [vmem:[%s170 + $0x28] sm:$0xff] %vm204, %v4694
      %4727 = vst.msk [vmem:[%s170 + $0x30] sm:$0xff] %vm204, %v4695
      %4728 = vst.msk [vmem:[%s170 + $0x38] sm:$0xff] %vm204, %v4696
      %4729 = vst.msk [vmem:[%s170 + $0x40] sm:$0xff] %vm204, %v4697
      %4730 = vst.msk [vmem:[%s170 + $0x48] sm:$0xff] %vm204, %v4698
      %4731 = vst.msk [vmem:[%s170 + $0x50] sm:$0xff] %vm204, %v4699
      %4732 = vst.msk [vmem:[%s170 + $0x58] sm:$0xff] %vm204, %v4700
      %4733 = vst.msk [vmem:[%s170 + $0x60] sm:$0xff] %vm204, %v4701
      %4734 = vst.msk [vmem:[%s170 + $0x68] sm:$0xff] %vm204, %v4702
      %4735 = vst.msk [vmem:[%s170 + $0x70] sm:$0xff] %vm204, %v4703
      %4736 = vst.msk [vmem:[%s170 + $0x78] sm:$0xff] %vm204, %v4704
      %4737 = vst.msk [vmem:[%s170 + $0x80] sm:$0xff] %vm204, %v4705
      %4738 = vst.msk [vmem:[%s170 + $0x88] sm:$0xff] %vm204, %v4706
      %4739 = vst.msk [vmem:[%s170 + $0x90] sm:$0xff] %vm204, %v4707
      %4740 = vst.msk [vmem:[%s170 + $0x98] sm:$0xff] %vm204, %v4708
      %4741 = vst.msk [vmem:[%s170 + $0xa0] sm:$0xff] %vm204, %v4709
      %4742 = vst.msk [vmem:[%s170 + $0xa8] sm:$0xff] %vm204, %v4710
      %4743 = vst.msk [vmem:[%s170 + $0xb0] sm:$0xff] %vm204, %v4711
      %4744 = vst.msk [vmem:[%s170 + $0xb8] sm:$0xff] %vm204, %v4712
      %4745 = vst.msk [vmem:[%s170 + $0xc0] sm:$0xff] %vm204, %v4713
      %4746 = vst.msk [vmem:[%s170 + $0xc8] sm:$0xff] %vm204, %v4714
      %4747 = vst.msk [vmem:[%s170 + $0xd0] sm:$0xff] %vm204, %v4715
      %4748 = vst.msk [vmem:[%s170 + $0xd8] sm:$0xff] %vm204, %v4716
      %4749 = vst.msk [vmem:[%s170 + $0xe0] sm:$0xff] %vm204, %v4717
      %4750 = vst.msk [vmem:[%s170 + $0xe8] sm:$0xff] %vm204, %v4718
      %4751 = vst.msk [vmem:[%s170 + $0xf0] sm:$0xff] %vm204, %v4719
      %4752 = vst.msk [vmem:[%s170 + $0xf8] sm:$0xff] %vm204, %v4720
      %p4753 = scmp.lt.s32.totalorder %s14, 1
      %s4754 = scalar_select %p4753, %s14, 1
      %s4755 = smul.addr %s4754, 32
      %s4756 = smul.addr %s4755, 8
      %s4757 = scalar_lea.vmem %s3, %s4756
      // Predicated region
      $region33: #{tpu_custom_call.1} parent=31 // pred_check
        %p4758 = pneg %p100
      $region34: #{tpu_custom_call.1} parent=31 // pred_check_branch
        %4760 = sbr.rel (%p4758) target = $region36
      $region35: #{tpu_custom_call.1} parent=31 // pred_region
        _
      $region36: #{tpu_custom_call.1} parent=31 // pred_fallthru
        _
    $region32: #{tpu_custom_call.1} parent=5 // pred_fallthru
      _
    %p4761 = scmp.le.s32.totalorder 2, %s9
    // Predicated region
    $region37: #{tpu_custom_call.1} parent=5 // pred_check
      %p4762 = pneg %p4761
    $region38: #{tpu_custom_call.1} parent=5 // pred_check_branch
      %4764 = sbr.rel (%p4762) target = $region40
    $region39: #{tpu_custom_call.1} parent=5 // pred_region
      %s4765 = ssub.s32 %s9, 2
      // Predicated region
      $region41: #{tpu_custom_call.1} parent=39 // pred_check
        %p4766 = pneg %p106
      $region42: #{tpu_custom_call.1} parent=39 // pred_check_branch
        %4768 = sbr.rel (%p4766) target = $region44
      $region43: #{tpu_custom_call.1} parent=39 // pred_region
        %p4769 = scmp.lt.s32.totalorder %s15, 1
        %s4770 = scalar_select %p4769, %s15, 1
        %s4771 = smul.addr %s4770, 32
        %s4772 = smul.addr %s4771, 8
        %s4773 = scalar_lea.vmem %s3, %s4772
      $region44: #{tpu_custom_call.1} parent=39 // pred_fallthru
        _
    $region40: #{tpu_custom_call.1} parent=5 // pred_fallthru
      _
  $region6: #{tpu_custom_call.1} parent=0 // loop_footer
    %s13 = sadd.s32 1, %s9
  $region7: #{tpu_custom_call.1} parent=0 // loop_footer_branch
    %8 = sbr.rel target = $region3
  $region8: #{tpu_custom_call.1} parent=0 // loop_exit
    _

</llo_original>
